<compile_context>
chip_gen: v7x
topology: tpu7x:2x2x1
jax: 0.10.0
libtpu: 0.0.40
codegen_flags: <defaults>
</compile_context>

<pallas_src>
import jax
import jax.numpy as jnp
from jax.experimental import pallas as pl
from jax.experimental.pallas import tpu as pltpu


_LAYER_DIMS = [(3072, 1024), (1024, 512), (512, 128), (128, 10)]
_TK = 512                      # layer-1 K chunk; 3072 / 512 = 6 grid steps


def _fused_mlp_kernel(x_ref,
                      w1_ref, b1_ref,
                      w2_ref, b2_ref,
                      w3_ref, b3_ref,
                      w4_ref, b4_ref,
                      o_ref,
                      acc_ref):
    """Layer 1 accumulated over the K grid; layers 2-4 fused on the last step."""
    k = pl.program_id(0)

    @pl.when(k == 0)
    def _init():
        acc_ref[...] = jnp.zeros_like(acc_ref)

    # Layer-1 partial product for this K chunk: bf16 operands on the MXU,
    # f32 accumulation in VMEM scratch.  The next W1 chunk streams from HBM
    # while this one is being consumed (Pallas double-buffers the blocked
    # inputs), so the dominant weight fetch overlaps compute.
    acc_ref[...] += jnp.dot(x_ref[...].astype(jnp.bfloat16), w1_ref[...],
                            preferred_element_type=jnp.float32)

    @pl.when(k == pl.num_programs(0) - 1)
    def _finish():
        h = jnp.maximum(acc_ref[...] + b1_ref[...], 0.0)
        h = jnp.maximum(
            jnp.dot(h.astype(jnp.bfloat16), w2_ref[...],
                    preferred_element_type=jnp.float32) + b2_ref[...], 0.0)
        h = jnp.maximum(
            jnp.dot(h.astype(jnp.bfloat16), w3_ref[...],
                    preferred_element_type=jnp.float32) + b3_ref[...], 0.0)
        h = jnp.maximum(
            jnp.dot(h.astype(jnp.bfloat16), w4_ref[...],
                    preferred_element_type=jnp.float32) + b4_ref[...], 0.0)
        o_ref[...] = h.astype(o_ref.dtype)


def fused_big_linear(x2d, params):
    """x2d: (B, 3072) f32; params: [(W_i bf16 (in,out), b_i f32 (1,out))]."""
    (w1, b1), (w2, b2), (w3, b3), (w4, b4) = params
    B = x2d.shape[0]
    d1 = w1.shape[1]
    n_out = w4.shape[1]
    assert w1.shape[0] % _TK == 0
    kt = w1.shape[0] // _TK

    def _resident(shape):
        # Whole array in VMEM, same block every grid step -> fetched once.
        return pl.BlockSpec(shape, lambda k: (0, 0))

    grid_spec = pltpu.PrefetchScalarGridSpec(
        num_scalar_prefetch=0,
        grid=(kt,),
        in_specs=[
            pl.BlockSpec((B, _TK), lambda k: (0, k)),      # x: K chunk
            pl.BlockSpec((_TK, d1), lambda k: (k, 0)),     # W1: K chunk (bf16)
            _resident(b1.shape),
            _resident(w2.shape),
            _resident(b2.shape),
            _resident(w3.shape),
            _resident(b3.shape),
            _resident(w4.shape),
            _resident(b4.shape),
        ],
        out_specs=pl.BlockSpec((B, n_out), lambda k: (0, 0)),
        scratch_shapes=[pltpu.VMEM((B, d1), jnp.float32)],
    )

    return pl.pallas_call(
        _fused_mlp_kernel,
        out_shape=jax.ShapeDtypeStruct((B, n_out), x2d.dtype),
        grid_spec=grid_spec,
        compiler_params=pltpu.CompilerParams(
            dimension_semantics=("arbitrary",),     # reduction axis
            vmem_limit_bytes=20 * 1024 * 1024,      # footprint ~5 MiB; safe on v7x
        ),
    )(x2d, w1, b1, w2, b2, w3, b3, w4, b4)


# ---------------------------------------------------------------------------
# Parameter construction (mimics nn.Linear default init range).
# Weights are cast to bf16 ONCE here so each forward streams half the bytes.
# ---------------------------------------------------------------------------
def init_params(key):
    params = []
    for (fan_in, fan_out) in _LAYER_DIMS:
        key, kw, kb = jax.random.split(key, 3)
        bound = 1.0 / (fan_in ** 0.5)
        # stored as (in, out) == PyTorch weight.T, bf16 for streaming
        w = jax.random.uniform(
            kw, (fan_in, fan_out), jnp.float32, minval=-bound, maxval=bound
        ).astype(jnp.bfloat16)
        b = jax.random.uniform(
            kb, (1, fan_out), jnp.float32, minval=-bound, maxval=bound)
        params.append((w, b))
    return params


@jax.jit
def big_linear_forward(x, params):
    # x: (B, C, H, W) NCHW -> flatten like torch `x.view(x.size(0), -1)`
    B = x.shape[0]
    h = x.reshape(B, -1)
    return fused_big_linear(h, params)


def reference_forward(x, params):
    """Pure-JAX reference with the same precision scheme (bf16 in, f32 acc)."""
    B = x.shape[0]
    h = x.reshape(B, -1)
    for (w, b) in params:
        h = jnp.maximum(
            jnp.dot(h.astype(jnp.bfloat16), w,
                    preferred_element_type=jnp.float32) + b, 0.0)
    return h


if __name__ == "__main__":
    key = jax.random.PRNGKey(0)
    key, kx = jax.random.split(key)

    # Input consistent with 3072 flattened features: (B=2, C=3, H=32, W=32)
    x = jax.random.normal(kx, (2, 3, 32, 32), dtype=jnp.float32)

    params = init_params(key)

    out = big_linear_forward(x, params)
    out = jax.block_until_ready(out)

    ref = reference_forward(x, params)
    assert out.shape == (2, 10), out.shape
    assert jnp.allclose(out, ref, atol=1e-3, rtol=1e-3), "mismatch vs reference"

    print("KERNEL_OK")
</pallas_src>

<mosaic_0001>
module attributes {stable_mosaic.version = 11 : i64} {
  func.func @_fused_mlp_kernel(%arg0: i32, %arg1: memref<2x512xf32, #tpu.memory_space<vmem>>, %arg2: memref<512x1024xbf16, #tpu.memory_space<vmem>>, %arg3: memref<1x1024xf32, #tpu.memory_space<vmem>>, %arg4: memref<1024x512xbf16, #tpu.memory_space<vmem>>, %arg5: memref<1x512xf32, #tpu.memory_space<vmem>>, %arg6: memref<512x128xbf16, #tpu.memory_space<vmem>>, %arg7: memref<1x128xf32, #tpu.memory_space<vmem>>, %arg8: memref<128x10xbf16, #tpu.memory_space<vmem>>, %arg9: memref<1x10xf32, #tpu.memory_space<vmem>>, %arg10: memref<2x10xf32, #tpu.memory_space<vmem>>, %arg11: memref<2x1024xf32, #tpu.memory_space<vmem>>) attributes {dimension_semantics = [#tpu.dimension_semantics<arbitrary>], iteration_bounds = array<i64: 6>, scalar_prefetch = 0 : i64, scratch_operands = 1 : i64, tpu.core_type = #tpu.core_type<tc>, window_params = [{transform_indices = @transform_0, window_bounds = array<i64: 2, 512>}, {transform_indices = @transform_1, window_bounds = array<i64: 512, 1024>}, {pipeline_mode = #tpu.pipeline_mode<synchronous>, transform_indices = @transform_2, window_bounds = array<i64: 1, 1024>}, {pipeline_mode = #tpu.pipeline_mode<synchronous>, transform_indices = @transform_3, window_bounds = array<i64: 1024, 512>}, {pipeline_mode = #tpu.pipeline_mode<synchronous>, transform_indices = @transform_4, window_bounds = array<i64: 1, 512>}, {pipeline_mode = #tpu.pipeline_mode<synchronous>, transform_indices = @transform_5, window_bounds = array<i64: 512, 128>}, {pipeline_mode = #tpu.pipeline_mode<synchronous>, transform_indices = @transform_6, window_bounds = array<i64: 1, 128>}, {pipeline_mode = #tpu.pipeline_mode<synchronous>, transform_indices = @transform_7, window_bounds = array<i64: 128, 10>}, {pipeline_mode = #tpu.pipeline_mode<synchronous>, transform_indices = @transform_8, window_bounds = array<i64: 1, 10>}, {pipeline_mode = #tpu.pipeline_mode<synchronous>, transform_indices = @transform_9, window_bounds = array<i64: 2, 10>}]} {
    %c0_i32 = arith.constant 0 : i32
    %0 = arith.cmpi eq, %arg0, %c0_i32 : i32
    %1 = arith.extui %0 : i1 to i32
    %c0_i32_0 = arith.constant 0 : i32
    %2 = arith.cmpi ne, %1, %c0_i32_0 : i32
    scf.if %2 {
      %cst_9 = arith.constant 0.000000e+00 : f32
      %13 = vector.broadcast %cst_9 : f32 to vector<2x1024xf32>
      %c0_10 = arith.constant 0 : index
      %c0_11 = arith.constant 0 : index
      %14 = vector.load %arg11[%c0_10, %c0_11] : memref<2x1024xf32, #tpu.memory_space<vmem>>, vector<2x1024xf32>
      tpu.vector_store %arg11[%c0_10, %c0_11], %13 {strides = array<i32>} : memref<2x1024xf32, #tpu.memory_space<vmem>>, vector<2x1024xf32>,
    } else {
    }
    %c0 = arith.constant 0 : index
    %c0_1 = arith.constant 0 : index
    %3 = vector.load %arg11[%c0, %c0_1] : memref<2x1024xf32, #tpu.memory_space<vmem>>, vector<2x1024xf32>
    %c0_2 = arith.constant 0 : index
    %c0_3 = arith.constant 0 : index
    %4 = vector.load %arg1[%c0_2, %c0_3] : memref<2x512xf32, #tpu.memory_space<vmem>>, vector<2x512xf32>
    %5 = arith.truncf %4 : vector<2x512xf32> to vector<2x512xbf16>
    %c0_4 = arith.constant 0 : index
    %c0_5 = arith.constant 0 : index
    %6 = vector.load %arg2[%c0_4, %c0_5] : memref<512x1024xbf16, #tpu.memory_space<vmem>>, vector<512x1024xbf16>
    %cst = arith.constant dense<0.000000e+00> : vector<2x1024xf32>
    %7 = tpu.matmul %5, %6, %cst {dimension_numbers = #tpu.dot_dimension_numbers<[1], [0], [0], [1], [0, 0, 1, 1], [], []>} : vector<2x512xbf16>, vector<512x1024xbf16>, vector<2x1024xf32> -> vector<2x1024xf32>
    %8 = arith.addf %3, %7 : vector<2x1024xf32>
    %c0_6 = arith.constant 0 : index
    %c0_7 = arith.constant 0 : index
    %9 = vector.load %arg11[%c0_6, %c0_7] : memref<2x1024xf32, #tpu.memory_space<vmem>>, vector<2x1024xf32>
    tpu.vector_store %arg11[%c0_6, %c0_7], %8 {strides = array<i32>} : memref<2x1024xf32, #tpu.memory_space<vmem>>, vector<2x1024xf32>,
    %c5_i32 = arith.constant 5 : i32
    %10 = arith.cmpi eq, %arg0, %c5_i32 : i32
    %11 = arith.extui %10 : i1 to i32
    %c0_i32_8 = arith.constant 0 : i32
    %12 = arith.cmpi ne, %11, %c0_i32_8 : i32
    scf.if %12 {
      %c0_9 = arith.constant 0 : index
      %c0_10 = arith.constant 0 : index
      %13 = vector.load %arg11[%c0_9, %c0_10] : memref<2x1024xf32, #tpu.memory_space<vmem>>, vector<2x1024xf32>
      %c0_11 = arith.constant 0 : index
      %c0_12 = arith.constant 0 : index
      %14 = vector.load %arg3[%c0_11, %c0_12] : memref<1x1024xf32, #tpu.memory_space<vmem>>, vector<1x1024xf32>
      %15 = vector.broadcast %14 : vector<1x1024xf32> to vector<2x1024xf32>
      %16 = arith.addf %13, %15 : vector<2x1024xf32>
      %cst_13 = arith.constant 0.000000e+00 : f32
      %17 = vector.broadcast %cst_13 : f32 to vector<2x1024xf32>
      %18 = arith.maximumf %16, %17 : vector<2x1024xf32>
      %19 = arith.truncf %18 : vector<2x1024xf32> to vector<2x1024xbf16>
      %c0_14 = arith.constant 0 : index
      %c0_15 = arith.constant 0 : index
      %20 = vector.load %arg4[%c0_14, %c0_15] : memref<1024x512xbf16, #tpu.memory_space<vmem>>, vector<1024x512xbf16>
      %cst_16 = arith.constant dense<0.000000e+00> : vector<2x512xf32>
      %21 = tpu.matmul %19, %20, %cst_16 {dimension_numbers = #tpu.dot_dimension_numbers<[1], [0], [0], [1], [0, 0, 1, 1], [], []>} : vector<2x1024xbf16>, vector<1024x512xbf16>, vector<2x512xf32> -> vector<2x512xf32>
      %c0_17 = arith.constant 0 : index
      %c0_18 = arith.constant 0 : index
      %22 = vector.load %arg5[%c0_17, %c0_18] : memref<1x512xf32, #tpu.memory_space<vmem>>, vector<1x512xf32>
      %23 = vector.broadcast %22 : vector<1x512xf32> to vector<2x512xf32>
      %24 = arith.addf %21, %23 : vector<2x512xf32>
      %cst_19 = arith.constant 0.000000e+00 : f32
      %25 = vector.broadcast %cst_19 : f32 to vector<2x512xf32>
      %26 = arith.maximumf %24, %25 : vector<2x512xf32>
      %27 = arith.truncf %26 : vector<2x512xf32> to vector<2x512xbf16>
      %c0_20 = arith.constant 0 : index
      %c0_21 = arith.constant 0 : index
      %28 = vector.load %arg6[%c0_20, %c0_21] : memref<512x128xbf16, #tpu.memory_space<vmem>>, vector<512x128xbf16>
      %cst_22 = arith.constant dense<0.000000e+00> : vector<2x128xf32>
      %29 = tpu.matmul %27, %28, %cst_22 {dimension_numbers = #tpu.dot_dimension_numbers<[1], [0], [0], [1], [0, 0, 1, 1], [], []>} : vector<2x512xbf16>, vector<512x128xbf16>, vector<2x128xf32> -> vector<2x128xf32>
      %c0_23 = arith.constant 0 : index
      %c0_24 = arith.constant 0 : index
      %30 = vector.load %arg7[%c0_23, %c0_24] : memref<1x128xf32, #tpu.memory_space<vmem>>, vector<1x128xf32>
      %31 = vector.broadcast %30 : vector<1x128xf32> to vector<2x128xf32>
      %32 = arith.addf %29, %31 : vector<2x128xf32>
      %cst_25 = arith.constant 0.000000e+00 : f32
      %33 = vector.broadcast %cst_25 : f32 to vector<2x128xf32>
      %34 = arith.maximumf %32, %33 : vector<2x128xf32>
      %35 = arith.truncf %34 : vector<2x128xf32> to vector<2x128xbf16>
      %c0_26 = arith.constant 0 : index
      %c0_27 = arith.constant 0 : index
      %36 = vector.load %arg8[%c0_26, %c0_27] : memref<128x10xbf16, #tpu.memory_space<vmem>>, vector<128x10xbf16>
      %cst_28 = arith.constant dense<0.000000e+00> : vector<2x10xf32>
      %37 = tpu.matmul %35, %36, %cst_28 {dimension_numbers = #tpu.dot_dimension_numbers<[1], [0], [0], [1], [0, 0, 1, 1], [], []>} : vector<2x128xbf16>, vector<128x10xbf16>, vector<2x10xf32> -> vector<2x10xf32>
      %c0_29 = arith.constant 0 : index
      %c0_30 = arith.constant 0 : index
      %38 = vector.load %arg9[%c0_29, %c0_30] : memref<1x10xf32, #tpu.memory_space<vmem>>, vector<1x10xf32>
      %39 = vector.broadcast %38 : vector<1x10xf32> to vector<2x10xf32>
      %40 = arith.addf %37, %39 : vector<2x10xf32>
      %cst_31 = arith.constant 0.000000e+00 : f32
      %41 = vector.broadcast %cst_31 : f32 to vector<2x10xf32>
      %42 = arith.maximumf %40, %41 : vector<2x10xf32>
      %c0_32 = arith.constant 0 : index
      %c0_33 = arith.constant 0 : index
      %43 = vector.load %arg10[%c0_32, %c0_33] : memref<2x10xf32, #tpu.memory_space<vmem>>, vector<2x10xf32>
      tpu.vector_store %arg10[%c0_32, %c0_33], %42 {strides = array<i32>} : memref<2x10xf32, #tpu.memory_space<vmem>>, vector<2x10xf32>,
    } else {
    }
    return
  }
  func.func @transform_0(%arg0: i32) -> (i32, i32) {
    %c0_i32 = arith.constant 0 : i32
    %c0_i32_0 = arith.constant 0 : i32
    return %c0_i32, %arg0 : i32, i32
  }
  func.func @transform_1(%arg0: i32) -> (i32, i32) {
    %c0_i32 = arith.constant 0 : i32
    %c0_i32_0 = arith.constant 0 : i32
    return %arg0, %c0_i32 : i32, i32
  }
  func.func @transform_2(%arg0: i32) -> (i32, i32) {
    %c0_i32 = arith.constant 0 : i32
    %c0_i32_0 = arith.constant 0 : i32
    %c0_i32_1 = arith.constant 0 : i32
    return %c0_i32, %c0_i32_0 : i32, i32
  }
  func.func @transform_3(%arg0: i32) -> (i32, i32) {
    %c0_i32 = arith.constant 0 : i32
    %c0_i32_0 = arith.constant 0 : i32
    %c0_i32_1 = arith.constant 0 : i32
    return %c0_i32, %c0_i32_0 : i32, i32
  }
  func.func @transform_4(%arg0: i32) -> (i32, i32) {
    %c0_i32 = arith.constant 0 : i32
    %c0_i32_0 = arith.constant 0 : i32
    %c0_i32_1 = arith.constant 0 : i32
    return %c0_i32, %c0_i32_0 : i32, i32
  }
  func.func @transform_5(%arg0: i32) -> (i32, i32) {
    %c0_i32 = arith.constant 0 : i32
    %c0_i32_0 = arith.constant 0 : i32
    %c0_i32_1 = arith.constant 0 : i32
    return %c0_i32, %c0_i32_0 : i32, i32
  }
  func.func @transform_6(%arg0: i32) -> (i32, i32) {
    %c0_i32 = arith.constant 0 : i32
    %c0_i32_0 = arith.constant 0 : i32
    %c0_i32_1 = arith.constant 0 : i32
    return %c0_i32, %c0_i32_0 : i32, i32
  }
  func.func @transform_7(%arg0: i32) -> (i32, i32) {
    %c0_i32 = arith.constant 0 : i32
    %c0_i32_0 = arith.constant 0 : i32
    %c0_i32_1 = arith.constant 0 : i32
    return %c0_i32, %c0_i32_0 : i32, i32
  }
  func.func @transform_8(%arg0: i32) -> (i32, i32) {
    %c0_i32 = arith.constant 0 : i32
    %c0_i32_0 = arith.constant 0 : i32
    %c0_i32_1 = arith.constant 0 : i32
    return %c0_i32, %c0_i32_0 : i32, i32
  }
  func.func @transform_9(%arg0: i32) -> (i32, i32) {
    %c0_i32 = arith.constant 0 : i32
    %c0_i32_0 = arith.constant 0 : i32
    %c0_i32_1 = arith.constant 0 : i32
    return %c0_i32, %c0_i32_0 : i32, i32
  }
}

</mosaic_0001>

<llo_original>
// kernel: big_linear_forward.1
$region0: #{big_linear_forward.1}
  #allocation0 [shape = 'u32[]', space=smem, size = 0x4, offset = 0x4, fixed_abs, tag = 'smem constant byte address 0x4 - core index']
  #allocation1 [shape = 'u32[144,128]{1,0:T(1,128)}', space=vmem, size = 0x12000, scoped, tag = 'internal scratch']
  #allocation2 [shape = 'f32[2,1024]{1,0:T(2,128)}', space=vmem, size = 0x2000, scoped, tag = 'scratch operand']
  %s0 = inlined_call_operand.vmem [shape: f32[2,3072], index: 0, kind: input, shape index: {}]
  %s1 = inlined_call_operand.hbm [shape: bf16[3072,1024], index: 1, kind: input, shape index: {}]
  %s2 = inlined_call_operand.hbm [shape: f32[1,1024], index: 2, kind: input, shape index: {}]
  %s3 = inlined_call_operand.hbm [shape: bf16[1024,512], index: 3, kind: input, shape index: {}]
  %s4 = inlined_call_operand.hbm [shape: f32[1,512], index: 4, kind: input, shape index: {}]
  %s5 = inlined_call_operand.hbm [shape: bf16[512,128], index: 5, kind: input, shape index: {}]
  %s6 = inlined_call_operand.hbm [shape: f32[1,128], index: 6, kind: input, shape index: {}]
  %s7 = inlined_call_operand.vmem [shape: bf16[128,10], index: 7, kind: input, shape index: {}]
  %s8 = inlined_call_operand.hbm [shape: f32[1,10], index: 8, kind: input, shape index: {}]
  %s9 = inlined_call_operand.hbm [shape: f32[2,10], index: 9, kind: output, shape index: {}]
  %s10 = sld [smem:[#allocation0]]
  $region105: #{big_linear_forward.1} parent=0
    _
  %s12 = ssub.s32 1, %s10
  %s13 = scalar_select 0, %s12, %s10
  $region1: #{big_linear_forward.1} parent=0
    #allocation3 [shape = 'u8[2097152]{0}', space=vmem, size = 0x200000, scoped, tag = 'input window, operand 1']
    #allocation4 [shape = 's32[2]{0}', space=sflag, size = 0x8, scoped, tag = 'scoped memory for big_linear_forward.1']
    #allocation5 [shape = 's32[2]{0}', space=sflag, size = 0x8, scoped, tag = 'scoped memory for big_linear_forward.1']
    #allocation6 [shape = 'u8[4096]{0}', space=vmem, size = 0x1000, scoped, tag = 'input window, operand 2, single buffered']
    #allocation7 [shape = 's32[1]{0}', space=sflag, size = 0x4, scoped, tag = 'scoped memory for big_linear_forward.1']
    #allocation8 [shape = 'u8[1048576]{0}', space=vmem, size = 0x100000, scoped, tag = 'input window, operand 3, single buffered']
    #allocation9 [shape = 'u8[2048]{0}', space=vmem, size = 0x800, scoped, tag = 'input window, operand 4, single buffered']
    #allocation10 [shape = 's32[1]{0}', space=sflag, size = 0x4, scoped, tag = 'scoped memory for big_linear_forward.1']
    #allocation11 [shape = 'u8[131072]{0}', space=vmem, size = 0x20000, scoped, tag = 'input window, operand 5, single buffered']
    #allocation12 [shape = 'u8[512]{0}', space=vmem, size = 0x400, scoped, tag = 'input window, operand 6, single buffered']
    #allocation13 [shape = 's32[1]{0}', space=sflag, size = 0x4, scoped, tag = 'scoped memory for big_linear_forward.1']
    #allocation14 [shape = 'u8[512]{0}', space=vmem, size = 0x400, scoped, tag = 'input window, operand 8, single buffered']
    #allocation15 [shape = 'u8[1024]{0}', space=vmem, size = 0x400, scoped, tag = 'output window, operand 0, single buffered']
    %14 = vsyncpa [#allocation4], 0
    %s15 = scalar_lea.sflag [#allocation4], 1
    %16 = vsyncpa %s15, 0
    %17 = vsyncpa [#allocation7], 0
    %18 = vsyncpa [#allocation10], 0
    %19 = vsyncpa [#allocation13], 0
    %20 = vsyncpa [#allocation5], 0
    loop: start=0, step=1, limit=8
    $region2: #{big_linear_forward.1} parent=1 // loop_pre_header
      _
    $region3: #{big_linear_forward.1} parent=1 // loop_header
      %s22 = sphi 0, %s26
      %p23 = scmp.ge.s32.totalorder %s22, 8
      %s32 = sphi 0, %s34
      %s35 = sphi 0, %s32
      %s36 = sphi 0, %s35
      %s52 = sphi 0, %s36
      %s58 = sphi 0, %s60
      %s61 = sphi 0, %s58
      %s62 = sphi 0, %s61
      %s78 = sphi 0, %s62
      %s82 = sphi 0, %s82
      %s84 = sphi 0, %s82
      %s85 = sphi 0, %s84
      %s99 = sphi 0, %s85
      %s103 = sphi 0, %s103
      %s105 = sphi 0, %s103
      %s106 = sphi 0, %s105
      %s120 = sphi 0, %s106
      %s124 = sphi 0, %s124
      %s126 = sphi 0, %s124
      %s127 = sphi 0, %s126
      %s141 = sphi 0, %s127
      %s145 = sphi 0, %s145
      %s147 = sphi 0, %s145
      %s148 = sphi 0, %s147
      %s162 = sphi 0, %s148
      %s166 = sphi 0, %s166
      %s168 = sphi 0, %s166
      %s169 = sphi 0, %s168
      %s183 = sphi 0, %s169
      %s187 = sphi 0, %s187
      %s189 = sphi 0, %s187
      %s190 = sphi 0, %s189
      %s204 = sphi 0, %s190
      %s208 = sphi 0, %s208
      %s210 = sphi 0, %s208
      %s211 = sphi 0, %s210
      %s225 = sphi 0, %s211
      %s229 = sphi 0, %s229
      %s231 = sphi 0, %s229
      %s232 = sphi 0, %s231
      %s246 = sphi 0, %s232
    $region4: #{big_linear_forward.1} parent=1 // loop_header_branch
      %25 = sbr.rel (%p23) target = $region8
    $region5: #{big_linear_forward.1} parent=1 // loop_body
      %s27 = ssub.s32 %s22, 1
      %s28 = ssub.s32 %s22, 2
      %s29 = sadd.s32 %s22, 1
      %s30 = ssub.s32 %s22, %s29
      %p31 = scmp.eq.s32.totalorder %s30, 0
      %s33 = sadd.s32 %s32, 1
      %s34 = scalar_select %p31, %s32, %s33
      %p37 = pneg %p31
      %p38 = scmp.eq.s32.totalorder %s22, 5
      %p39 = por %p37, %p38
      %p40 = scmp.ne.s32.totalorder %s32, %s35
      %p41 = scmp.eq.s32.totalorder %s22, 0
      %p42 = por %p40, %p41
      %p43 = scmp.ne.s32.totalorder %s32, %s35
      %p44 = scmp.eq.s32.totalorder %s27, 5
      %p45 = por %p43, %p44
      %p46 = scmp.ne.s32.totalorder %s35, %s36
      %p47 = scmp.eq.s32.totalorder %s27, 0
      %p48 = por %p46, %p47
      %p49 = scmp.ne.s32.totalorder %s35, %s36
      %p50 = scmp.eq.s32.totalorder %s28, 5
      %p51 = por %p49, %p50
      %p53 = scmp.ne.s32.totalorder %s36, %s52
      %p54 = scmp.eq.s32.totalorder %s28, 0
      %p55 = por %p53, %p54
      %s56 = ssub.s32 %s22, %s29
      %p57 = scmp.eq.s32.totalorder %s56, 0
      %s59 = sadd.s32 %s58, 1
      %s60 = scalar_select %p57, %s58, %s59
      %p63 = pneg %p57
      %p64 = scmp.eq.s32.totalorder %s22, 5
      %p65 = por %p63, %p64
      %p66 = scmp.ne.s32.totalorder %s58, %s61
      %p67 = scmp.eq.s32.totalorder %s22, 0
      %p68 = por %p66, %p67
      %p69 = scmp.ne.s32.totalorder %s58, %s61
      %p70 = scmp.eq.s32.totalorder %s27, 5
      %p71 = por %p69, %p70
      %p72 = scmp.ne.s32.totalorder %s61, %s62
      %p73 = scmp.eq.s32.totalorder %s27, 0
      %p74 = por %p72, %p73
      %p75 = scmp.ne.s32.totalorder %s61, %s62
      %p76 = scmp.eq.s32.totalorder %s28, 5
      %p77 = por %p75, %p76
      %p79 = scmp.ne.s32.totalorder %s62, %s78
      %p80 = scmp.eq.s32.totalorder %s28, 0
      %p81 = por %p79, %p80
      %s83 = sadd.s32 %s82, 1
      %p86 = scmp.eq.s32.totalorder %s22, 5
      %p87 = scmp.ne.s32.totalorder %s82, %s84
      %p88 = scmp.eq.s32.totalorder %s22, 0
      %p89 = por %p87, %p88
      %p90 = scmp.ne.s32.totalorder %s82, %s84
      %p91 = scmp.eq.s32.totalorder %s27, 5
      %p92 = por %p90, %p91
      %p93 = scmp.ne.s32.totalorder %s84, %s85
      %p94 = scmp.eq.s32.totalorder %s27, 0
      %p95 = por %p93, %p94
      %p96 = scmp.ne.s32.totalorder %s84, %s85
      %p97 = scmp.eq.s32.totalorder %s28, 5
      %p98 = por %p96, %p97
      %p100 = scmp.ne.s32.totalorder %s85, %s99
      %p101 = scmp.eq.s32.totalorder %s28, 0
      %p102 = por %p100, %p101
      %s104 = sadd.s32 %s103, 1
      %p107 = scmp.eq.s32.totalorder %s22, 5
      %p108 = scmp.ne.s32.totalorder %s103, %s105
      %p109 = scmp.eq.s32.totalorder %s22, 0
      %p110 = por %p108, %p109
      %p111 = scmp.ne.s32.totalorder %s103, %s105
      %p112 = scmp.eq.s32.totalorder %s27, 5
      %p113 = por %p111, %p112
      %p114 = scmp.ne.s32.totalorder %s105, %s106
      %p115 = scmp.eq.s32.totalorder %s27, 0
      %p116 = por %p114, %p115
      %p117 = scmp.ne.s32.totalorder %s105, %s106
      %p118 = scmp.eq.s32.totalorder %s28, 5
      %p119 = por %p117, %p118
      %p121 = scmp.ne.s32.totalorder %s106, %s120
      %p122 = scmp.eq.s32.totalorder %s28, 0
      %p123 = por %p121, %p122
      %s125 = sadd.s32 %s124, 1
      %p128 = scmp.eq.s32.totalorder %s22, 5
      %p129 = scmp.ne.s32.totalorder %s124, %s126
      %p130 = scmp.eq.s32.totalorder %s22, 0
      %p131 = por %p129, %p130
      %p132 = scmp.ne.s32.totalorder %s124, %s126
      %p133 = scmp.eq.s32.totalorder %s27, 5
      %p134 = por %p132, %p133
      %p135 = scmp.ne.s32.totalorder %s126, %s127
      %p136 = scmp.eq.s32.totalorder %s27, 0
      %p137 = por %p135, %p136
      %p138 = scmp.ne.s32.totalorder %s126, %s127
      %p139 = scmp.eq.s32.totalorder %s28, 5
      %p140 = por %p138, %p139
      %p142 = scmp.ne.s32.totalorder %s127, %s141
      %p143 = scmp.eq.s32.totalorder %s28, 0
      %p144 = por %p142, %p143
      %s146 = sadd.s32 %s145, 1
      %p149 = scmp.eq.s32.totalorder %s22, 5
      %p150 = scmp.ne.s32.totalorder %s145, %s147
      %p151 = scmp.eq.s32.totalorder %s22, 0
      %p152 = por %p150, %p151
      %p153 = scmp.ne.s32.totalorder %s145, %s147
      %p154 = scmp.eq.s32.totalorder %s27, 5
      %p155 = por %p153, %p154
      %p156 = scmp.ne.s32.totalorder %s147, %s148
      %p157 = scmp.eq.s32.totalorder %s27, 0
      %p158 = por %p156, %p157
      %p159 = scmp.ne.s32.totalorder %s147, %s148
      %p160 = scmp.eq.s32.totalorder %s28, 5
      %p161 = por %p159, %p160
      %p163 = scmp.ne.s32.totalorder %s148, %s162
      %p164 = scmp.eq.s32.totalorder %s28, 0
      %p165 = por %p163, %p164
      %s167 = sadd.s32 %s166, 1
      %p170 = scmp.eq.s32.totalorder %s22, 5
      %p171 = scmp.ne.s32.totalorder %s166, %s168
      %p172 = scmp.eq.s32.totalorder %s22, 0
      %p173 = por %p171, %p172
      %p174 = scmp.ne.s32.totalorder %s166, %s168
      %p175 = scmp.eq.s32.totalorder %s27, 5
      %p176 = por %p174, %p175
      %p177 = scmp.ne.s32.totalorder %s168, %s169
      %p178 = scmp.eq.s32.totalorder %s27, 0
      %p179 = por %p177, %p178
      %p180 = scmp.ne.s32.totalorder %s168, %s169
      %p181 = scmp.eq.s32.totalorder %s28, 5
      %p182 = por %p180, %p181
      %p184 = scmp.ne.s32.totalorder %s169, %s183
      %p185 = scmp.eq.s32.totalorder %s28, 0
      %p186 = por %p184, %p185
      %s188 = sadd.s32 %s187, 1
      %p191 = scmp.eq.s32.totalorder %s22, 5
      %p192 = scmp.ne.s32.totalorder %s187, %s189
      %p193 = scmp.eq.s32.totalorder %s22, 0
      %p194 = por %p192, %p193
      %p195 = scmp.ne.s32.totalorder %s187, %s189
      %p196 = scmp.eq.s32.totalorder %s27, 5
      %p197 = por %p195, %p196
      %p198 = scmp.ne.s32.totalorder %s189, %s190
      %p199 = scmp.eq.s32.totalorder %s27, 0
      %p200 = por %p198, %p199
      %p201 = scmp.ne.s32.totalorder %s189, %s190
      %p202 = scmp.eq.s32.totalorder %s28, 5
      %p203 = por %p201, %p202
      %p205 = scmp.ne.s32.totalorder %s190, %s204
      %p206 = scmp.eq.s32.totalorder %s28, 0
      %p207 = por %p205, %p206
      %s209 = sadd.s32 %s208, 1
      %p212 = scmp.eq.s32.totalorder %s22, 5
      %p213 = scmp.ne.s32.totalorder %s208, %s210
      %p214 = scmp.eq.s32.totalorder %s22, 0
      %p215 = por %p213, %p214
      %p216 = scmp.ne.s32.totalorder %s208, %s210
      %p217 = scmp.eq.s32.totalorder %s27, 5
      %p218 = por %p216, %p217
      %p219 = scmp.ne.s32.totalorder %s210, %s211
      %p220 = scmp.eq.s32.totalorder %s27, 0
      %p221 = por %p219, %p220
      %p222 = scmp.ne.s32.totalorder %s210, %s211
      %p223 = scmp.eq.s32.totalorder %s28, 5
      %p224 = por %p222, %p223
      %p226 = scmp.ne.s32.totalorder %s211, %s225
      %p227 = scmp.eq.s32.totalorder %s28, 0
      %p228 = por %p226, %p227
      %s230 = sadd.s32 %s229, 1
      %p233 = scmp.eq.s32.totalorder %s22, 5
      %p234 = scmp.ne.s32.totalorder %s229, %s231
      %p235 = scmp.eq.s32.totalorder %s22, 0
      %p236 = por %p234, %p235
      %p237 = scmp.ne.s32.totalorder %s229, %s231
      %p238 = scmp.eq.s32.totalorder %s27, 5
      %p239 = por %p237, %p238
      %p240 = scmp.ne.s32.totalorder %s231, %s232
      %p241 = scmp.eq.s32.totalorder %s27, 0
      %p242 = por %p240, %p241
      %p243 = scmp.ne.s32.totalorder %s231, %s232
      %p244 = scmp.eq.s32.totalorder %s28, 5
      %p245 = por %p243, %p244
      %p247 = scmp.ne.s32.totalorder %s232, %s246
      %p248 = scmp.eq.s32.totalorder %s28, 0
      %p249 = por %p247, %p248
      %p250 = scmp.le.s32.totalorder 1, %s22
      %p251 = scmp.lt.s32.totalorder %s22, 7
      %p252 = pnand %p250, %p251
      %p253 = pneg %p252
      // Predicated region
      $region9: #{big_linear_forward.1} parent=5 // pred_check
        _
      $region10: #{big_linear_forward.1} parent=5 // pred_check_branch
        %255 = sbr.rel (%p252) target = $region12
      $region11: #{big_linear_forward.1} parent=5 // pred_region
        %s256 = ssub.s32 %s22, 1
        // Predicated region
        $region13: #{big_linear_forward.1} parent=11 // pred_check
          %p257 = pneg %p95
        $region14: #{big_linear_forward.1} parent=11 // pred_check_branch
          %259 = sbr.rel (%p257) target = $region16
        $region15: #{big_linear_forward.1} parent=11 // pred_region
          %s261 = ssub.s32 128, 128
          %262 = vsyncadd [#allocation7], %s261
          %s264 = sshll.u32 [#allocation6], 4
          %s265 = int_to_ptr.vmem [resolvable:$true] %s264
          %267 = dma.hbm_to_vmem [thread:$0]  %s2, 128, %s265, [#allocation7]
        $region16: #{big_linear_forward.1} parent=11 // pred_fallthru
          _
        // Predicated region
        $region17: #{big_linear_forward.1} parent=11 // pred_check
          %p268 = pneg %p116
        $region18: #{big_linear_forward.1} parent=11 // pred_check_branch
          %270 = sbr.rel (%p268) target = $region20
        $region19: #{big_linear_forward.1} parent=11 // pred_region
          %s272 = ssub.s32 32768, 32768
          %273 = vsyncadd [#allocation7], %s272
          %s274 = sshll.u32 [#allocation8], 4
          %s275 = int_to_ptr.vmem [resolvable:$true] %s274
          %280 = dma.hbm_to_vmem [thread:$0]  %s3, 32768, %s275, [#allocation7], 256, 256, 16
        $region20: #{big_linear_forward.1} parent=11 // pred_fallthru
          _
        // Predicated region
        $region21: #{big_linear_forward.1} parent=11 // pred_check
          %p281 = pneg %p137
        $region22: #{big_linear_forward.1} parent=11 // pred_check_branch
          %283 = sbr.rel (%p281) target = $region24
        $region23: #{big_linear_forward.1} parent=11 // pred_region
          %s285 = ssub.s32 64, 64
          %286 = vsyncadd [#allocation10], %s285
          %s288 = sshll.u32 [#allocation9], 4
          %s289 = int_to_ptr.vmem [resolvable:$true] %s288
          %291 = dma.hbm_to_vmem [thread:$0]  %s4, 64, %s289, [#allocation10]
        $region24: #{big_linear_forward.1} parent=11 // pred_fallthru
          _
        // Predicated region
        $region25: #{big_linear_forward.1} parent=11 // pred_check
          %p292 = pneg %p158
        $region26: #{big_linear_forward.1} parent=11 // pred_check_branch
          %294 = sbr.rel (%p292) target = $region28
        $region27: #{big_linear_forward.1} parent=11 // pred_region
          %s296 = ssub.s32 4096, 4096
          %297 = vsyncadd [#allocation10], %s296
          %s298 = sshll.u32 [#allocation11], 4
          %s299 = int_to_ptr.vmem [resolvable:$true] %s298
          %304 = dma.hbm_to_vmem [thread:$0]  %s5, 4096, %s299, [#allocation10], 64, 64, 4
        $region28: #{big_linear_forward.1} parent=11 // pred_fallthru
          _
        // Predicated region
        $region29: #{big_linear_forward.1} parent=11 // pred_check
          %p305 = pneg %p179
        $region30: #{big_linear_forward.1} parent=11 // pred_check_branch
          %307 = sbr.rel (%p305) target = $region32
        $region31: #{big_linear_forward.1} parent=11 // pred_region
          %s309 = ssub.s32 16, 16
          %310 = vsyncadd [#allocation13], %s309
          %s312 = sshll.u32 [#allocation12], 4
          %s313 = int_to_ptr.vmem [resolvable:$true] %s312
          %315 = dma.hbm_to_vmem [thread:$0]  %s6, 16, %s313, [#allocation13]
        $region32: #{big_linear_forward.1} parent=11 // pred_fallthru
          _
        // Predicated region
        $region33: #{big_linear_forward.1} parent=11 // pred_check
          %p316 = pneg %p200
        $region34: #{big_linear_forward.1} parent=11 // pred_check_branch
          %318 = sbr.rel (%p316) target = $region36
        $region35: #{big_linear_forward.1} parent=11 // pred_region
          _
        $region36: #{big_linear_forward.1} parent=11 // pred_fallthru
          _
        // Predicated region
        $region37: #{big_linear_forward.1} parent=11 // pred_check
          %p319 = pneg %p221
        $region38: #{big_linear_forward.1} parent=11 // pred_check_branch
          %321 = sbr.rel (%p319) target = $region40
        $region39: #{big_linear_forward.1} parent=11 // pred_region
          %s323 = ssub.s32 16, 16
          %324 = vsyncadd [#allocation13], %s323
          %s326 = sshll.u32 [#allocation14], 4
          %s327 = int_to_ptr.vmem [resolvable:$true] %s326
          %329 = dma.hbm_to_vmem [thread:$0]  %s8, 16, %s327, [#allocation13]
        $region40: #{big_linear_forward.1} parent=11 // pred_fallthru
          _
      $region12: #{big_linear_forward.1} parent=5 // pred_fallthru
        _
      %p330 = scmp.lt.s32.totalorder %s22, 6
      // Predicated region
      $region41: #{big_linear_forward.1} parent=5 // pred_check
        %p331 = pneg %p330
      $region42: #{big_linear_forward.1} parent=5 // pred_check_branch
        %333 = sbr.rel (%p331) target = $region44
      $region43: #{big_linear_forward.1} parent=5 // pred_region
        // Predicated region
        $region45: #{big_linear_forward.1} parent=43 // pred_check
          %p334 = pneg %p42
        $region46: #{big_linear_forward.1} parent=43 // pred_check_branch
          %336 = sbr.rel (%p334) target = $region48
        $region47: #{big_linear_forward.1} parent=43 // pred_region
          %s337 = smul.u32 4, %s22
          %p338 = scmp.lt.s32.totalorder %s337, 23
          %s339 = scalar_select %p338, %s337, 23
          %s340 = smul.addr %s339, 2
          %s341 = scalar_lea.vmem %s0, %s340
          %s342 = smul.u32 4, %s22
        $region48: #{big_linear_forward.1} parent=43 // pred_fallthru
          _
        // Predicated region
        $region49: #{big_linear_forward.1} parent=43 // pred_check
          %p343 = pneg %p68
        $region50: #{big_linear_forward.1} parent=43 // pred_check_branch
          %345 = sbr.rel (%p343) target = $region52
        $region51: #{big_linear_forward.1} parent=43 // pred_region
          %s346 = sand.u32 %s58, 1
          %s347 = scalar_lea.sflag [#allocation4], %s346
          %s348 = sand.u32 %s58, 1
          %s349 = smul.addr %s348, 2048
          %s350 = scalar_lea.vmem [#allocation3], %s349
          %s351 = smul.u32 64, %s22
          %s353 = ssub.s32 32768, 32768
          %354 = vsyncadd %s347, %s353
          %s355 = smul.addr %s351, 8
          %s356 = smul.addr %s355, 64
          %s357 = scalar_lea.hbm %s1, %s356
          %s358 = sshll.u32 %s350, 4
          %s359 = int_to_ptr.vmem [resolvable:$true] %s358
          %364 = dma.hbm_to_vmem [thread:$0]  %s357, 32768, %s359, %s347, 512, 512, 32
        $region52: #{big_linear_forward.1} parent=43 // pred_fallthru
          _
      $region44: #{big_linear_forward.1} parent=5 // pred_fallthru
        _
      %p365 = scmp.le.s32.totalorder 1, %s22
      %p366 = scmp.lt.s32.totalorder %s22, 7
      %p367 = pnand %p365, %p366
      %p368 = pneg %p367
      // Predicated region
      $region53: #{big_linear_forward.1} parent=5 // pred_check
        _
      $region54: #{big_linear_forward.1} parent=5 // pred_check_branch
        %370 = sbr.rel (%p367) target = $region56
      $region55: #{big_linear_forward.1} parent=5 // pred_region
        %s371 = ssub.s32 %s22, 1
        %s372 = sand.u32 %s61, 1
        %s373 = scalar_lea.sflag [#allocation4], %s372
        %s374 = sand.u32 %s61, 1
        %s375 = smul.addr %s374, 2048
        %s376 = scalar_lea.vmem [#allocation3], %s375
        // Predicated region
        $region57: #{big_linear_forward.1} parent=55 // pred_check
          %p377 = pneg %p74
        $region58: #{big_linear_forward.1} parent=55 // pred_check_branch
          %379 = sbr.rel (%p377) target = $region60
        $region59: #{big_linear_forward.1} parent=55 // pred_region
          %380 = dma.done %s373, 32768
        $region60: #{big_linear_forward.1} parent=55 // pred_fallthru
          _
        // Predicated region
        $region61: #{big_linear_forward.1} parent=55 // pred_check
          %p381 = pneg %p95
        $region62: #{big_linear_forward.1} parent=55 // pred_check_branch
          %383 = sbr.rel (%p381) target = $region64
        $region63: #{big_linear_forward.1} parent=55 // pred_region
          %384 = dma.done [#allocation7], 128
        $region64: #{big_linear_forward.1} parent=55 // pred_fallthru
          _
        // Predicated region
        $region65: #{big_linear_forward.1} parent=55 // pred_check
          %p385 = pneg %p116
        $region66: #{big_linear_forward.1} parent=55 // pred_check_branch
          %387 = sbr.rel (%p385) target = $region68
        $region67: #{big_linear_forward.1} parent=55 // pred_region
          %388 = dma.done [#allocation7], 32768
        $region68: #{big_linear_forward.1} parent=55 // pred_fallthru
          _
        // Predicated region
        $region69: #{big_linear_forward.1} parent=55 // pred_check
          %p389 = pneg %p137
        $region70: #{big_linear_forward.1} parent=55 // pred_check_branch
          %391 = sbr.rel (%p389) target = $region72
        $region71: #{big_linear_forward.1} parent=55 // pred_region
          %392 = dma.done [#allocation10], 64
        $region72: #{big_linear_forward.1} parent=55 // pred_fallthru
          _
        // Predicated region
        $region73: #{big_linear_forward.1} parent=55 // pred_check
          %p393 = pneg %p158
        $region74: #{big_linear_forward.1} parent=55 // pred_check_branch
          %395 = sbr.rel (%p393) target = $region76
        $region75: #{big_linear_forward.1} parent=55 // pred_region
          %396 = dma.done [#allocation10], 4096
        $region76: #{big_linear_forward.1} parent=55 // pred_fallthru
          _
        // Predicated region
        $region77: #{big_linear_forward.1} parent=55 // pred_check
          %p397 = pneg %p179
        $region78: #{big_linear_forward.1} parent=55 // pred_check_branch
          %399 = sbr.rel (%p397) target = $region80
        $region79: #{big_linear_forward.1} parent=55 // pred_region
          %400 = dma.done [#allocation13], 16
        $region80: #{big_linear_forward.1} parent=55 // pred_fallthru
          _
        // Predicated region
        $region81: #{big_linear_forward.1} parent=55 // pred_check
          %p401 = pneg %p221
        $region82: #{big_linear_forward.1} parent=55 // pred_check_branch
          %403 = sbr.rel (%p401) target = $region84
        $region83: #{big_linear_forward.1} parent=55 // pred_region
          %404 = dma.done [#allocation13], 16
        $region84: #{big_linear_forward.1} parent=55 // pred_fallthru
          _
        %s405 = smul.u32 4, %s27
        %p406 = scmp.lt.s32.totalorder %s405, 23
        %s407 = scalar_select %p406, %s405, 23
        %s408 = smul.addr %s407, 2
        %s409 = scalar_lea.vmem %s0, %s408
        %p410 = pneg %p48
        %p411 = pneg %p45
        %s412 = sand.u32 %s61, 1
        %s413 = scalar_lea.sflag [#allocation4], %s412
        %s414 = sand.u32 %s61, 1
        %s415 = smul.addr %s414, 2048
        %s416 = scalar_lea.vmem [#allocation3], %s415
        %p417 = pneg %p74
        %p418 = pneg %p71
        %p419 = pneg %p95
        %p420 = pneg %p92
        %p421 = pneg %p116
        %p422 = pneg %p113
        %p423 = pneg %p137
        %p424 = pneg %p134
        %p425 = pneg %p158
        %p426 = pneg %p155
        %p427 = pneg %p179
        %p428 = pneg %p176
        %p429 = pneg %p200
        %p430 = pneg %p197
        %p431 = pneg %p221
        %p432 = pneg %p218
        %p433 = pneg %p242
        %p434 = pneg %p239
        %s435 = smul.u32 4, %s27
        %p436 = scmp.lt.s32.totalorder %s435, 23
        %s437 = scalar_select %p436, %s435, 23
        %s438 = smul.addr %s437, 2
        %s439 = scalar_lea.vmem %s0, %s438
        %s440 = smul.u32 4, %s27
        %s441 = smul.u32 64, %s27
        %p443 = scmp.eq.s32.totalorder %s27, 0
        // Predicated region
        $region85: #{big_linear_forward.1} parent=55 // pred_check
          %p444 = pneg %p443
        $region86: #{big_linear_forward.1} parent=55 // pred_check_branch
          %446 = sbr.rel (%p444) target = $region88
        $region87: #{big_linear_forward.1} parent=55 // pred_region
          %447 = vst [vmem:[#allocation2] sm:$0xff] 0.0
          %448 = vst [vmem:[#allocation2 + $0x8] sm:$0xff] 0.0
        $region88: #{big_linear_forward.1} parent=55 // pred_fallthru
          _
        %v449 = vld [vmem:[#allocation2] sm:$0xff]
        %v450 = vld [vmem:[#allocation2 + $0x8] sm:$0xff]
        %v451 = vld [vmem:[%s439] sm:$0xff]
        %v453 = vcombine.high %v451, %v451
        %v455 = vunpack.c.l.s4 1983009808
        %v456 = vunpack.c.0.s8 %v455
        %v457 = vlaneseq
        %v458 = vshrl.u32 %v457, 7
        %v459 = vsub.s32 %v456, %v458
        %v460 = vrot.slane %v451, %v459
        %v462 = vunpack.c.l.s4 1983009808
        %v463 = vunpack.c.0.s8 %v462
        %v464 = vlaneseq
        %v465 = vshrl.u32 %v464, 7
        %v466 = vsub.s32 %v463, %v465
        %v467 = vrot.slane %v453, %v466
        %v468 = vcombine.high %v460, %v460
        %v469 = vcombine.high %v467, %v467
        %v474 = vpack.c.bf16 %v460, %v460
        %v475 = vpack.c.bf16 %v468, %v468
        %v476 = vpack.c.bf16 %v467, %v467
        %v477 = vpack.c.bf16 %v469, %v469
        %v478 = vld [vmem:[%s376] sm:$0xff]
        %v479 = vld [vmem:[%s376 + $0x8] sm:$0xff]
        %v480 = vld [vmem:[%s376 + $0x10] sm:$0xff]
        %v481 = vld [vmem:[%s376 + $0x18] sm:$0xff]
        %v482 = vld [vmem:[%s376 + $0x20] sm:$0xff]
        %v483 = vld [vmem:[%s376 + $0x28] sm:$0xff]
        %v484 = vld [vmem:[%s376 + $0x30] sm:$0xff]
        %v485 = vld [vmem:[%s376 + $0x38] sm:$0xff]
        %v486 = vld [vmem:[%s376 + $0x40] sm:$0xff]
        %v487 = vld [vmem:[%s376 + $0x48] sm:$0xff]
        %v488 = vld [vmem:[%s376 + $0x50] sm:$0xff]
        %v489 = vld [vmem:[%s376 + $0x58] sm:$0xff]
        %v490 = vld [vmem:[%s376 + $0x60] sm:$0xff]
        %v491 = vld [vmem:[%s376 + $0x68] sm:$0xff]
        %v492 = vld [vmem:[%s376 + $0x70] sm:$0xff]
        %v493 = vld [vmem:[%s376 + $0x78] sm:$0xff]
        %v494 = vld [vmem:[%s376 + $0x80] sm:$0xff]
        %v495 = vld [vmem:[%s376 + $0x88] sm:$0xff]
        %v496 = vld [vmem:[%s376 + $0x90] sm:$0xff]
        %v497 = vld [vmem:[%s376 + $0x98] sm:$0xff]
        %v498 = vld [vmem:[%s376 + $0xa0] sm:$0xff]
        %v499 = vld [vmem:[%s376 + $0xa8] sm:$0xff]
        %v500 = vld [vmem:[%s376 + $0xb0] sm:$0xff]
        %v501 = vld [vmem:[%s376 + $0xb8] sm:$0xff]
        %v502 = vld [vmem:[%s376 + $0xc0] sm:$0xff]
        %v503 = vld [vmem:[%s376 + $0xc8] sm:$0xff]
        %v504 = vld [vmem:[%s376 + $0xd0] sm:$0xff]
        %v505 = vld [vmem:[%s376 + $0xd8] sm:$0xff]
        %v506 = vld [vmem:[%s376 + $0xe0] sm:$0xff]
        %v507 = vld [vmem:[%s376 + $0xe8] sm:$0xff]
        %v508 = vld [vmem:[%s376 + $0xf0] sm:$0xff]
        %v509 = vld [vmem:[%s376 + $0xf8] sm:$0xff]
        %v510 = vld [vmem:[%s376 + $0x100] sm:$0xff]
        %v511 = vld [vmem:[%s376 + $0x108] sm:$0xff]
        %v512 = vld [vmem:[%s376 + $0x110] sm:$0xff]
        %v513 = vld [vmem:[%s376 + $0x118] sm:$0xff]
        %v514 = vld [vmem:[%s376 + $0x120] sm:$0xff]
        %v515 = vld [vmem:[%s376 + $0x128] sm:$0xff]
        %v516 = vld [vmem:[%s376 + $0x130] sm:$0xff]
        %v517 = vld [vmem:[%s376 + $0x138] sm:$0xff]
        %v518 = vld [vmem:[%s376 + $0x140] sm:$0xff]
        %v519 = vld [vmem:[%s376 + $0x148] sm:$0xff]
        %v520 = vld [vmem:[%s376 + $0x150] sm:$0xff]
        %v521 = vld [vmem:[%s376 + $0x158] sm:$0xff]
        %v522 = vld [vmem:[%s376 + $0x160] sm:$0xff]
        %v523 = vld [vmem:[%s376 + $0x168] sm:$0xff]
        %v524 = vld [vmem:[%s376 + $0x170] sm:$0xff]
        %v525 = vld [vmem:[%s376 + $0x178] sm:$0xff]
        %v526 = vld [vmem:[%s376 + $0x180] sm:$0xff]
        %v527 = vld [vmem:[%s376 + $0x188] sm:$0xff]
        %v528 = vld [vmem:[%s376 + $0x190] sm:$0xff]
        %v529 = vld [vmem:[%s376 + $0x198] sm:$0xff]
        %v530 = vld [vmem:[%s376 + $0x1a0] sm:$0xff]
        %v531 = vld [vmem:[%s376 + $0x1a8] sm:$0xff]
        %v532 = vld [vmem:[%s376 + $0x1b0] sm:$0xff]
        %v533 = vld [vmem:[%s376 + $0x1b8] sm:$0xff]
        %v534 = vld [vmem:[%s376 + $0x1c0] sm:$0xff]
        %v535 = vld [vmem:[%s376 + $0x1c8] sm:$0xff]
        %v536 = vld [vmem:[%s376 + $0x1d0] sm:$0xff]
        %v537 = vld [vmem:[%s376 + $0x1d8] sm:$0xff]
        %v538 = vld [vmem:[%s376 + $0x1e0] sm:$0xff]
        %v539 = vld [vmem:[%s376 + $0x1e8] sm:$0xff]
        %v540 = vld [vmem:[%s376 + $0x1f0] sm:$0xff]
        %v541 = vld [vmem:[%s376 + $0x1f8] sm:$0xff]
        %v542 = vld [vmem:[%s376 + $0x200] sm:$0xff]
        %v543 = vld [vmem:[%s376 + $0x208] sm:$0xff]
        %v544 = vld [vmem:[%s376 + $0x210] sm:$0xff]
        %v545 = vld [vmem:[%s376 + $0x218] sm:$0xff]
        %v546 = vld [vmem:[%s376 + $0x220] sm:$0xff]
        %v547 = vld [vmem:[%s376 + $0x228] sm:$0xff]
        %v548 = vld [vmem:[%s376 + $0x230] sm:$0xff]
        %v549 = vld [vmem:[%s376 + $0x238] sm:$0xff]
        %v550 = vld [vmem:[%s376 + $0x240] sm:$0xff]
        %v551 = vld [vmem:[%s376 + $0x248] sm:$0xff]
        %v552 = vld [vmem:[%s376 + $0x250] sm:$0xff]
        %v553 = vld [vmem:[%s376 + $0x258] sm:$0xff]
        %v554 = vld [vmem:[%s376 + $0x260] sm:$0xff]
        %v555 = vld [vmem:[%s376 + $0x268] sm:$0xff]
        %v556 = vld [vmem:[%s376 + $0x270] sm:$0xff]
        %v557 = vld [vmem:[%s376 + $0x278] sm:$0xff]
        %v558 = vld [vmem:[%s376 + $0x280] sm:$0xff]
        %v559 = vld [vmem:[%s376 + $0x288] sm:$0xff]
        %v560 = vld [vmem:[%s376 + $0x290] sm:$0xff]
        %v561 = vld [vmem:[%s376 + $0x298] sm:$0xff]
        %v562 = vld [vmem:[%s376 + $0x2a0] sm:$0xff]
        %v563 = vld [vmem:[%s376 + $0x2a8] sm:$0xff]
        %v564 = vld [vmem:[%s376 + $0x2b0] sm:$0xff]
        %v565 = vld [vmem:[%s376 + $0x2b8] sm:$0xff]
        %v566 = vld [vmem:[%s376 + $0x2c0] sm:$0xff]
        %v567 = vld [vmem:[%s376 + $0x2c8] sm:$0xff]
        %v568 = vld [vmem:[%s376 + $0x2d0] sm:$0xff]
        %v569 = vld [vmem:[%s376 + $0x2d8] sm:$0xff]
        %v570 = vld [vmem:[%s376 + $0x2e0] sm:$0xff]
        %v571 = vld [vmem:[%s376 + $0x2e8] sm:$0xff]
        %v572 = vld [vmem:[%s376 + $0x2f0] sm:$0xff]
        %v573 = vld [vmem:[%s376 + $0x2f8] sm:$0xff]
        %v574 = vld [vmem:[%s376 + $0x300] sm:$0xff]
        %v575 = vld [vmem:[%s376 + $0x308] sm:$0xff]
        %v576 = vld [vmem:[%s376 + $0x310] sm:$0xff]
        %v577 = vld [vmem:[%s376 + $0x318] sm:$0xff]
        %v578 = vld [vmem:[%s376 + $0x320] sm:$0xff]
        %v579 = vld [vmem:[%s376 + $0x328] sm:$0xff]
        %v580 = vld [vmem:[%s376 + $0x330] sm:$0xff]
        %v581 = vld [vmem:[%s376 + $0x338] sm:$0xff]
        %v582 = vld [vmem:[%s376 + $0x340] sm:$0xff]
        %v583 = vld [vmem:[%s376 + $0x348] sm:$0xff]
        %v584 = vld [vmem:[%s376 + $0x350] sm:$0xff]
        %v585 = vld [vmem:[%s376 + $0x358] sm:$0xff]
        %v586 = vld [vmem:[%s376 + $0x360] sm:$0xff]
        %v587 = vld [vmem:[%s376 + $0x368] sm:$0xff]
        %v588 = vld [vmem:[%s376 + $0x370] sm:$0xff]
        %v589 = vld [vmem:[%s376 + $0x378] sm:$0xff]
        %v590 = vld [vmem:[%s376 + $0x380] sm:$0xff]
        %v591 = vld [vmem:[%s376 + $0x388] sm:$0xff]
        %v592 = vld [vmem:[%s376 + $0x390] sm:$0xff]
        %v593 = vld [vmem:[%s376 + $0x398] sm:$0xff]
        %v594 = vld [vmem:[%s376 + $0x3a0] sm:$0xff]
        %v595 = vld [vmem:[%s376 + $0x3a8] sm:$0xff]
        %v596 = vld [vmem:[%s376 + $0x3b0] sm:$0xff]
        %v597 = vld [vmem:[%s376 + $0x3b8] sm:$0xff]
        %v598 = vld [vmem:[%s376 + $0x3c0] sm:$0xff]
        %v599 = vld [vmem:[%s376 + $0x3c8] sm:$0xff]
        %v600 = vld [vmem:[%s376 + $0x3d0] sm:$0xff]
        %v601 = vld [vmem:[%s376 + $0x3d8] sm:$0xff]
        %v602 = vld [vmem:[%s376 + $0x3e0] sm:$0xff]
        %v603 = vld [vmem:[%s376 + $0x3e8] sm:$0xff]
        %v604 = vld [vmem:[%s376 + $0x3f0] sm:$0xff]
        %v605 = vld [vmem:[%s376 + $0x3f8] sm:$0xff]
        %v606 = vld [vmem:[%s376 + $0x400] sm:$0xff]
        %v607 = vld [vmem:[%s376 + $0x408] sm:$0xff]
        %v608 = vld [vmem:[%s376 + $0x410] sm:$0xff]
        %v609 = vld [vmem:[%s376 + $0x418] sm:$0xff]
        %v610 = vld [vmem:[%s376 + $0x420] sm:$0xff]
        %v611 = vld [vmem:[%s376 + $0x428] sm:$0xff]
        %v612 = vld [vmem:[%s376 + $0x430] sm:$0xff]
        %v613 = vld [vmem:[%s376 + $0x438] sm:$0xff]
        %v614 = vld [vmem:[%s376 + $0x440] sm:$0xff]
        %v615 = vld [vmem:[%s376 + $0x448] sm:$0xff]
        %v616 = vld [vmem:[%s376 + $0x450] sm:$0xff]
        %v617 = vld [vmem:[%s376 + $0x458] sm:$0xff]
        %v618 = vld [vmem:[%s376 + $0x460] sm:$0xff]
        %v619 = vld [vmem:[%s376 + $0x468] sm:$0xff]
        %v620 = vld [vmem:[%s376 + $0x470] sm:$0xff]
        %v621 = vld [vmem:[%s376 + $0x478] sm:$0xff]
        %v622 = vld [vmem:[%s376 + $0x480] sm:$0xff]
        %v623 = vld [vmem:[%s376 + $0x488] sm:$0xff]
        %v624 = vld [vmem:[%s376 + $0x490] sm:$0xff]
        %v625 = vld [vmem:[%s376 + $0x498] sm:$0xff]
        %v626 = vld [vmem:[%s376 + $0x4a0] sm:$0xff]
        %v627 = vld [vmem:[%s376 + $0x4a8] sm:$0xff]
        %v628 = vld [vmem:[%s376 + $0x4b0] sm:$0xff]
        %v629 = vld [vmem:[%s376 + $0x4b8] sm:$0xff]
        %v630 = vld [vmem:[%s376 + $0x4c0] sm:$0xff]
        %v631 = vld [vmem:[%s376 + $0x4c8] sm:$0xff]
        %v632 = vld [vmem:[%s376 + $0x4d0] sm:$0xff]
        %v633 = vld [vmem:[%s376 + $0x4d8] sm:$0xff]
        %v634 = vld [vmem:[%s376 + $0x4e0] sm:$0xff]
        %v635 = vld [vmem:[%s376 + $0x4e8] sm:$0xff]
        %v636 = vld [vmem:[%s376 + $0x4f0] sm:$0xff]
        %v637 = vld [vmem:[%s376 + $0x4f8] sm:$0xff]
        %v638 = vld [vmem:[%s376 + $0x500] sm:$0xff]
        %v639 = vld [vmem:[%s376 + $0x508] sm:$0xff]
        %v640 = vld [vmem:[%s376 + $0x510] sm:$0xff]
        %v641 = vld [vmem:[%s376 + $0x518] sm:$0xff]
        %v642 = vld [vmem:[%s376 + $0x520] sm:$0xff]
        %v643 = vld [vmem:[%s376 + $0x528] sm:$0xff]
        %v644 = vld [vmem:[%s376 + $0x530] sm:$0xff]
        %v645 = vld [vmem:[%s376 + $0x538] sm:$0xff]
        %v646 = vld [vmem:[%s376 + $0x540] sm:$0xff]
        %v647 = vld [vmem:[%s376 + $0x548] sm:$0xff]
        %v648 = vld [vmem:[%s376 + $0x550] sm:$0xff]
        %v649 = vld [vmem:[%s376 + $0x558] sm:$0xff]
        %v650 = vld [vmem:[%s376 + $0x560] sm:$0xff]
        %v651 = vld [vmem:[%s376 + $0x568] sm:$0xff]
        %v652 = vld [vmem:[%s376 + $0x570] sm:$0xff]
        %v653 = vld [vmem:[%s376 + $0x578] sm:$0xff]
        %v654 = vld [vmem:[%s376 + $0x580] sm:$0xff]
        %v655 = vld [vmem:[%s376 + $0x588] sm:$0xff]
        %v656 = vld [vmem:[%s376 + $0x590] sm:$0xff]
        %v657 = vld [vmem:[%s376 + $0x598] sm:$0xff]
        %v658 = vld [vmem:[%s376 + $0x5a0] sm:$0xff]
        %v659 = vld [vmem:[%s376 + $0x5a8] sm:$0xff]
        %v660 = vld [vmem:[%s376 + $0x5b0] sm:$0xff]
        %v661 = vld [vmem:[%s376 + $0x5b8] sm:$0xff]
        %v662 = vld [vmem:[%s376 + $0x5c0] sm:$0xff]
        %v663 = vld [vmem:[%s376 + $0x5c8] sm:$0xff]
        %v664 = vld [vmem:[%s376 + $0x5d0] sm:$0xff]
        %v665 = vld [vmem:[%s376 + $0x5d8] sm:$0xff]
        %v666 = vld [vmem:[%s376 + $0x5e0] sm:$0xff]
        %v667 = vld [vmem:[%s376 + $0x5e8] sm:$0xff]
        %v668 = vld [vmem:[%s376 + $0x5f0] sm:$0xff]
        %v669 = vld [vmem:[%s376 + $0x5f8] sm:$0xff]
        %v670 = vld [vmem:[%s376 + $0x600] sm:$0xff]
        %v671 = vld [vmem:[%s376 + $0x608] sm:$0xff]
        %v672 = vld [vmem:[%s376 + $0x610] sm:$0xff]
        %v673 = vld [vmem:[%s376 + $0x618] sm:$0xff]
        %v674 = vld [vmem:[%s376 + $0x620] sm:$0xff]
        %v675 = vld [vmem:[%s376 + $0x628] sm:$0xff]
        %v676 = vld [vmem:[%s376 + $0x630] sm:$0xff]
        %v677 = vld [vmem:[%s376 + $0x638] sm:$0xff]
        %v678 = vld [vmem:[%s376 + $0x640] sm:$0xff]
        %v679 = vld [vmem:[%s376 + $0x648] sm:$0xff]
        %v680 = vld [vmem:[%s376 + $0x650] sm:$0xff]
        %v681 = vld [vmem:[%s376 + $0x658] sm:$0xff]
        %v682 = vld [vmem:[%s376 + $0x660] sm:$0xff]
        %v683 = vld [vmem:[%s376 + $0x668] sm:$0xff]
        %v684 = vld [vmem:[%s376 + $0x670] sm:$0xff]
        %v685 = vld [vmem:[%s376 + $0x678] sm:$0xff]
        %v686 = vld [vmem:[%s376 + $0x680] sm:$0xff]
        %v687 = vld [vmem:[%s376 + $0x688] sm:$0xff]
        %v688 = vld [vmem:[%s376 + $0x690] sm:$0xff]
        %v689 = vld [vmem:[%s376 + $0x698] sm:$0xff]
        %v690 = vld [vmem:[%s376 + $0x6a0] sm:$0xff]
        %v691 = vld [vmem:[%s376 + $0x6a8] sm:$0xff]
        %v692 = vld [vmem:[%s376 + $0x6b0] sm:$0xff]
        %v693 = vld [vmem:[%s376 + $0x6b8] sm:$0xff]
        %v694 = vld [vmem:[%s376 + $0x6c0] sm:$0xff]
        %v695 = vld [vmem:[%s376 + $0x6c8] sm:$0xff]
        %v696 = vld [vmem:[%s376 + $0x6d0] sm:$0xff]
        %v697 = vld [vmem:[%s376 + $0x6d8] sm:$0xff]
        %v698 = vld [vmem:[%s376 + $0x6e0] sm:$0xff]
        %v699 = vld [vmem:[%s376 + $0x6e8] sm:$0xff]
        %v700 = vld [vmem:[%s376 + $0x6f0] sm:$0xff]
        %v701 = vld [vmem:[%s376 + $0x6f8] sm:$0xff]
        %v702 = vld [vmem:[%s376 + $0x700] sm:$0xff]
        %v703 = vld [vmem:[%s376 + $0x708] sm:$0xff]
        %v704 = vld [vmem:[%s376 + $0x710] sm:$0xff]
        %v705 = vld [vmem:[%s376 + $0x718] sm:$0xff]
        %v706 = vld [vmem:[%s376 + $0x720] sm:$0xff]
        %v707 = vld [vmem:[%s376 + $0x728] sm:$0xff]
        %v708 = vld [vmem:[%s376 + $0x730] sm:$0xff]
        %v709 = vld [vmem:[%s376 + $0x738] sm:$0xff]
        %v710 = vld [vmem:[%s376 + $0x740] sm:$0xff]
        %v711 = vld [vmem:[%s376 + $0x748] sm:$0xff]
        %v712 = vld [vmem:[%s376 + $0x750] sm:$0xff]
        %v713 = vld [vmem:[%s376 + $0x758] sm:$0xff]
        %v714 = vld [vmem:[%s376 + $0x760] sm:$0xff]
        %v715 = vld [vmem:[%s376 + $0x768] sm:$0xff]
        %v716 = vld [vmem:[%s376 + $0x770] sm:$0xff]
        %v717 = vld [vmem:[%s376 + $0x778] sm:$0xff]
        %v718 = vld [vmem:[%s376 + $0x780] sm:$0xff]
        %v719 = vld [vmem:[%s376 + $0x788] sm:$0xff]
        %v720 = vld [vmem:[%s376 + $0x790] sm:$0xff]
        %v721 = vld [vmem:[%s376 + $0x798] sm:$0xff]
        %v722 = vld [vmem:[%s376 + $0x7a0] sm:$0xff]
        %v723 = vld [vmem:[%s376 + $0x7a8] sm:$0xff]
        %v724 = vld [vmem:[%s376 + $0x7b0] sm:$0xff]
        %v725 = vld [vmem:[%s376 + $0x7b8] sm:$0xff]
        %v726 = vld [vmem:[%s376 + $0x7c0] sm:$0xff]
        %v727 = vld [vmem:[%s376 + $0x7c8] sm:$0xff]
        %v728 = vld [vmem:[%s376 + $0x7d0] sm:$0xff]
        %v729 = vld [vmem:[%s376 + $0x7d8] sm:$0xff]
        %v730 = vld [vmem:[%s376 + $0x7e0] sm:$0xff]
        %v731 = vld [vmem:[%s376 + $0x7e8] sm:$0xff]
        %v732 = vld [vmem:[%s376 + $0x7f0] sm:$0xff]
        %v733 = vld [vmem:[%s376 + $0x7f8] sm:$0xff]
        %v990 = vunpack.c.l.b16 %v478
        %v991 = vunpack.c.h.b16 %v478
        %v992 = vunpack.c.l.b16 %v479
        %v993 = vunpack.c.h.b16 %v479
        %v994 = vunpack.c.l.b16 %v480
        %v995 = vunpack.c.h.b16 %v480
        %v996 = vunpack.c.l.b16 %v481
        %v997 = vunpack.c.h.b16 %v481
        %v998 = vunpack.c.l.b16 %v482
        %v999 = vunpack.c.h.b16 %v482
        %v1000 = vunpack.c.l.b16 %v483
        %v1001 = vunpack.c.h.b16 %v483
        %v1002 = vunpack.c.l.b16 %v484
        %v1003 = vunpack.c.h.b16 %v484
        %v1004 = vunpack.c.l.b16 %v485
        %v1005 = vunpack.c.h.b16 %v485
        %v1006 = vunpack.c.l.b16 %v486
        %v1007 = vunpack.c.h.b16 %v486
        %v1008 = vunpack.c.l.b16 %v487
        %v1009 = vunpack.c.h.b16 %v487
        %v1010 = vunpack.c.l.b16 %v488
        %v1011 = vunpack.c.h.b16 %v488
        %v1012 = vunpack.c.l.b16 %v489
        %v1013 = vunpack.c.h.b16 %v489
        %v1014 = vunpack.c.l.b16 %v490
        %v1015 = vunpack.c.h.b16 %v490
        %v1016 = vunpack.c.l.b16 %v491
        %v1017 = vunpack.c.h.b16 %v491
        %v1018 = vunpack.c.l.b16 %v492
        %v1019 = vunpack.c.h.b16 %v492
        %v1020 = vunpack.c.l.b16 %v493
        %v1021 = vunpack.c.h.b16 %v493
        %v1022 = vunpack.c.l.b16 %v494
        %v1023 = vunpack.c.h.b16 %v494
        %v1024 = vunpack.c.l.b16 %v495
        %v1025 = vunpack.c.h.b16 %v495
        %v1026 = vunpack.c.l.b16 %v496
        %v1027 = vunpack.c.h.b16 %v496
        %v1028 = vunpack.c.l.b16 %v497
        %v1029 = vunpack.c.h.b16 %v497
        %v1030 = vunpack.c.l.b16 %v498
        %v1031 = vunpack.c.h.b16 %v498
        %v1032 = vunpack.c.l.b16 %v499
        %v1033 = vunpack.c.h.b16 %v499
        %v1034 = vunpack.c.l.b16 %v500
        %v1035 = vunpack.c.h.b16 %v500
        %v1036 = vunpack.c.l.b16 %v501
        %v1037 = vunpack.c.h.b16 %v501
        %v1038 = vunpack.c.l.b16 %v502
        %v1039 = vunpack.c.h.b16 %v502
        %v1040 = vunpack.c.l.b16 %v503
        %v1041 = vunpack.c.h.b16 %v503
        %v1042 = vunpack.c.l.b16 %v504
        %v1043 = vunpack.c.h.b16 %v504
        %v1044 = vunpack.c.l.b16 %v505
        %v1045 = vunpack.c.h.b16 %v505
        %v1046 = vunpack.c.l.b16 %v506
        %v1047 = vunpack.c.h.b16 %v506
        %v1048 = vunpack.c.l.b16 %v507
        %v1049 = vunpack.c.h.b16 %v507
        %v1050 = vunpack.c.l.b16 %v508
        %v1051 = vunpack.c.h.b16 %v508
        %v1052 = vunpack.c.l.b16 %v509
        %v1053 = vunpack.c.h.b16 %v509
        %v1054 = vunpack.c.l.b16 %v510
        %v1055 = vunpack.c.h.b16 %v510
        %v1056 = vunpack.c.l.b16 %v511
        %v1057 = vunpack.c.h.b16 %v511
        %v1058 = vunpack.c.l.b16 %v512
        %v1059 = vunpack.c.h.b16 %v512
        %v1060 = vunpack.c.l.b16 %v513
        %v1061 = vunpack.c.h.b16 %v513
        %v1062 = vunpack.c.l.b16 %v514
        %v1063 = vunpack.c.h.b16 %v514
        %v1064 = vunpack.c.l.b16 %v515
        %v1065 = vunpack.c.h.b16 %v515
        %v1066 = vunpack.c.l.b16 %v516
        %v1067 = vunpack.c.h.b16 %v516
        %v1068 = vunpack.c.l.b16 %v517
        %v1069 = vunpack.c.h.b16 %v517
        %v1070 = vunpack.c.l.b16 %v518
        %v1071 = vunpack.c.h.b16 %v518
        %v1072 = vunpack.c.l.b16 %v519
        %v1073 = vunpack.c.h.b16 %v519
        %v1074 = vunpack.c.l.b16 %v520
        %v1075 = vunpack.c.h.b16 %v520
        %v1076 = vunpack.c.l.b16 %v521
        %v1077 = vunpack.c.h.b16 %v521
        %v1078 = vunpack.c.l.b16 %v522
        %v1079 = vunpack.c.h.b16 %v522
        %v1080 = vunpack.c.l.b16 %v523
        %v1081 = vunpack.c.h.b16 %v523
        %v1082 = vunpack.c.l.b16 %v524
        %v1083 = vunpack.c.h.b16 %v524
        %v1084 = vunpack.c.l.b16 %v525
        %v1085 = vunpack.c.h.b16 %v525
        %v1086 = vunpack.c.l.b16 %v526
        %v1087 = vunpack.c.h.b16 %v526
        %v1088 = vunpack.c.l.b16 %v527
        %v1089 = vunpack.c.h.b16 %v527
        %v1090 = vunpack.c.l.b16 %v528
        %v1091 = vunpack.c.h.b16 %v528
        %v1092 = vunpack.c.l.b16 %v529
        %v1093 = vunpack.c.h.b16 %v529
        %v1094 = vunpack.c.l.b16 %v530
        %v1095 = vunpack.c.h.b16 %v530
        %v1096 = vunpack.c.l.b16 %v531
        %v1097 = vunpack.c.h.b16 %v531
        %v1098 = vunpack.c.l.b16 %v532
        %v1099 = vunpack.c.h.b16 %v532
        %v1100 = vunpack.c.l.b16 %v533
        %v1101 = vunpack.c.h.b16 %v533
        %v1102 = vunpack.c.l.b16 %v534
        %v1103 = vunpack.c.h.b16 %v534
        %v1104 = vunpack.c.l.b16 %v535
        %v1105 = vunpack.c.h.b16 %v535
        %v1106 = vunpack.c.l.b16 %v536
        %v1107 = vunpack.c.h.b16 %v536
        %v1108 = vunpack.c.l.b16 %v537
        %v1109 = vunpack.c.h.b16 %v537
        %v1110 = vunpack.c.l.b16 %v538
        %v1111 = vunpack.c.h.b16 %v538
        %v1112 = vunpack.c.l.b16 %v539
        %v1113 = vunpack.c.h.b16 %v539
        %v1114 = vunpack.c.l.b16 %v540
        %v1115 = vunpack.c.h.b16 %v540
        %v1116 = vunpack.c.l.b16 %v541
        %v1117 = vunpack.c.h.b16 %v541
        %v1118 = vunpack.c.l.b16 %v542
        %v1119 = vunpack.c.h.b16 %v542
        %v1120 = vunpack.c.l.b16 %v543
        %v1121 = vunpack.c.h.b16 %v543
        %v1122 = vunpack.c.l.b16 %v544
        %v1123 = vunpack.c.h.b16 %v544
        %v1124 = vunpack.c.l.b16 %v545
        %v1125 = vunpack.c.h.b16 %v545
        %v1126 = vunpack.c.l.b16 %v546
        %v1127 = vunpack.c.h.b16 %v546
        %v1128 = vunpack.c.l.b16 %v547
        %v1129 = vunpack.c.h.b16 %v547
        %v1130 = vunpack.c.l.b16 %v548
        %v1131 = vunpack.c.h.b16 %v548
        %v1132 = vunpack.c.l.b16 %v549
        %v1133 = vunpack.c.h.b16 %v549
        %v1134 = vunpack.c.l.b16 %v550
        %v1135 = vunpack.c.h.b16 %v550
        %v1136 = vunpack.c.l.b16 %v551
        %v1137 = vunpack.c.h.b16 %v551
        %v1138 = vunpack.c.l.b16 %v552
        %v1139 = vunpack.c.h.b16 %v552
        %v1140 = vunpack.c.l.b16 %v553
        %v1141 = vunpack.c.h.b16 %v553
        %v1142 = vunpack.c.l.b16 %v554
        %v1143 = vunpack.c.h.b16 %v554
        %v1144 = vunpack.c.l.b16 %v555
        %v1145 = vunpack.c.h.b16 %v555
        %v1146 = vunpack.c.l.b16 %v556
        %v1147 = vunpack.c.h.b16 %v556
        %v1148 = vunpack.c.l.b16 %v557
        %v1149 = vunpack.c.h.b16 %v557
        %v1150 = vunpack.c.l.b16 %v558
        %v1151 = vunpack.c.h.b16 %v558
        %v1152 = vunpack.c.l.b16 %v559
        %v1153 = vunpack.c.h.b16 %v559
        %v1154 = vunpack.c.l.b16 %v560
        %v1155 = vunpack.c.h.b16 %v560
        %v1156 = vunpack.c.l.b16 %v561
        %v1157 = vunpack.c.h.b16 %v561
        %v1158 = vunpack.c.l.b16 %v562
        %v1159 = vunpack.c.h.b16 %v562
        %v1160 = vunpack.c.l.b16 %v563
        %v1161 = vunpack.c.h.b16 %v563
        %v1162 = vunpack.c.l.b16 %v564
        %v1163 = vunpack.c.h.b16 %v564
        %v1164 = vunpack.c.l.b16 %v565
        %v1165 = vunpack.c.h.b16 %v565
        %v1166 = vunpack.c.l.b16 %v566
        %v1167 = vunpack.c.h.b16 %v566
        %v1168 = vunpack.c.l.b16 %v567
        %v1169 = vunpack.c.h.b16 %v567
        %v1170 = vunpack.c.l.b16 %v568
        %v1171 = vunpack.c.h.b16 %v568
        %v1172 = vunpack.c.l.b16 %v569
        %v1173 = vunpack.c.h.b16 %v569
        %v1174 = vunpack.c.l.b16 %v570
        %v1175 = vunpack.c.h.b16 %v570
        %v1176 = vunpack.c.l.b16 %v571
        %v1177 = vunpack.c.h.b16 %v571
        %v1178 = vunpack.c.l.b16 %v572
        %v1179 = vunpack.c.h.b16 %v572
        %v1180 = vunpack.c.l.b16 %v573
        %v1181 = vunpack.c.h.b16 %v573
        %v1182 = vunpack.c.l.b16 %v574
        %v1183 = vunpack.c.h.b16 %v574
        %v1184 = vunpack.c.l.b16 %v575
        %v1185 = vunpack.c.h.b16 %v575
        %v1186 = vunpack.c.l.b16 %v576
        %v1187 = vunpack.c.h.b16 %v576
        %v1188 = vunpack.c.l.b16 %v577
        %v1189 = vunpack.c.h.b16 %v577
        %v1190 = vunpack.c.l.b16 %v578
        %v1191 = vunpack.c.h.b16 %v578
        %v1192 = vunpack.c.l.b16 %v579
        %v1193 = vunpack.c.h.b16 %v579
        %v1194 = vunpack.c.l.b16 %v580
        %v1195 = vunpack.c.h.b16 %v580
        %v1196 = vunpack.c.l.b16 %v581
        %v1197 = vunpack.c.h.b16 %v581
        %v1198 = vunpack.c.l.b16 %v582
        %v1199 = vunpack.c.h.b16 %v582
        %v1200 = vunpack.c.l.b16 %v583
        %v1201 = vunpack.c.h.b16 %v583
        %v1202 = vunpack.c.l.b16 %v584
        %v1203 = vunpack.c.h.b16 %v584
        %v1204 = vunpack.c.l.b16 %v585
        %v1205 = vunpack.c.h.b16 %v585
        %v1206 = vunpack.c.l.b16 %v586
        %v1207 = vunpack.c.h.b16 %v586
        %v1208 = vunpack.c.l.b16 %v587
        %v1209 = vunpack.c.h.b16 %v587
        %v1210 = vunpack.c.l.b16 %v588
        %v1211 = vunpack.c.h.b16 %v588
        %v1212 = vunpack.c.l.b16 %v589
        %v1213 = vunpack.c.h.b16 %v589
        %v1214 = vunpack.c.l.b16 %v590
        %v1215 = vunpack.c.h.b16 %v590
        %v1216 = vunpack.c.l.b16 %v591
        %v1217 = vunpack.c.h.b16 %v591
        %v1218 = vunpack.c.l.b16 %v592
        %v1219 = vunpack.c.h.b16 %v592
        %v1220 = vunpack.c.l.b16 %v593
        %v1221 = vunpack.c.h.b16 %v593
        %v1222 = vunpack.c.l.b16 %v594
        %v1223 = vunpack.c.h.b16 %v594
        %v1224 = vunpack.c.l.b16 %v595
        %v1225 = vunpack.c.h.b16 %v595
        %v1226 = vunpack.c.l.b16 %v596
        %v1227 = vunpack.c.h.b16 %v596
        %v1228 = vunpack.c.l.b16 %v597
        %v1229 = vunpack.c.h.b16 %v597
        %v1230 = vunpack.c.l.b16 %v598
        %v1231 = vunpack.c.h.b16 %v598
        %v1232 = vunpack.c.l.b16 %v599
        %v1233 = vunpack.c.h.b16 %v599
        %v1234 = vunpack.c.l.b16 %v600
        %v1235 = vunpack.c.h.b16 %v600
        %v1236 = vunpack.c.l.b16 %v601
        %v1237 = vunpack.c.h.b16 %v601
        %v1238 = vunpack.c.l.b16 %v602
        %v1239 = vunpack.c.h.b16 %v602
        %v1240 = vunpack.c.l.b16 %v603
        %v1241 = vunpack.c.h.b16 %v603
        %v1242 = vunpack.c.l.b16 %v604
        %v1243 = vunpack.c.h.b16 %v604
        %v1244 = vunpack.c.l.b16 %v605
        %v1245 = vunpack.c.h.b16 %v605
        %v1246 = vunpack.c.l.b16 %v606
        %v1247 = vunpack.c.h.b16 %v606
        %v1248 = vunpack.c.l.b16 %v607
        %v1249 = vunpack.c.h.b16 %v607
        %v1250 = vunpack.c.l.b16 %v608
        %v1251 = vunpack.c.h.b16 %v608
        %v1252 = vunpack.c.l.b16 %v609
        %v1253 = vunpack.c.h.b16 %v609
        %v1254 = vunpack.c.l.b16 %v610
        %v1255 = vunpack.c.h.b16 %v610
        %v1256 = vunpack.c.l.b16 %v611
        %v1257 = vunpack.c.h.b16 %v611
        %v1258 = vunpack.c.l.b16 %v612
        %v1259 = vunpack.c.h.b16 %v612
        %v1260 = vunpack.c.l.b16 %v613
        %v1261 = vunpack.c.h.b16 %v613
        %v1262 = vunpack.c.l.b16 %v614
        %v1263 = vunpack.c.h.b16 %v614
        %v1264 = vunpack.c.l.b16 %v615
        %v1265 = vunpack.c.h.b16 %v615
        %v1266 = vunpack.c.l.b16 %v616
        %v1267 = vunpack.c.h.b16 %v616
        %v1268 = vunpack.c.l.b16 %v617
        %v1269 = vunpack.c.h.b16 %v617
        %v1270 = vunpack.c.l.b16 %v618
        %v1271 = vunpack.c.h.b16 %v618
        %v1272 = vunpack.c.l.b16 %v619
        %v1273 = vunpack.c.h.b16 %v619
        %v1274 = vunpack.c.l.b16 %v620
        %v1275 = vunpack.c.h.b16 %v620
        %v1276 = vunpack.c.l.b16 %v621
        %v1277 = vunpack.c.h.b16 %v621
        %v1278 = vunpack.c.l.b16 %v622
        %v1279 = vunpack.c.h.b16 %v622
        %v1280 = vunpack.c.l.b16 %v623
        %v1281 = vunpack.c.h.b16 %v623
        %v1282 = vunpack.c.l.b16 %v624
        %v1283 = vunpack.c.h.b16 %v624
        %v1284 = vunpack.c.l.b16 %v625
        %v1285 = vunpack.c.h.b16 %v625
        %v1286 = vunpack.c.l.b16 %v626
        %v1287 = vunpack.c.h.b16 %v626
        %v1288 = vunpack.c.l.b16 %v627
        %v1289 = vunpack.c.h.b16 %v627
        %v1290 = vunpack.c.l.b16 %v628
        %v1291 = vunpack.c.h.b16 %v628
        %v1292 = vunpack.c.l.b16 %v629
        %v1293 = vunpack.c.h.b16 %v629
        %v1294 = vunpack.c.l.b16 %v630
        %v1295 = vunpack.c.h.b16 %v630
        %v1296 = vunpack.c.l.b16 %v631
        %v1297 = vunpack.c.h.b16 %v631
        %v1298 = vunpack.c.l.b16 %v632
        %v1299 = vunpack.c.h.b16 %v632
        %v1300 = vunpack.c.l.b16 %v633
        %v1301 = vunpack.c.h.b16 %v633
        %v1302 = vunpack.c.l.b16 %v634
        %v1303 = vunpack.c.h.b16 %v634
        %v1304 = vunpack.c.l.b16 %v635
        %v1305 = vunpack.c.h.b16 %v635
        %v1306 = vunpack.c.l.b16 %v636
        %v1307 = vunpack.c.h.b16 %v636
        %v1308 = vunpack.c.l.b16 %v637
        %v1309 = vunpack.c.h.b16 %v637
        %v1310 = vunpack.c.l.b16 %v638
        %v1311 = vunpack.c.h.b16 %v638
        %v1312 = vunpack.c.l.b16 %v639
        %v1313 = vunpack.c.h.b16 %v639
        %v1314 = vunpack.c.l.b16 %v640
        %v1315 = vunpack.c.h.b16 %v640
        %v1316 = vunpack.c.l.b16 %v641
        %v1317 = vunpack.c.h.b16 %v641
        %v1318 = vunpack.c.l.b16 %v642
        %v1319 = vunpack.c.h.b16 %v642
        %v1320 = vunpack.c.l.b16 %v643
        %v1321 = vunpack.c.h.b16 %v643
        %v1322 = vunpack.c.l.b16 %v644
        %v1323 = vunpack.c.h.b16 %v644
        %v1324 = vunpack.c.l.b16 %v645
        %v1325 = vunpack.c.h.b16 %v645
        %v1326 = vunpack.c.l.b16 %v646
        %v1327 = vunpack.c.h.b16 %v646
        %v1328 = vunpack.c.l.b16 %v647
        %v1329 = vunpack.c.h.b16 %v647
        %v1330 = vunpack.c.l.b16 %v648
        %v1331 = vunpack.c.h.b16 %v648
        %v1332 = vunpack.c.l.b16 %v649
        %v1333 = vunpack.c.h.b16 %v649
        %v1334 = vunpack.c.l.b16 %v650
        %v1335 = vunpack.c.h.b16 %v650
        %v1336 = vunpack.c.l.b16 %v651
        %v1337 = vunpack.c.h.b16 %v651
        %v1338 = vunpack.c.l.b16 %v652
        %v1339 = vunpack.c.h.b16 %v652
        %v1340 = vunpack.c.l.b16 %v653
        %v1341 = vunpack.c.h.b16 %v653
        %v1342 = vunpack.c.l.b16 %v654
        %v1343 = vunpack.c.h.b16 %v654
        %v1344 = vunpack.c.l.b16 %v655
        %v1345 = vunpack.c.h.b16 %v655
        %v1346 = vunpack.c.l.b16 %v656
        %v1347 = vunpack.c.h.b16 %v656
        %v1348 = vunpack.c.l.b16 %v657
        %v1349 = vunpack.c.h.b16 %v657
        %v1350 = vunpack.c.l.b16 %v658
        %v1351 = vunpack.c.h.b16 %v658
        %v1352 = vunpack.c.l.b16 %v659
        %v1353 = vunpack.c.h.b16 %v659
        %v1354 = vunpack.c.l.b16 %v660
        %v1355 = vunpack.c.h.b16 %v660
        %v1356 = vunpack.c.l.b16 %v661
        %v1357 = vunpack.c.h.b16 %v661
        %v1358 = vunpack.c.l.b16 %v662
        %v1359 = vunpack.c.h.b16 %v662
        %v1360 = vunpack.c.l.b16 %v663
        %v1361 = vunpack.c.h.b16 %v663
        %v1362 = vunpack.c.l.b16 %v664
        %v1363 = vunpack.c.h.b16 %v664
        %v1364 = vunpack.c.l.b16 %v665
        %v1365 = vunpack.c.h.b16 %v665
        %v1366 = vunpack.c.l.b16 %v666
        %v1367 = vunpack.c.h.b16 %v666
        %v1368 = vunpack.c.l.b16 %v667
        %v1369 = vunpack.c.h.b16 %v667
        %v1370 = vunpack.c.l.b16 %v668
        %v1371 = vunpack.c.h.b16 %v668
        %v1372 = vunpack.c.l.b16 %v669
        %v1373 = vunpack.c.h.b16 %v669
        %v1374 = vunpack.c.l.b16 %v670
        %v1375 = vunpack.c.h.b16 %v670
        %v1376 = vunpack.c.l.b16 %v671
        %v1377 = vunpack.c.h.b16 %v671
        %v1378 = vunpack.c.l.b16 %v672
        %v1379 = vunpack.c.h.b16 %v672
        %v1380 = vunpack.c.l.b16 %v673
        %v1381 = vunpack.c.h.b16 %v673
        %v1382 = vunpack.c.l.b16 %v674
        %v1383 = vunpack.c.h.b16 %v674
        %v1384 = vunpack.c.l.b16 %v675
        %v1385 = vunpack.c.h.b16 %v675
        %v1386 = vunpack.c.l.b16 %v676
        %v1387 = vunpack.c.h.b16 %v676
        %v1388 = vunpack.c.l.b16 %v677
        %v1389 = vunpack.c.h.b16 %v677
        %v1390 = vunpack.c.l.b16 %v678
        %v1391 = vunpack.c.h.b16 %v678
        %v1392 = vunpack.c.l.b16 %v679
        %v1393 = vunpack.c.h.b16 %v679
        %v1394 = vunpack.c.l.b16 %v680
        %v1395 = vunpack.c.h.b16 %v680
        %v1396 = vunpack.c.l.b16 %v681
        %v1397 = vunpack.c.h.b16 %v681
        %v1398 = vunpack.c.l.b16 %v682
        %v1399 = vunpack.c.h.b16 %v682
        %v1400 = vunpack.c.l.b16 %v683
        %v1401 = vunpack.c.h.b16 %v683
        %v1402 = vunpack.c.l.b16 %v684
        %v1403 = vunpack.c.h.b16 %v684
        %v1404 = vunpack.c.l.b16 %v685
        %v1405 = vunpack.c.h.b16 %v685
        %v1406 = vunpack.c.l.b16 %v686
        %v1407 = vunpack.c.h.b16 %v686
        %v1408 = vunpack.c.l.b16 %v687
        %v1409 = vunpack.c.h.b16 %v687
        %v1410 = vunpack.c.l.b16 %v688
        %v1411 = vunpack.c.h.b16 %v688
        %v1412 = vunpack.c.l.b16 %v689
        %v1413 = vunpack.c.h.b16 %v689
        %v1414 = vunpack.c.l.b16 %v690
        %v1415 = vunpack.c.h.b16 %v690
        %v1416 = vunpack.c.l.b16 %v691
        %v1417 = vunpack.c.h.b16 %v691
        %v1418 = vunpack.c.l.b16 %v692
        %v1419 = vunpack.c.h.b16 %v692
        %v1420 = vunpack.c.l.b16 %v693
        %v1421 = vunpack.c.h.b16 %v693
        %v1422 = vunpack.c.l.b16 %v694
        %v1423 = vunpack.c.h.b16 %v694
        %v1424 = vunpack.c.l.b16 %v695
        %v1425 = vunpack.c.h.b16 %v695
        %v1426 = vunpack.c.l.b16 %v696
        %v1427 = vunpack.c.h.b16 %v696
        %v1428 = vunpack.c.l.b16 %v697
        %v1429 = vunpack.c.h.b16 %v697
        %v1430 = vunpack.c.l.b16 %v698
        %v1431 = vunpack.c.h.b16 %v698
        %v1432 = vunpack.c.l.b16 %v699
        %v1433 = vunpack.c.h.b16 %v699
        %v1434 = vunpack.c.l.b16 %v700
        %v1435 = vunpack.c.h.b16 %v700
        %v1436 = vunpack.c.l.b16 %v701
        %v1437 = vunpack.c.h.b16 %v701
        %v1438 = vunpack.c.l.b16 %v702
        %v1439 = vunpack.c.h.b16 %v702
        %v1440 = vunpack.c.l.b16 %v703
        %v1441 = vunpack.c.h.b16 %v703
        %v1442 = vunpack.c.l.b16 %v704
        %v1443 = vunpack.c.h.b16 %v704
        %v1444 = vunpack.c.l.b16 %v705
        %v1445 = vunpack.c.h.b16 %v705
        %v1446 = vunpack.c.l.b16 %v706
        %v1447 = vunpack.c.h.b16 %v706
        %v1448 = vunpack.c.l.b16 %v707
        %v1449 = vunpack.c.h.b16 %v707
        %v1450 = vunpack.c.l.b16 %v708
        %v1451 = vunpack.c.h.b16 %v708
        %v1452 = vunpack.c.l.b16 %v709
        %v1453 = vunpack.c.h.b16 %v709
        %v1454 = vunpack.c.l.b16 %v710
        %v1455 = vunpack.c.h.b16 %v710
        %v1456 = vunpack.c.l.b16 %v711
        %v1457 = vunpack.c.h.b16 %v711
        %v1458 = vunpack.c.l.b16 %v712
        %v1459 = vunpack.c.h.b16 %v712
        %v1460 = vunpack.c.l.b16 %v713
        %v1461 = vunpack.c.h.b16 %v713
        %v1462 = vunpack.c.l.b16 %v714
        %v1463 = vunpack.c.h.b16 %v714
        %v1464 = vunpack.c.l.b16 %v715
        %v1465 = vunpack.c.h.b16 %v715
        %v1466 = vunpack.c.l.b16 %v716
        %v1467 = vunpack.c.h.b16 %v716
        %v1468 = vunpack.c.l.b16 %v717
        %v1469 = vunpack.c.h.b16 %v717
        %v1470 = vunpack.c.l.b16 %v718
        %v1471 = vunpack.c.h.b16 %v718
        %v1472 = vunpack.c.l.b16 %v719
        %v1473 = vunpack.c.h.b16 %v719
        %v1474 = vunpack.c.l.b16 %v720
        %v1475 = vunpack.c.h.b16 %v720
        %v1476 = vunpack.c.l.b16 %v721
        %v1477 = vunpack.c.h.b16 %v721
        %v1478 = vunpack.c.l.b16 %v722
        %v1479 = vunpack.c.h.b16 %v722
        %v1480 = vunpack.c.l.b16 %v723
        %v1481 = vunpack.c.h.b16 %v723
        %v1482 = vunpack.c.l.b16 %v724
        %v1483 = vunpack.c.h.b16 %v724
        %v1484 = vunpack.c.l.b16 %v725
        %v1485 = vunpack.c.h.b16 %v725
        %v1486 = vunpack.c.l.b16 %v726
        %v1487 = vunpack.c.h.b16 %v726
        %v1488 = vunpack.c.l.b16 %v727
        %v1489 = vunpack.c.h.b16 %v727
        %v1490 = vunpack.c.l.b16 %v728
        %v1491 = vunpack.c.h.b16 %v728
        %v1492 = vunpack.c.l.b16 %v729
        %v1493 = vunpack.c.h.b16 %v729
        %v1494 = vunpack.c.l.b16 %v730
        %v1495 = vunpack.c.h.b16 %v730
        %v1496 = vunpack.c.l.b16 %v731
        %v1497 = vunpack.c.h.b16 %v731
        %v1498 = vunpack.c.l.b16 %v732
        %v1499 = vunpack.c.h.b16 %v732
        %v1500 = vunpack.c.l.b16 %v733
        %v1501 = vunpack.c.h.b16 %v733
        %v1502 = vpack.c.b16 %v998, %v990
        %v1503 = vpack.c.b16 %v999, %v991
        %v1504 = vpack.c.b16 %v1000, %v992
        %v1505 = vpack.c.b16 %v1001, %v993
        %v1506 = vpack.c.b16 %v1002, %v994
        %v1507 = vpack.c.b16 %v1003, %v995
        %v1508 = vpack.c.b16 %v1004, %v996
        %v1509 = vpack.c.b16 %v1005, %v997
        %v1510 = vpack.c.b16 %v1014, %v1006
        %v1511 = vpack.c.b16 %v1015, %v1007
        %v1512 = vpack.c.b16 %v1016, %v1008
        %v1513 = vpack.c.b16 %v1017, %v1009
        %v1514 = vpack.c.b16 %v1018, %v1010
        %v1515 = vpack.c.b16 %v1019, %v1011
        %v1516 = vpack.c.b16 %v1020, %v1012
        %v1517 = vpack.c.b16 %v1021, %v1013
        %v1518 = vpack.c.b16 %v1030, %v1022
        %v1519 = vpack.c.b16 %v1031, %v1023
        %v1520 = vpack.c.b16 %v1032, %v1024
        %v1521 = vpack.c.b16 %v1033, %v1025
        %v1522 = vpack.c.b16 %v1034, %v1026
        %v1523 = vpack.c.b16 %v1035, %v1027
        %v1524 = vpack.c.b16 %v1036, %v1028
        %v1525 = vpack.c.b16 %v1037, %v1029
        %v1526 = vpack.c.b16 %v1046, %v1038
        %v1527 = vpack.c.b16 %v1047, %v1039
        %v1528 = vpack.c.b16 %v1048, %v1040
        %v1529 = vpack.c.b16 %v1049, %v1041
        %v1530 = vpack.c.b16 %v1050, %v1042
        %v1531 = vpack.c.b16 %v1051, %v1043
        %v1532 = vpack.c.b16 %v1052, %v1044
        %v1533 = vpack.c.b16 %v1053, %v1045
        %v1534 = vpack.c.b16 %v1062, %v1054
        %v1535 = vpack.c.b16 %v1063, %v1055
        %v1536 = vpack.c.b16 %v1064, %v1056
        %v1537 = vpack.c.b16 %v1065, %v1057
        %v1538 = vpack.c.b16 %v1066, %v1058
        %v1539 = vpack.c.b16 %v1067, %v1059
        %v1540 = vpack.c.b16 %v1068, %v1060
        %v1541 = vpack.c.b16 %v1069, %v1061
        %v1542 = vpack.c.b16 %v1078, %v1070
        %v1543 = vpack.c.b16 %v1079, %v1071
        %v1544 = vpack.c.b16 %v1080, %v1072
        %v1545 = vpack.c.b16 %v1081, %v1073
        %v1546 = vpack.c.b16 %v1082, %v1074
        %v1547 = vpack.c.b16 %v1083, %v1075
        %v1548 = vpack.c.b16 %v1084, %v1076
        %v1549 = vpack.c.b16 %v1085, %v1077
        %v1550 = vpack.c.b16 %v1094, %v1086
        %v1551 = vpack.c.b16 %v1095, %v1087
        %v1552 = vpack.c.b16 %v1096, %v1088
        %v1553 = vpack.c.b16 %v1097, %v1089
        %v1554 = vpack.c.b16 %v1098, %v1090
        %v1555 = vpack.c.b16 %v1099, %v1091
        %v1556 = vpack.c.b16 %v1100, %v1092
        %v1557 = vpack.c.b16 %v1101, %v1093
        %v1558 = vpack.c.b16 %v1110, %v1102
        %v1559 = vpack.c.b16 %v1111, %v1103
        %v1560 = vpack.c.b16 %v1112, %v1104
        %v1561 = vpack.c.b16 %v1113, %v1105
        %v1562 = vpack.c.b16 %v1114, %v1106
        %v1563 = vpack.c.b16 %v1115, %v1107
        %v1564 = vpack.c.b16 %v1116, %v1108
        %v1565 = vpack.c.b16 %v1117, %v1109
        %v1566 = vpack.c.b16 %v1126, %v1118
        %v1567 = vpack.c.b16 %v1127, %v1119
        %v1568 = vpack.c.b16 %v1128, %v1120
        %v1569 = vpack.c.b16 %v1129, %v1121
        %v1570 = vpack.c.b16 %v1130, %v1122
        %v1571 = vpack.c.b16 %v1131, %v1123
        %v1572 = vpack.c.b16 %v1132, %v1124
        %v1573 = vpack.c.b16 %v1133, %v1125
        %v1574 = vpack.c.b16 %v1142, %v1134
        %v1575 = vpack.c.b16 %v1143, %v1135
        %v1576 = vpack.c.b16 %v1144, %v1136
        %v1577 = vpack.c.b16 %v1145, %v1137
        %v1578 = vpack.c.b16 %v1146, %v1138
        %v1579 = vpack.c.b16 %v1147, %v1139
        %v1580 = vpack.c.b16 %v1148, %v1140
        %v1581 = vpack.c.b16 %v1149, %v1141
        %v1582 = vpack.c.b16 %v1158, %v1150
        %v1583 = vpack.c.b16 %v1159, %v1151
        %v1584 = vpack.c.b16 %v1160, %v1152
        %v1585 = vpack.c.b16 %v1161, %v1153
        %v1586 = vpack.c.b16 %v1162, %v1154
        %v1587 = vpack.c.b16 %v1163, %v1155
        %v1588 = vpack.c.b16 %v1164, %v1156
        %v1589 = vpack.c.b16 %v1165, %v1157
        %v1590 = vpack.c.b16 %v1174, %v1166
        %v1591 = vpack.c.b16 %v1175, %v1167
        %v1592 = vpack.c.b16 %v1176, %v1168
        %v1593 = vpack.c.b16 %v1177, %v1169
        %v1594 = vpack.c.b16 %v1178, %v1170
        %v1595 = vpack.c.b16 %v1179, %v1171
        %v1596 = vpack.c.b16 %v1180, %v1172
        %v1597 = vpack.c.b16 %v1181, %v1173
        %v1598 = vpack.c.b16 %v1190, %v1182
        %v1599 = vpack.c.b16 %v1191, %v1183
        %v1600 = vpack.c.b16 %v1192, %v1184
        %v1601 = vpack.c.b16 %v1193, %v1185
        %v1602 = vpack.c.b16 %v1194, %v1186
        %v1603 = vpack.c.b16 %v1195, %v1187
        %v1604 = vpack.c.b16 %v1196, %v1188
        %v1605 = vpack.c.b16 %v1197, %v1189
        %v1606 = vpack.c.b16 %v1206, %v1198
        %v1607 = vpack.c.b16 %v1207, %v1199
        %v1608 = vpack.c.b16 %v1208, %v1200
        %v1609 = vpack.c.b16 %v1209, %v1201
        %v1610 = vpack.c.b16 %v1210, %v1202
        %v1611 = vpack.c.b16 %v1211, %v1203
        %v1612 = vpack.c.b16 %v1212, %v1204
        %v1613 = vpack.c.b16 %v1213, %v1205
        %v1614 = vpack.c.b16 %v1222, %v1214
        %v1615 = vpack.c.b16 %v1223, %v1215
        %v1616 = vpack.c.b16 %v1224, %v1216
        %v1617 = vpack.c.b16 %v1225, %v1217
        %v1618 = vpack.c.b16 %v1226, %v1218
        %v1619 = vpack.c.b16 %v1227, %v1219
        %v1620 = vpack.c.b16 %v1228, %v1220
        %v1621 = vpack.c.b16 %v1229, %v1221
        %v1622 = vpack.c.b16 %v1238, %v1230
        %v1623 = vpack.c.b16 %v1239, %v1231
        %v1624 = vpack.c.b16 %v1240, %v1232
        %v1625 = vpack.c.b16 %v1241, %v1233
        %v1626 = vpack.c.b16 %v1242, %v1234
        %v1627 = vpack.c.b16 %v1243, %v1235
        %v1628 = vpack.c.b16 %v1244, %v1236
        %v1629 = vpack.c.b16 %v1245, %v1237
        %v1630 = vpack.c.b16 %v1254, %v1246
        %v1631 = vpack.c.b16 %v1255, %v1247
        %v1632 = vpack.c.b16 %v1256, %v1248
        %v1633 = vpack.c.b16 %v1257, %v1249
        %v1634 = vpack.c.b16 %v1258, %v1250
        %v1635 = vpack.c.b16 %v1259, %v1251
        %v1636 = vpack.c.b16 %v1260, %v1252
        %v1637 = vpack.c.b16 %v1261, %v1253
        %v1638 = vpack.c.b16 %v1270, %v1262
        %v1639 = vpack.c.b16 %v1271, %v1263
        %v1640 = vpack.c.b16 %v1272, %v1264
        %v1641 = vpack.c.b16 %v1273, %v1265
        %v1642 = vpack.c.b16 %v1274, %v1266
        %v1643 = vpack.c.b16 %v1275, %v1267
        %v1644 = vpack.c.b16 %v1276, %v1268
        %v1645 = vpack.c.b16 %v1277, %v1269
        %v1646 = vpack.c.b16 %v1286, %v1278
        %v1647 = vpack.c.b16 %v1287, %v1279
        %v1648 = vpack.c.b16 %v1288, %v1280
        %v1649 = vpack.c.b16 %v1289, %v1281
        %v1650 = vpack.c.b16 %v1290, %v1282
        %v1651 = vpack.c.b16 %v1291, %v1283
        %v1652 = vpack.c.b16 %v1292, %v1284
        %v1653 = vpack.c.b16 %v1293, %v1285
        %v1654 = vpack.c.b16 %v1302, %v1294
        %v1655 = vpack.c.b16 %v1303, %v1295
        %v1656 = vpack.c.b16 %v1304, %v1296
        %v1657 = vpack.c.b16 %v1305, %v1297
        %v1658 = vpack.c.b16 %v1306, %v1298
        %v1659 = vpack.c.b16 %v1307, %v1299
        %v1660 = vpack.c.b16 %v1308, %v1300
        %v1661 = vpack.c.b16 %v1309, %v1301
        %v1662 = vpack.c.b16 %v1318, %v1310
        %v1663 = vpack.c.b16 %v1319, %v1311
        %v1664 = vpack.c.b16 %v1320, %v1312
        %v1665 = vpack.c.b16 %v1321, %v1313
        %v1666 = vpack.c.b16 %v1322, %v1314
        %v1667 = vpack.c.b16 %v1323, %v1315
        %v1668 = vpack.c.b16 %v1324, %v1316
        %v1669 = vpack.c.b16 %v1325, %v1317
        %v1670 = vpack.c.b16 %v1334, %v1326
        %v1671 = vpack.c.b16 %v1335, %v1327
        %v1672 = vpack.c.b16 %v1336, %v1328
        %v1673 = vpack.c.b16 %v1337, %v1329
        %v1674 = vpack.c.b16 %v1338, %v1330
        %v1675 = vpack.c.b16 %v1339, %v1331
        %v1676 = vpack.c.b16 %v1340, %v1332
        %v1677 = vpack.c.b16 %v1341, %v1333
        %v1678 = vpack.c.b16 %v1350, %v1342
        %v1679 = vpack.c.b16 %v1351, %v1343
        %v1680 = vpack.c.b16 %v1352, %v1344
        %v1681 = vpack.c.b16 %v1353, %v1345
        %v1682 = vpack.c.b16 %v1354, %v1346
        %v1683 = vpack.c.b16 %v1355, %v1347
        %v1684 = vpack.c.b16 %v1356, %v1348
        %v1685 = vpack.c.b16 %v1357, %v1349
        %v1686 = vpack.c.b16 %v1366, %v1358
        %v1687 = vpack.c.b16 %v1367, %v1359
        %v1688 = vpack.c.b16 %v1368, %v1360
        %v1689 = vpack.c.b16 %v1369, %v1361
        %v1690 = vpack.c.b16 %v1370, %v1362
        %v1691 = vpack.c.b16 %v1371, %v1363
        %v1692 = vpack.c.b16 %v1372, %v1364
        %v1693 = vpack.c.b16 %v1373, %v1365
        %v1694 = vpack.c.b16 %v1382, %v1374
        %v1695 = vpack.c.b16 %v1383, %v1375
        %v1696 = vpack.c.b16 %v1384, %v1376
        %v1697 = vpack.c.b16 %v1385, %v1377
        %v1698 = vpack.c.b16 %v1386, %v1378
        %v1699 = vpack.c.b16 %v1387, %v1379
        %v1700 = vpack.c.b16 %v1388, %v1380
        %v1701 = vpack.c.b16 %v1389, %v1381
        %v1702 = vpack.c.b16 %v1398, %v1390
        %v1703 = vpack.c.b16 %v1399, %v1391
        %v1704 = vpack.c.b16 %v1400, %v1392
        %v1705 = vpack.c.b16 %v1401, %v1393
        %v1706 = vpack.c.b16 %v1402, %v1394
        %v1707 = vpack.c.b16 %v1403, %v1395
        %v1708 = vpack.c.b16 %v1404, %v1396
        %v1709 = vpack.c.b16 %v1405, %v1397
        %v1710 = vpack.c.b16 %v1414, %v1406
        %v1711 = vpack.c.b16 %v1415, %v1407
        %v1712 = vpack.c.b16 %v1416, %v1408
        %v1713 = vpack.c.b16 %v1417, %v1409
        %v1714 = vpack.c.b16 %v1418, %v1410
        %v1715 = vpack.c.b16 %v1419, %v1411
        %v1716 = vpack.c.b16 %v1420, %v1412
        %v1717 = vpack.c.b16 %v1421, %v1413
        %v1718 = vpack.c.b16 %v1430, %v1422
        %v1719 = vpack.c.b16 %v1431, %v1423
        %v1720 = vpack.c.b16 %v1432, %v1424
        %v1721 = vpack.c.b16 %v1433, %v1425
        %v1722 = vpack.c.b16 %v1434, %v1426
        %v1723 = vpack.c.b16 %v1435, %v1427
        %v1724 = vpack.c.b16 %v1436, %v1428
        %v1725 = vpack.c.b16 %v1437, %v1429
        %v1726 = vpack.c.b16 %v1446, %v1438
        %v1727 = vpack.c.b16 %v1447, %v1439
        %v1728 = vpack.c.b16 %v1448, %v1440
        %v1729 = vpack.c.b16 %v1449, %v1441
        %v1730 = vpack.c.b16 %v1450, %v1442
        %v1731 = vpack.c.b16 %v1451, %v1443
        %v1732 = vpack.c.b16 %v1452, %v1444
        %v1733 = vpack.c.b16 %v1453, %v1445
        %v1734 = vpack.c.b16 %v1462, %v1454
        %v1735 = vpack.c.b16 %v1463, %v1455
        %v1736 = vpack.c.b16 %v1464, %v1456
        %v1737 = vpack.c.b16 %v1465, %v1457
        %v1738 = vpack.c.b16 %v1466, %v1458
        %v1739 = vpack.c.b16 %v1467, %v1459
        %v1740 = vpack.c.b16 %v1468, %v1460
        %v1741 = vpack.c.b16 %v1469, %v1461
        %v1742 = vpack.c.b16 %v1478, %v1470
        %v1743 = vpack.c.b16 %v1479, %v1471
        %v1744 = vpack.c.b16 %v1480, %v1472
        %v1745 = vpack.c.b16 %v1481, %v1473
        %v1746 = vpack.c.b16 %v1482, %v1474
        %v1747 = vpack.c.b16 %v1483, %v1475
        %v1748 = vpack.c.b16 %v1484, %v1476
        %v1749 = vpack.c.b16 %v1485, %v1477
        %v1750 = vpack.c.b16 %v1494, %v1486
        %v1751 = vpack.c.b16 %v1495, %v1487
        %v1752 = vpack.c.b16 %v1496, %v1488
        %v1753 = vpack.c.b16 %v1497, %v1489
        %v1754 = vpack.c.b16 %v1498, %v1490
        %v1755 = vpack.c.b16 %v1499, %v1491
        %v1756 = vpack.c.b16 %v1500, %v1492
        %v1757 = vpack.c.b16 %v1501, %v1493
        %2014 = vmatprep.subr.bf16.mxu0 %v1503
        %2015 = vmatpush1.bf16.msra.mxu0 %v1502
        %2016 = vmatprep.subr.bf16.mxu0 %v1511
        %2017 = vmatpush1.bf16.msra.mxu0 %v1510
        %2018 = vmatprep.subr.bf16.mxu0 %v1519
        %2019 = vmatpush1.bf16.msra.mxu0 %v1518
        %2020 = vmatprep.subr.bf16.mxu0 %v1527
        %2021 = vmatpush1.bf16.msra.mxu0 %v1526
        %2022 = vmatprep.subr.bf16.mxu0 %v1535
        %2023 = vmatpush1.bf16.msra.mxu0 %v1534
        %2024 = vmatprep.subr.bf16.mxu0 %v1543
        %2025 = vmatpush1.bf16.msra.mxu0 %v1542
        %2026 = vmatprep.subr.bf16.mxu0 %v1551
        %2027 = vmatpush1.bf16.msra.mxu0 %v1550
        %2028 = vmatprep.subr.bf16.mxu0 %v1559
        %2029 = vmatpush1.bf16.msra.mxu0 %v1558
        %2030 = vmatprep.subr.bf16.mxu0 %v1567
        %2031 = vmatpush1.bf16.msra.mxu0 %v1566
        %2032 = vmatprep.subr.bf16.mxu0 %v1575
        %2033 = vmatpush1.bf16.msra.mxu0 %v1574
        %2034 = vmatprep.subr.bf16.mxu0 %v1583
        %2035 = vmatpush1.bf16.msra.mxu0 %v1582
        %2036 = vmatprep.subr.bf16.mxu0 %v1591
        %2037 = vmatpush1.bf16.msra.mxu0 %v1590
        %2038 = vmatprep.subr.bf16.mxu0 %v1599
        %2039 = vmatpush1.bf16.msra.mxu0 %v1598
        %2040 = vmatprep.subr.bf16.mxu0 %v1607
        %2041 = vmatpush1.bf16.msra.mxu0 %v1606
        %2042 = vmatprep.subr.bf16.mxu0 %v1615
        %2043 = vmatpush1.bf16.msra.mxu0 %v1614
        %2044 = vmatprep.subr.bf16.mxu0 %v1623
        %2045 = vmatpush1.bf16.msra.mxu0 %v1622
        %2046 = vmatprep.mubr.bf16.mxu0 %v475
        %2047 = vmatmul.mubr.bf16.gmra.mrb[0].mxu0 %v474
        %v2048 = vpop.f32.mrb[0].mxu0
        %v2049 = vadd.f32 0.0, %v2048
        %v2050 = vpop.f32.mrb[0].mxu0
        %v2051 = vadd.f32 0.0, %v2050
        %v2052 = vpop.f32.mrb[0].mxu0
        %v2053 = vpop.f32.mrb[0].mxu0
        %2054 = vdwg.mxu0
        %2055 = vmatprep.subr.bf16.mxu0 %v1631
        %2056 = vmatpush1.bf16.msra.mxu0 %v1630
        %2057 = vmatprep.subr.bf16.mxu0 %v1639
        %2058 = vmatpush1.bf16.msra.mxu0 %v1638
        %2059 = vmatprep.subr.bf16.mxu0 %v1647
        %2060 = vmatpush1.bf16.msra.mxu0 %v1646
        %2061 = vmatprep.subr.bf16.mxu0 %v1655
        %2062 = vmatpush1.bf16.msra.mxu0 %v1654
        %2063 = vmatprep.subr.bf16.mxu0 %v1663
        %2064 = vmatpush1.bf16.msra.mxu0 %v1662
        %2065 = vmatprep.subr.bf16.mxu0 %v1671
        %2066 = vmatpush1.bf16.msra.mxu0 %v1670
        %2067 = vmatprep.subr.bf16.mxu0 %v1679
        %2068 = vmatpush1.bf16.msra.mxu0 %v1678
        %2069 = vmatprep.subr.bf16.mxu0 %v1687
        %2070 = vmatpush1.bf16.msra.mxu0 %v1686
        %2071 = vmatprep.subr.bf16.mxu0 %v1695
        %2072 = vmatpush1.bf16.msra.mxu0 %v1694
        %2073 = vmatprep.subr.bf16.mxu0 %v1703
        %2074 = vmatpush1.bf16.msra.mxu0 %v1702
        %2075 = vmatprep.subr.bf16.mxu0 %v1711
        %2076 = vmatpush1.bf16.msra.mxu0 %v1710
        %2077 = vmatprep.subr.bf16.mxu0 %v1719
        %2078 = vmatpush1.bf16.msra.mxu0 %v1718
        %2079 = vmatprep.subr.bf16.mxu0 %v1727
        %2080 = vmatpush1.bf16.msra.mxu0 %v1726
        %2081 = vmatprep.subr.bf16.mxu0 %v1735
        %2082 = vmatpush1.bf16.msra.mxu0 %v1734
        %2083 = vmatprep.subr.bf16.mxu0 %v1743
        %2084 = vmatpush1.bf16.msra.mxu0 %v1742
        %2085 = vmatprep.subr.bf16.mxu0 %v1751
        %2086 = vmatpush1.bf16.msra.mxu0 %v1750
        %2087 = vmatprep.mubr.bf16.mxu0 %v477
        %2088 = vmatmul.mubr.bf16.gmra.mrb[0].mxu0 %v476
        %v2089 = vpop.f32.mrb[0].mxu0
        %v2090 = vadd.f32 %v2049, %v2089
        %v2091 = vpop.f32.mrb[0].mxu0
        %v2092 = vadd.f32 %v2051, %v2091
        %v2093 = vpop.f32.mrb[0].mxu0
        %v2094 = vpop.f32.mrb[0].mxu0
        %2095 = vdwg.mxu0
        %2096 = vmatprep.subr.bf16.mxu0 %v1505
        %2097 = vmatpush1.bf16.msra.mxu0 %v1504
        %2098 = vmatprep.subr.bf16.mxu0 %v1513
        %2099 = vmatpush1.bf16.msra.mxu0 %v1512
        %2100 = vmatprep.subr.bf16.mxu0 %v1521
        %2101 = vmatpush1.bf16.msra.mxu0 %v1520
        %2102 = vmatprep.subr.bf16.mxu0 %v1529
        %2103 = vmatpush1.bf16.msra.mxu0 %v1528
        %2104 = vmatprep.subr.bf16.mxu0 %v1537
        %2105 = vmatpush1.bf16.msra.mxu0 %v1536
        %2106 = vmatprep.subr.bf16.mxu0 %v1545
        %2107 = vmatpush1.bf16.msra.mxu0 %v1544
        %2108 = vmatprep.subr.bf16.mxu0 %v1553
        %2109 = vmatpush1.bf16.msra.mxu0 %v1552
        %2110 = vmatprep.subr.bf16.mxu0 %v1561
        %2111 = vmatpush1.bf16.msra.mxu0 %v1560
        %2112 = vmatprep.subr.bf16.mxu0 %v1569
        %2113 = vmatpush1.bf16.msra.mxu0 %v1568
        %2114 = vmatprep.subr.bf16.mxu0 %v1577
        %2115 = vmatpush1.bf16.msra.mxu0 %v1576
        %2116 = vmatprep.subr.bf16.mxu0 %v1585
        %2117 = vmatpush1.bf16.msra.mxu0 %v1584
        %2118 = vmatprep.subr.bf16.mxu0 %v1593
        %2119 = vmatpush1.bf16.msra.mxu0 %v1592
        %2120 = vmatprep.subr.bf16.mxu0 %v1601
        %2121 = vmatpush1.bf16.msra.mxu0 %v1600
        %2122 = vmatprep.subr.bf16.mxu0 %v1609
        %2123 = vmatpush1.bf16.msra.mxu0 %v1608
        %2124 = vmatprep.subr.bf16.mxu0 %v1617
        %2125 = vmatpush1.bf16.msra.mxu0 %v1616
        %2126 = vmatprep.subr.bf16.mxu0 %v1625
        %2127 = vmatpush1.bf16.msra.mxu0 %v1624
        %2128 = vmatprep.mubr.bf16.mxu0 %v475
        %2129 = vmatmul.mubr.bf16.gmra.mrb[0].mxu0 %v474
        %v2130 = vpop.f32.mrb[0].mxu0
        %v2131 = vadd.f32 0.0, %v2130
        %v2132 = vpop.f32.mrb[0].mxu0
        %v2133 = vadd.f32 0.0, %v2132
        %v2134 = vpop.f32.mrb[0].mxu0
        %v2135 = vpop.f32.mrb[0].mxu0
        %2136 = vdwg.mxu0
        %2137 = vmatprep.subr.bf16.mxu0 %v1633
        %2138 = vmatpush1.bf16.msra.mxu0 %v1632
        %2139 = vmatprep.subr.bf16.mxu0 %v1641
        %2140 = vmatpush1.bf16.msra.mxu0 %v1640
        %2141 = vmatprep.subr.bf16.mxu0 %v1649
        %2142 = vmatpush1.bf16.msra.mxu0 %v1648
        %2143 = vmatprep.subr.bf16.mxu0 %v1657
        %2144 = vmatpush1.bf16.msra.mxu0 %v1656
        %2145 = vmatprep.subr.bf16.mxu0 %v1665
        %2146 = vmatpush1.bf16.msra.mxu0 %v1664
        %2147 = vmatprep.subr.bf16.mxu0 %v1673
        %2148 = vmatpush1.bf16.msra.mxu0 %v1672
        %2149 = vmatprep.subr.bf16.mxu0 %v1681
        %2150 = vmatpush1.bf16.msra.mxu0 %v1680
        %2151 = vmatprep.subr.bf16.mxu0 %v1689
        %2152 = vmatpush1.bf16.msra.mxu0 %v1688
        %2153 = vmatprep.subr.bf16.mxu0 %v1697
        %2154 = vmatpush1.bf16.msra.mxu0 %v1696
        %2155 = vmatprep.subr.bf16.mxu0 %v1705
        %2156 = vmatpush1.bf16.msra.mxu0 %v1704
        %2157 = vmatprep.subr.bf16.mxu0 %v1713
        %2158 = vmatpush1.bf16.msra.mxu0 %v1712
        %2159 = vmatprep.subr.bf16.mxu0 %v1721
        %2160 = vmatpush1.bf16.msra.mxu0 %v1720
        %2161 = vmatprep.subr.bf16.mxu0 %v1729
        %2162 = vmatpush1.bf16.msra.mxu0 %v1728
        %2163 = vmatprep.subr.bf16.mxu0 %v1737
        %2164 = vmatpush1.bf16.msra.mxu0 %v1736
        %2165 = vmatprep.subr.bf16.mxu0 %v1745
        %2166 = vmatpush1.bf16.msra.mxu0 %v1744
        %2167 = vmatprep.subr.bf16.mxu0 %v1753
        %2168 = vmatpush1.bf16.msra.mxu0 %v1752
        %2169 = vmatprep.mubr.bf16.mxu0 %v477
        %2170 = vmatmul.mubr.bf16.gmra.mrb[0].mxu0 %v476
        %v2171 = vpop.f32.mrb[0].mxu0
        %v2172 = vadd.f32 %v2131, %v2171
        %v2173 = vpop.f32.mrb[0].mxu0
        %v2174 = vadd.f32 %v2133, %v2173
        %v2175 = vpop.f32.mrb[0].mxu0
        %v2176 = vpop.f32.mrb[0].mxu0
        %2177 = vdwg.mxu0
        %2178 = vmatprep.subr.bf16.mxu0 %v1507
        %2179 = vmatpush1.bf16.msra.mxu0 %v1506
        %2180 = vmatprep.subr.bf16.mxu0 %v1515
        %2181 = vmatpush1.bf16.msra.mxu0 %v1514
        %2182 = vmatprep.subr.bf16.mxu0 %v1523
        %2183 = vmatpush1.bf16.msra.mxu0 %v1522
        %2184 = vmatprep.subr.bf16.mxu0 %v1531
        %2185 = vmatpush1.bf16.msra.mxu0 %v1530
        %2186 = vmatprep.subr.bf16.mxu0 %v1539
        %2187 = vmatpush1.bf16.msra.mxu0 %v1538
        %2188 = vmatprep.subr.bf16.mxu0 %v1547
        %2189 = vmatpush1.bf16.msra.mxu0 %v1546
        %2190 = vmatprep.subr.bf16.mxu0 %v1555
        %2191 = vmatpush1.bf16.msra.mxu0 %v1554
        %2192 = vmatprep.subr.bf16.mxu0 %v1563
        %2193 = vmatpush1.bf16.msra.mxu0 %v1562
        %2194 = vmatprep.subr.bf16.mxu0 %v1571
        %2195 = vmatpush1.bf16.msra.mxu0 %v1570
        %2196 = vmatprep.subr.bf16.mxu0 %v1579
        %2197 = vmatpush1.bf16.msra.mxu0 %v1578
        %2198 = vmatprep.subr.bf16.mxu0 %v1587
        %2199 = vmatpush1.bf16.msra.mxu0 %v1586
        %2200 = vmatprep.subr.bf16.mxu0 %v1595
        %2201 = vmatpush1.bf16.msra.mxu0 %v1594
        %2202 = vmatprep.subr.bf16.mxu0 %v1603
        %2203 = vmatpush1.bf16.msra.mxu0 %v1602
        %2204 = vmatprep.subr.bf16.mxu0 %v1611
        %2205 = vmatpush1.bf16.msra.mxu0 %v1610
        %2206 = vmatprep.subr.bf16.mxu0 %v1619
        %2207 = vmatpush1.bf16.msra.mxu0 %v1618
        %2208 = vmatprep.subr.bf16.mxu0 %v1627
        %2209 = vmatpush1.bf16.msra.mxu0 %v1626
        %2210 = vmatprep.mubr.bf16.mxu0 %v475
        %2211 = vmatmul.mubr.bf16.gmra.mrb[0].mxu0 %v474
        %v2212 = vpop.f32.mrb[0].mxu0
        %v2213 = vadd.f32 0.0, %v2212
        %v2214 = vpop.f32.mrb[0].mxu0
        %v2215 = vadd.f32 0.0, %v2214
        %v2216 = vpop.f32.mrb[0].mxu0
        %v2217 = vpop.f32.mrb[0].mxu0
        %2218 = vdwg.mxu0
        %2219 = vmatprep.subr.bf16.mxu0 %v1635
        %2220 = vmatpush1.bf16.msra.mxu0 %v1634
        %2221 = vmatprep.subr.bf16.mxu0 %v1643
        %2222 = vmatpush1.bf16.msra.mxu0 %v1642
        %2223 = vmatprep.subr.bf16.mxu0 %v1651
        %2224 = vmatpush1.bf16.msra.mxu0 %v1650
        %2225 = vmatprep.subr.bf16.mxu0 %v1659
        %2226 = vmatpush1.bf16.msra.mxu0 %v1658
        %2227 = vmatprep.subr.bf16.mxu0 %v1667
        %2228 = vmatpush1.bf16.msra.mxu0 %v1666
        %2229 = vmatprep.subr.bf16.mxu0 %v1675
        %2230 = vmatpush1.bf16.msra.mxu0 %v1674
        %2231 = vmatprep.subr.bf16.mxu0 %v1683
        %2232 = vmatpush1.bf16.msra.mxu0 %v1682
        %2233 = vmatprep.subr.bf16.mxu0 %v1691
        %2234 = vmatpush1.bf16.msra.mxu0 %v1690
        %2235 = vmatprep.subr.bf16.mxu0 %v1699
        %2236 = vmatpush1.bf16.msra.mxu0 %v1698
        %2237 = vmatprep.subr.bf16.mxu0 %v1707
        %2238 = vmatpush1.bf16.msra.mxu0 %v1706
        %2239 = vmatprep.subr.bf16.mxu0 %v1715
        %2240 = vmatpush1.bf16.msra.mxu0 %v1714
        %2241 = vmatprep.subr.bf16.mxu0 %v1723
        %2242 = vmatpush1.bf16.msra.mxu0 %v1722
        %2243 = vmatprep.subr.bf16.mxu0 %v1731
        %2244 = vmatpush1.bf16.msra.mxu0 %v1730
        %2245 = vmatprep.subr.bf16.mxu0 %v1739
        %2246 = vmatpush1.bf16.msra.mxu0 %v1738
        %2247 = vmatprep.subr.bf16.mxu0 %v1747
        %2248 = vmatpush1.bf16.msra.mxu0 %v1746
        %2249 = vmatprep.subr.bf16.mxu0 %v1755
        %2250 = vmatpush1.bf16.msra.mxu0 %v1754
        %2251 = vmatprep.mubr.bf16.mxu0 %v477
        %2252 = vmatmul.mubr.bf16.gmra.mrb[0].mxu0 %v476
        %v2253 = vpop.f32.mrb[0].mxu0
        %v2254 = vadd.f32 %v2213, %v2253
        %v2255 = vpop.f32.mrb[0].mxu0
        %v2256 = vadd.f32 %v2215, %v2255
        %v2257 = vpop.f32.mrb[0].mxu0
        %v2258 = vpop.f32.mrb[0].mxu0
        %2259 = vdwg.mxu0
        %2260 = vmatprep.subr.bf16.mxu0 %v1509
        %2261 = vmatpush1.bf16.msra.mxu0 %v1508
        %2262 = vmatprep.subr.bf16.mxu0 %v1517
        %2263 = vmatpush1.bf16.msra.mxu0 %v1516
        %2264 = vmatprep.subr.bf16.mxu0 %v1525
        %2265 = vmatpush1.bf16.msra.mxu0 %v1524
        %2266 = vmatprep.subr.bf16.mxu0 %v1533
        %2267 = vmatpush1.bf16.msra.mxu0 %v1532
        %2268 = vmatprep.subr.bf16.mxu0 %v1541
        %2269 = vmatpush1.bf16.msra.mxu0 %v1540
        %2270 = vmatprep.subr.bf16.mxu0 %v1549
        %2271 = vmatpush1.bf16.msra.mxu0 %v1548
        %2272 = vmatprep.subr.bf16.mxu0 %v1557
        %2273 = vmatpush1.bf16.msra.mxu0 %v1556
        %2274 = vmatprep.subr.bf16.mxu0 %v1565
        %2275 = vmatpush1.bf16.msra.mxu0 %v1564
        %2276 = vmatprep.subr.bf16.mxu0 %v1573
        %2277 = vmatpush1.bf16.msra.mxu0 %v1572
        %2278 = vmatprep.subr.bf16.mxu0 %v1581
        %2279 = vmatpush1.bf16.msra.mxu0 %v1580
        %2280 = vmatprep.subr.bf16.mxu0 %v1589
        %2281 = vmatpush1.bf16.msra.mxu0 %v1588
        %2282 = vmatprep.subr.bf16.mxu0 %v1597
        %2283 = vmatpush1.bf16.msra.mxu0 %v1596
        %2284 = vmatprep.subr.bf16.mxu0 %v1605
        %2285 = vmatpush1.bf16.msra.mxu0 %v1604
        %2286 = vmatprep.subr.bf16.mxu0 %v1613
        %2287 = vmatpush1.bf16.msra.mxu0 %v1612
        %2288 = vmatprep.subr.bf16.mxu0 %v1621
        %2289 = vmatpush1.bf16.msra.mxu0 %v1620
        %2290 = vmatprep.subr.bf16.mxu0 %v1629
        %2291 = vmatpush1.bf16.msra.mxu0 %v1628
        %2292 = vmatprep.mubr.bf16.mxu0 %v475
        %2293 = vmatmul.mubr.bf16.gmra.mrb[0].mxu0 %v474
        %v2294 = vpop.f32.mrb[0].mxu0
        %v2295 = vadd.f32 0.0, %v2294
        %v2296 = vpop.f32.mrb[0].mxu0
        %v2297 = vadd.f32 0.0, %v2296
        %v2298 = vpop.f32.mrb[0].mxu0
        %v2299 = vpop.f32.mrb[0].mxu0
        %2300 = vdwg.mxu0
        %2301 = vmatprep.subr.bf16.mxu0 %v1637
        %2302 = vmatpush1.bf16.msra.mxu0 %v1636
        %2303 = vmatprep.subr.bf16.mxu0 %v1645
        %2304 = vmatpush1.bf16.msra.mxu0 %v1644
        %2305 = vmatprep.subr.bf16.mxu0 %v1653
        %2306 = vmatpush1.bf16.msra.mxu0 %v1652
        %2307 = vmatprep.subr.bf16.mxu0 %v1661
        %2308 = vmatpush1.bf16.msra.mxu0 %v1660
        %2309 = vmatprep.subr.bf16.mxu0 %v1669
        %2310 = vmatpush1.bf16.msra.mxu0 %v1668
        %2311 = vmatprep.subr.bf16.mxu0 %v1677
        %2312 = vmatpush1.bf16.msra.mxu0 %v1676
        %2313 = vmatprep.subr.bf16.mxu0 %v1685
        %2314 = vmatpush1.bf16.msra.mxu0 %v1684
        %2315 = vmatprep.subr.bf16.mxu0 %v1693
        %2316 = vmatpush1.bf16.msra.mxu0 %v1692
        %2317 = vmatprep.subr.bf16.mxu0 %v1701
        %2318 = vmatpush1.bf16.msra.mxu0 %v1700
        %2319 = vmatprep.subr.bf16.mxu0 %v1709
        %2320 = vmatpush1.bf16.msra.mxu0 %v1708
        %2321 = vmatprep.subr.bf16.mxu0 %v1717
        %2322 = vmatpush1.bf16.msra.mxu0 %v1716
        %2323 = vmatprep.subr.bf16.mxu0 %v1725
        %2324 = vmatpush1.bf16.msra.mxu0 %v1724
        %2325 = vmatprep.subr.bf16.mxu0 %v1733
        %2326 = vmatpush1.bf16.msra.mxu0 %v1732
        %2327 = vmatprep.subr.bf16.mxu0 %v1741
        %2328 = vmatpush1.bf16.msra.mxu0 %v1740
        %2329 = vmatprep.subr.bf16.mxu0 %v1749
        %2330 = vmatpush1.bf16.msra.mxu0 %v1748
        %2331 = vmatprep.subr.bf16.mxu0 %v1757
        %2332 = vmatpush1.bf16.msra.mxu0 %v1756
        %2333 = vmatprep.mubr.bf16.mxu0 %v477
        %2334 = vmatmul.mubr.bf16.gmra.mrb[0].mxu0 %v476
        %v2335 = vpop.f32.mrb[0].mxu0
        %v2336 = vadd.f32 %v2295, %v2335
        %v2337 = vpop.f32.mrb[0].mxu0
        %v2338 = vadd.f32 %v2297, %v2337
        %v2339 = vpop.f32.mrb[0].mxu0
        %v2340 = vpop.f32.mrb[0].mxu0
        %2341 = vdwg.mxu0
        %v2350 = vcombine.low %v2090, %v2092
        %v2351 = vcombine.low %v2172, %v2174
        %v2353 = vunpack.c.l.s4 1983009808
        %v2354 = vunpack.c.0.s8 %v2353
        %v2355 = vlaneseq
        %v2356 = vshrl.u32 %v2355, 7
        %v2357 = vsub.s32 %v2354, %v2356
        %v2358 = vrot.slane %v2350, %v2357
        %v2360 = vunpack.c.l.s4 1983009808
        %v2361 = vunpack.c.0.s8 %v2360
        %v2362 = vlaneseq
        %v2363 = vshrl.u32 %v2362, 7
        %v2364 = vsub.s32 %v2361, %v2363
        %v2365 = vrot.slane %v2351, %v2364
        %v2366 = vcombine.low %v2358, %v2365
        %v2367 = vcombine.low %v2254, %v2256
        %v2368 = vcombine.low %v2336, %v2338
        %v2370 = vunpack.c.l.s4 1983009808
        %v2371 = vunpack.c.0.s8 %v2370
        %v2372 = vlaneseq
        %v2373 = vshrl.u32 %v2372, 7
        %v2374 = vsub.s32 %v2371, %v2373
        %v2375 = vrot.slane %v2367, %v2374
        %v2377 = vunpack.c.l.s4 1983009808
        %v2378 = vunpack.c.0.s8 %v2377
        %v2379 = vlaneseq
        %v2380 = vshrl.u32 %v2379, 7
        %v2381 = vsub.s32 %v2378, %v2380
        %v2382 = vrot.slane %v2368, %v2381
        %v2383 = vcombine.low %v2375, %v2382
        %v2386 = vadd.f32 %v449, %v2366
        %v2387 = vadd.f32 %v450, %v2383
        %2388 = vst [vmem:[#allocation2] sm:$0xff] %v2386
        %2389 = vst [vmem:[#allocation2 + $0x8] sm:$0xff] %v2387
        %p2390 = scmp.eq.s32.totalorder %s27, 5
        // Predicated region
        $region89: #{big_linear_forward.1} parent=55 // pred_check
          %p2391 = pneg %p2390
        $region90: #{big_linear_forward.1} parent=55 // pred_check_branch
          %2393 = sbr.rel (%p2391) target = $region92
        $region91: #{big_linear_forward.1} parent=55 // pred_region
          %v2394 = vld [vmem:[#allocation2] sm:$0xff]
          %v2395 = vld [vmem:[#allocation2 + $0x8] sm:$0xff]
          %v2396 = vld [vmem:[#allocation6] sm:$0xff]
          %v2398 = vlaneseq
          %v2399 = vshrl.u32 %v2398, 7
          %v2400 = vsub.s32 0, %v2399
          %v2401 = vrot.slane %v2396, %v2400
          %v2402 = vlaneseq
          %v2403 = vshrl.u32 %v2402, 7
          %v2404 = vsub.s32 1, %v2403
          %v2405 = vrot.slane %v2396, %v2404
          %v2406 = vlaneseq
          %v2407 = vshrl.u32 %v2406, 7
          %v2408 = vsub.s32 2, %v2407
          %v2409 = vrot.slane %v2396, %v2408
          %v2410 = vlaneseq
          %v2411 = vshrl.u32 %v2410, 7
          %v2412 = vsub.s32 3, %v2411
          %v2413 = vrot.slane %v2396, %v2412
          %v2414 = vlaneseq
          %v2415 = vshrl.u32 %v2414, 7
          %v2416 = vsub.s32 4, %v2415
          %v2417 = vrot.slane %v2396, %v2416
          %v2418 = vlaneseq
          %v2419 = vshrl.u32 %v2418, 7
          %v2420 = vsub.s32 5, %v2419
          %v2421 = vrot.slane %v2396, %v2420
          %v2422 = vlaneseq
          %v2423 = vshrl.u32 %v2422, 7
          %v2424 = vsub.s32 6, %v2423
          %v2425 = vrot.slane %v2396, %v2424
          %v2426 = vlaneseq
          %v2427 = vshrl.u32 %v2426, 7
          %v2428 = vsub.s32 7, %v2427
          %v2429 = vrot.slane %v2396, %v2428
          %v2430 = vcombine.low %v2401, %v2405
          %v2431 = vcombine.low %v2409, %v2413
          %v2433 = vunpack.c.l.s4 1983009808
          %v2434 = vunpack.c.0.s8 %v2433
          %v2435 = vlaneseq
          %v2436 = vshrl.u32 %v2435, 7
          %v2437 = vsub.s32 %v2434, %v2436
          %v2438 = vrot.slane %v2430, %v2437
          %v2440 = vunpack.c.l.s4 1983009808
          %v2441 = vunpack.c.0.s8 %v2440
          %v2442 = vlaneseq
          %v2443 = vshrl.u32 %v2442, 7
          %v2444 = vsub.s32 %v2441, %v2443
          %v2445 = vrot.slane %v2431, %v2444
          %v2446 = vcombine.low %v2438, %v2445
          %v2447 = vcombine.low %v2417, %v2421
          %v2448 = vcombine.low %v2425, %v2429
          %v2450 = vunpack.c.l.s4 1983009808
          %v2451 = vunpack.c.0.s8 %v2450
          %v2452 = vlaneseq
          %v2453 = vshrl.u32 %v2452, 7
          %v2454 = vsub.s32 %v2451, %v2453
          %v2455 = vrot.slane %v2447, %v2454
          %v2457 = vunpack.c.l.s4 1983009808
          %v2458 = vunpack.c.0.s8 %v2457
          %v2459 = vlaneseq
          %v2460 = vshrl.u32 %v2459, 7
          %v2461 = vsub.s32 %v2458, %v2460
          %v2462 = vrot.slane %v2448, %v2461
          %v2463 = vcombine.low %v2455, %v2462
          %v2466 = vadd.f32 %v2394, %v2446
          %v2467 = vadd.f32 %v2395, %v2463
          %v2468 = vmax.f32 %v2466, 0.0
          %v2469 = vmax.f32 %v2467, 0.0
          %v2472 = vcombine.high %v2468, %v2468
          %v2474 = vunpack.c.l.s4 1983009808
          %v2475 = vunpack.c.0.s8 %v2474
          %v2476 = vlaneseq
          %v2477 = vshrl.u32 %v2476, 7
          %v2478 = vsub.s32 %v2475, %v2477
          %v2479 = vrot.slane %v2468, %v2478
          %v2481 = vunpack.c.l.s4 1983009808
          %v2482 = vunpack.c.0.s8 %v2481
          %v2483 = vlaneseq
          %v2484 = vshrl.u32 %v2483, 7
          %v2485 = vsub.s32 %v2482, %v2484
          %v2486 = vrot.slane %v2472, %v2485
          %v2487 = vcombine.high %v2479, %v2479
          %v2488 = vcombine.high %v2486, %v2486
          %v2489 = vcombine.high %v2469, %v2469
          %v2491 = vunpack.c.l.s4 1983009808
          %v2492 = vunpack.c.0.s8 %v2491
          %v2493 = vlaneseq
          %v2494 = vshrl.u32 %v2493, 7
          %v2495 = vsub.s32 %v2492, %v2494
          %v2496 = vrot.slane %v2469, %v2495
          %v2498 = vunpack.c.l.s4 1983009808
          %v2499 = vunpack.c.0.s8 %v2498
          %v2500 = vlaneseq
          %v2501 = vshrl.u32 %v2500, 7
          %v2502 = vsub.s32 %v2499, %v2501
          %v2503 = vrot.slane %v2489, %v2502
          %v2504 = vcombine.high %v2496, %v2496
          %v2505 = vcombine.high %v2503, %v2503
          %v2514 = vpack.c.bf16 %v2479, %v2479
          %v2515 = vpack.c.bf16 %v2487, %v2487
          %v2516 = vpack.c.bf16 %v2486, %v2486
          %v2517 = vpack.c.bf16 %v2488, %v2488
          %v2518 = vpack.c.bf16 %v2496, %v2496
          %v2519 = vpack.c.bf16 %v2504, %v2504
          %v2520 = vpack.c.bf16 %v2503, %v2503
          %v2521 = vpack.c.bf16 %v2505, %v2505
          %v2522 = vld [vmem:[#allocation8] sm:$0xff]
          %v2523 = vld [vmem:[#allocation8 + $0x8] sm:$0xff]
          %v2524 = vld [vmem:[#allocation8 + $0x10] sm:$0xff]
          %v2525 = vld [vmem:[#allocation8 + $0x18] sm:$0xff]
          %v2526 = vld [vmem:[#allocation8 + $0x20] sm:$0xff]
          %v2527 = vld [vmem:[#allocation8 + $0x28] sm:$0xff]
          %v2528 = vld [vmem:[#allocation8 + $0x30] sm:$0xff]
          %v2529 = vld [vmem:[#allocation8 + $0x38] sm:$0xff]
          %v2530 = vld [vmem:[#allocation8 + $0x40] sm:$0xff]
          %v2531 = vld [vmem:[#allocation8 + $0x48] sm:$0xff]
          %v2532 = vld [vmem:[#allocation8 + $0x50] sm:$0xff]
          %v2533 = vld [vmem:[#allocation8 + $0x58] sm:$0xff]
          %v2534 = vld [vmem:[#allocation8 + $0x60] sm:$0xff]
          %v2535 = vld [vmem:[#allocation8 + $0x68] sm:$0xff]
          %v2536 = vld [vmem:[#allocation8 + $0x70] sm:$0xff]
          %v2537 = vld [vmem:[#allocation8 + $0x78] sm:$0xff]
          %v2538 = vld [vmem:[#allocation8 + $0x80] sm:$0xff]
          %v2539 = vld [vmem:[#allocation8 + $0x88] sm:$0xff]
          %v2540 = vld [vmem:[#allocation8 + $0x90] sm:$0xff]
          %v2541 = vld [vmem:[#allocation8 + $0x98] sm:$0xff]
          %v2542 = vld [vmem:[#allocation8 + $0xa0] sm:$0xff]
          %v2543 = vld [vmem:[#allocation8 + $0xa8] sm:$0xff]
          %v2544 = vld [vmem:[#allocation8 + $0xb0] sm:$0xff]
          %v2545 = vld [vmem:[#allocation8 + $0xb8] sm:$0xff]
          %v2546 = vld [vmem:[#allocation8 + $0xc0] sm:$0xff]
          %v2547 = vld [vmem:[#allocation8 + $0xc8] sm:$0xff]
          %v2548 = vld [vmem:[#allocation8 + $0xd0] sm:$0xff]
          %v2549 = vld [vmem:[#allocation8 + $0xd8] sm:$0xff]
          %v2550 = vld [vmem:[#allocation8 + $0xe0] sm:$0xff]
          %v2551 = vld [vmem:[#allocation8 + $0xe8] sm:$0xff]
          %v2552 = vld [vmem:[#allocation8 + $0xf0] sm:$0xff]
          %v2553 = vld [vmem:[#allocation8 + $0xf8] sm:$0xff]
          %v2554 = vld [vmem:[#allocation8 + $0x100] sm:$0xff]
          %v2555 = vld [vmem:[#allocation8 + $0x108] sm:$0xff]
          %v2556 = vld [vmem:[#allocation8 + $0x110] sm:$0xff]
          %v2557 = vld [vmem:[#allocation8 + $0x118] sm:$0xff]
          %v2558 = vld [vmem:[#allocation8 + $0x120] sm:$0xff]
          %v2559 = vld [vmem:[#allocation8 + $0x128] sm:$0xff]
          %v2560 = vld [vmem:[#allocation8 + $0x130] sm:$0xff]
          %v2561 = vld [vmem:[#allocation8 + $0x138] sm:$0xff]
          %v2562 = vld [vmem:[#allocation8 + $0x140] sm:$0xff]
          %v2563 = vld [vmem:[#allocation8 + $0x148] sm:$0xff]
          %v2564 = vld [vmem:[#allocation8 + $0x150] sm:$0xff]
          %v2565 = vld [vmem:[#allocation8 + $0x158] sm:$0xff]
          %v2566 = vld [vmem:[#allocation8 + $0x160] sm:$0xff]
          %v2567 = vld [vmem:[#allocation8 + $0x168] sm:$0xff]
          %v2568 = vld [vmem:[#allocation8 + $0x170] sm:$0xff]
          %v2569 = vld [vmem:[#allocation8 + $0x178] sm:$0xff]
          %v2570 = vld [vmem:[#allocation8 + $0x180] sm:$0xff]
          %v2571 = vld [vmem:[#allocation8 + $0x188] sm:$0xff]
          %v2572 = vld [vmem:[#allocation8 + $0x190] sm:$0xff]
          %v2573 = vld [vmem:[#allocation8 + $0x198] sm:$0xff]
          %v2574 = vld [vmem:[#allocation8 + $0x1a0] sm:$0xff]
          %v2575 = vld [vmem:[#allocation8 + $0x1a8] sm:$0xff]
          %v2576 = vld [vmem:[#allocation8 + $0x1b0] sm:$0xff]
          %v2577 = vld [vmem:[#allocation8 + $0x1b8] sm:$0xff]
          %v2578 = vld [vmem:[#allocation8 + $0x1c0] sm:$0xff]
          %v2579 = vld [vmem:[#allocation8 + $0x1c8] sm:$0xff]
          %v2580 = vld [vmem:[#allocation8 + $0x1d0] sm:$0xff]
          %v2581 = vld [vmem:[#allocation8 + $0x1d8] sm:$0xff]
          %v2582 = vld [vmem:[#allocation8 + $0x1e0] sm:$0xff]
          %v2583 = vld [vmem:[#allocation8 + $0x1e8] sm:$0xff]
          %v2584 = vld [vmem:[#allocation8 + $0x1f0] sm:$0xff]
          %v2585 = vld [vmem:[#allocation8 + $0x1f8] sm:$0xff]
          %v2586 = vld [vmem:[#allocation8 + $0x200] sm:$0xff]
          %v2587 = vld [vmem:[#allocation8 + $0x208] sm:$0xff]
          %v2588 = vld [vmem:[#allocation8 + $0x210] sm:$0xff]
          %v2589 = vld [vmem:[#allocation8 + $0x218] sm:$0xff]
          %v2590 = vld [vmem:[#allocation8 + $0x220] sm:$0xff]
          %v2591 = vld [vmem:[#allocation8 + $0x228] sm:$0xff]
          %v2592 = vld [vmem:[#allocation8 + $0x230] sm:$0xff]
          %v2593 = vld [vmem:[#allocation8 + $0x238] sm:$0xff]
          %v2594 = vld [vmem:[#allocation8 + $0x240] sm:$0xff]
          %v2595 = vld [vmem:[#allocation8 + $0x248] sm:$0xff]
          %v2596 = vld [vmem:[#allocation8 + $0x250] sm:$0xff]
          %v2597 = vld [vmem:[#allocation8 + $0x258] sm:$0xff]
          %v2598 = vld [vmem:[#allocation8 + $0x260] sm:$0xff]
          %v2599 = vld [vmem:[#allocation8 + $0x268] sm:$0xff]
          %v2600 = vld [vmem:[#allocation8 + $0x270] sm:$0xff]
          %v2601 = vld [vmem:[#allocation8 + $0x278] sm:$0xff]
          %v2602 = vld [vmem:[#allocation8 + $0x280] sm:$0xff]
          %v2603 = vld [vmem:[#allocation8 + $0x288] sm:$0xff]
          %v2604 = vld [vmem:[#allocation8 + $0x290] sm:$0xff]
          %v2605 = vld [vmem:[#allocation8 + $0x298] sm:$0xff]
          %v2606 = vld [vmem:[#allocation8 + $0x2a0] sm:$0xff]
          %v2607 = vld [vmem:[#allocation8 + $0x2a8] sm:$0xff]
          %v2608 = vld [vmem:[#allocation8 + $0x2b0] sm:$0xff]
          %v2609 = vld [vmem:[#allocation8 + $0x2b8] sm:$0xff]
          %v2610 = vld [vmem:[#allocation8 + $0x2c0] sm:$0xff]
          %v2611 = vld [vmem:[#allocation8 + $0x2c8] sm:$0xff]
          %v2612 = vld [vmem:[#allocation8 + $0x2d0] sm:$0xff]
          %v2613 = vld [vmem:[#allocation8 + $0x2d8] sm:$0xff]
          %v2614 = vld [vmem:[#allocation8 + $0x2e0] sm:$0xff]
          %v2615 = vld [vmem:[#allocation8 + $0x2e8] sm:$0xff]
          %v2616 = vld [vmem:[#allocation8 + $0x2f0] sm:$0xff]
          %v2617 = vld [vmem:[#allocation8 + $0x2f8] sm:$0xff]
          %v2618 = vld [vmem:[#allocation8 + $0x300] sm:$0xff]
          %v2619 = vld [vmem:[#allocation8 + $0x308] sm:$0xff]
          %v2620 = vld [vmem:[#allocation8 + $0x310] sm:$0xff]
          %v2621 = vld [vmem:[#allocation8 + $0x318] sm:$0xff]
          %v2622 = vld [vmem:[#allocation8 + $0x320] sm:$0xff]
          %v2623 = vld [vmem:[#allocation8 + $0x328] sm:$0xff]
          %v2624 = vld [vmem:[#allocation8 + $0x330] sm:$0xff]
          %v2625 = vld [vmem:[#allocation8 + $0x338] sm:$0xff]
          %v2626 = vld [vmem:[#allocation8 + $0x340] sm:$0xff]
          %v2627 = vld [vmem:[#allocation8 + $0x348] sm:$0xff]
          %v2628 = vld [vmem:[#allocation8 + $0x350] sm:$0xff]
          %v2629 = vld [vmem:[#allocation8 + $0x358] sm:$0xff]
          %v2630 = vld [vmem:[#allocation8 + $0x360] sm:$0xff]
          %v2631 = vld [vmem:[#allocation8 + $0x368] sm:$0xff]
          %v2632 = vld [vmem:[#allocation8 + $0x370] sm:$0xff]
          %v2633 = vld [vmem:[#allocation8 + $0x378] sm:$0xff]
          %v2634 = vld [vmem:[#allocation8 + $0x380] sm:$0xff]
          %v2635 = vld [vmem:[#allocation8 + $0x388] sm:$0xff]
          %v2636 = vld [vmem:[#allocation8 + $0x390] sm:$0xff]
          %v2637 = vld [vmem:[#allocation8 + $0x398] sm:$0xff]
          %v2638 = vld [vmem:[#allocation8 + $0x3a0] sm:$0xff]
          %v2639 = vld [vmem:[#allocation8 + $0x3a8] sm:$0xff]
          %v2640 = vld [vmem:[#allocation8 + $0x3b0] sm:$0xff]
          %v2641 = vld [vmem:[#allocation8 + $0x3b8] sm:$0xff]
          %v2642 = vld [vmem:[#allocation8 + $0x3c0] sm:$0xff]
          %v2643 = vld [vmem:[#allocation8 + $0x3c8] sm:$0xff]
          %v2644 = vld [vmem:[#allocation8 + $0x3d0] sm:$0xff]
          %v2645 = vld [vmem:[#allocation8 + $0x3d8] sm:$0xff]
          %v2646 = vld [vmem:[#allocation8 + $0x3e0] sm:$0xff]
          %v2647 = vld [vmem:[#allocation8 + $0x3e8] sm:$0xff]
          %v2648 = vld [vmem:[#allocation8 + $0x3f0] sm:$0xff]
          %v2649 = vld [vmem:[#allocation8 + $0x3f8] sm:$0xff]
          %v2650 = vld [vmem:[#allocation8 + $0x400] sm:$0xff]
          %v2651 = vld [vmem:[#allocation8 + $0x408] sm:$0xff]
          %v2652 = vld [vmem:[#allocation8 + $0x410] sm:$0xff]
          %v2653 = vld [vmem:[#allocation8 + $0x418] sm:$0xff]
          %v2654 = vld [vmem:[#allocation8 + $0x420] sm:$0xff]
          %v2655 = vld [vmem:[#allocation8 + $0x428] sm:$0xff]
          %v2656 = vld [vmem:[#allocation8 + $0x430] sm:$0xff]
          %v2657 = vld [vmem:[#allocation8 + $0x438] sm:$0xff]
          %v2658 = vld [vmem:[#allocation8 + $0x440] sm:$0xff]
          %v2659 = vld [vmem:[#allocation8 + $0x448] sm:$0xff]
          %v2660 = vld [vmem:[#allocation8 + $0x450] sm:$0xff]
          %v2661 = vld [vmem:[#allocation8 + $0x458] sm:$0xff]
          %v2662 = vld [vmem:[#allocation8 + $0x460] sm:$0xff]
          %v2663 = vld [vmem:[#allocation8 + $0x468] sm:$0xff]
          %v2664 = vld [vmem:[#allocation8 + $0x470] sm:$0xff]
          %v2665 = vld [vmem:[#allocation8 + $0x478] sm:$0xff]
          %v2666 = vld [vmem:[#allocation8 + $0x480] sm:$0xff]
          %v2667 = vld [vmem:[#allocation8 + $0x488] sm:$0xff]
          %v2668 = vld [vmem:[#allocation8 + $0x490] sm:$0xff]
          %v2669 = vld [vmem:[#allocation8 + $0x498] sm:$0xff]
          %v2670 = vld [vmem:[#allocation8 + $0x4a0] sm:$0xff]
          %v2671 = vld [vmem:[#allocation8 + $0x4a8] sm:$0xff]
          %v2672 = vld [vmem:[#allocation8 + $0x4b0] sm:$0xff]
          %v2673 = vld [vmem:[#allocation8 + $0x4b8] sm:$0xff]
          %v2674 = vld [vmem:[#allocation8 + $0x4c0] sm:$0xff]
          %v2675 = vld [vmem:[#allocation8 + $0x4c8] sm:$0xff]
          %v2676 = vld [vmem:[#allocation8 + $0x4d0] sm:$0xff]
          %v2677 = vld [vmem:[#allocation8 + $0x4d8] sm:$0xff]
          %v2678 = vld [vmem:[#allocation8 + $0x4e0] sm:$0xff]
          %v2679 = vld [vmem:[#allocation8 + $0x4e8] sm:$0xff]
          %v2680 = vld [vmem:[#allocation8 + $0x4f0] sm:$0xff]
          %v2681 = vld [vmem:[#allocation8 + $0x4f8] sm:$0xff]
          %v2682 = vld [vmem:[#allocation8 + $0x500] sm:$0xff]
          %v2683 = vld [vmem:[#allocation8 + $0x508] sm:$0xff]
          %v2684 = vld [vmem:[#allocation8 + $0x510] sm:$0xff]
          %v2685 = vld [vmem:[#allocation8 + $0x518] sm:$0xff]
          %v2686 = vld [vmem:[#allocation8 + $0x520] sm:$0xff]
          %v2687 = vld [vmem:[#allocation8 + $0x528] sm:$0xff]
          %v2688 = vld [vmem:[#allocation8 + $0x530] sm:$0xff]
          %v2689 = vld [vmem:[#allocation8 + $0x538] sm:$0xff]
          %v2690 = vld [vmem:[#allocation8 + $0x540] sm:$0xff]
          %v2691 = vld [vmem:[#allocation8 + $0x548] sm:$0xff]
          %v2692 = vld [vmem:[#allocation8 + $0x550] sm:$0xff]
          %v2693 = vld [vmem:[#allocation8 + $0x558] sm:$0xff]
          %v2694 = vld [vmem:[#allocation8 + $0x560] sm:$0xff]
          %v2695 = vld [vmem:[#allocation8 + $0x568] sm:$0xff]
          %v2696 = vld [vmem:[#allocation8 + $0x570] sm:$0xff]
          %v2697 = vld [vmem:[#allocation8 + $0x578] sm:$0xff]
          %v2698 = vld [vmem:[#allocation8 + $0x580] sm:$0xff]
          %v2699 = vld [vmem:[#allocation8 + $0x588] sm:$0xff]
          %v2700 = vld [vmem:[#allocation8 + $0x590] sm:$0xff]
          %v2701 = vld [vmem:[#allocation8 + $0x598] sm:$0xff]
          %v2702 = vld [vmem:[#allocation8 + $0x5a0] sm:$0xff]
          %v2703 = vld [vmem:[#allocation8 + $0x5a8] sm:$0xff]
          %v2704 = vld [vmem:[#allocation8 + $0x5b0] sm:$0xff]
          %v2705 = vld [vmem:[#allocation8 + $0x5b8] sm:$0xff]
          %v2706 = vld [vmem:[#allocation8 + $0x5c0] sm:$0xff]
          %v2707 = vld [vmem:[#allocation8 + $0x5c8] sm:$0xff]
          %v2708 = vld [vmem:[#allocation8 + $0x5d0] sm:$0xff]
          %v2709 = vld [vmem:[#allocation8 + $0x5d8] sm:$0xff]
          %v2710 = vld [vmem:[#allocation8 + $0x5e0] sm:$0xff]
          %v2711 = vld [vmem:[#allocation8 + $0x5e8] sm:$0xff]
          %v2712 = vld [vmem:[#allocation8 + $0x5f0] sm:$0xff]
          %v2713 = vld [vmem:[#allocation8 + $0x5f8] sm:$0xff]
          %v2714 = vld [vmem:[#allocation8 + $0x600] sm:$0xff]
          %v2715 = vld [vmem:[#allocation8 + $0x608] sm:$0xff]
          %v2716 = vld [vmem:[#allocation8 + $0x610] sm:$0xff]
          %v2717 = vld [vmem:[#allocation8 + $0x618] sm:$0xff]
          %v2718 = vld [vmem:[#allocation8 + $0x620] sm:$0xff]
          %v2719 = vld [vmem:[#allocation8 + $0x628] sm:$0xff]
          %v2720 = vld [vmem:[#allocation8 + $0x630] sm:$0xff]
          %v2721 = vld [vmem:[#allocation8 + $0x638] sm:$0xff]
          %v2722 = vld [vmem:[#allocation8 + $0x640] sm:$0xff]
          %v2723 = vld [vmem:[#allocation8 + $0x648] sm:$0xff]
          %v2724 = vld [vmem:[#allocation8 + $0x650] sm:$0xff]
          %v2725 = vld [vmem:[#allocation8 + $0x658] sm:$0xff]
          %v2726 = vld [vmem:[#allocation8 + $0x660] sm:$0xff]
          %v2727 = vld [vmem:[#allocation8 + $0x668] sm:$0xff]
          %v2728 = vld [vmem:[#allocation8 + $0x670] sm:$0xff]
          %v2729 = vld [vmem:[#allocation8 + $0x678] sm:$0xff]
          %v2730 = vld [vmem:[#allocation8 + $0x680] sm:$0xff]
          %v2731 = vld [vmem:[#allocation8 + $0x688] sm:$0xff]
          %v2732 = vld [vmem:[#allocation8 + $0x690] sm:$0xff]
          %v2733 = vld [vmem:[#allocation8 + $0x698] sm:$0xff]
          %v2734 = vld [vmem:[#allocation8 + $0x6a0] sm:$0xff]
          %v2735 = vld [vmem:[#allocation8 + $0x6a8] sm:$0xff]
          %v2736 = vld [vmem:[#allocation8 + $0x6b0] sm:$0xff]
          %v2737 = vld [vmem:[#allocation8 + $0x6b8] sm:$0xff]
          %v2738 = vld [vmem:[#allocation8 + $0x6c0] sm:$0xff]
          %v2739 = vld [vmem:[#allocation8 + $0x6c8] sm:$0xff]
          %v2740 = vld [vmem:[#allocation8 + $0x6d0] sm:$0xff]
          %v2741 = vld [vmem:[#allocation8 + $0x6d8] sm:$0xff]
          %v2742 = vld [vmem:[#allocation8 + $0x6e0] sm:$0xff]
          %v2743 = vld [vmem:[#allocation8 + $0x6e8] sm:$0xff]
          %v2744 = vld [vmem:[#allocation8 + $0x6f0] sm:$0xff]
          %v2745 = vld [vmem:[#allocation8 + $0x6f8] sm:$0xff]
          %v2746 = vld [vmem:[#allocation8 + $0x700] sm:$0xff]
          %v2747 = vld [vmem:[#allocation8 + $0x708] sm:$0xff]
          %v2748 = vld [vmem:[#allocation8 + $0x710] sm:$0xff]
          %v2749 = vld [vmem:[#allocation8 + $0x718] sm:$0xff]
          %v2750 = vld [vmem:[#allocation8 + $0x720] sm:$0xff]
          %v2751 = vld [vmem:[#allocation8 + $0x728] sm:$0xff]
          %v2752 = vld [vmem:[#allocation8 + $0x730] sm:$0xff]
          %v2753 = vld [vmem:[#allocation8 + $0x738] sm:$0xff]
          %v2754 = vld [vmem:[#allocation8 + $0x740] sm:$0xff]
          %v2755 = vld [vmem:[#allocation8 + $0x748] sm:$0xff]
          %v2756 = vld [vmem:[#allocation8 + $0x750] sm:$0xff]
          %v2757 = vld [vmem:[#allocation8 + $0x758] sm:$0xff]
          %v2758 = vld [vmem:[#allocation8 + $0x760] sm:$0xff]
          %v2759 = vld [vmem:[#allocation8 + $0x768] sm:$0xff]
          %v2760 = vld [vmem:[#allocation8 + $0x770] sm:$0xff]
          %v2761 = vld [vmem:[#allocation8 + $0x778] sm:$0xff]
          %v2762 = vld [vmem:[#allocation8 + $0x780] sm:$0xff]
          %v2763 = vld [vmem:[#allocation8 + $0x788] sm:$0xff]
          %v2764 = vld [vmem:[#allocation8 + $0x790] sm:$0xff]
          %v2765 = vld [vmem:[#allocation8 + $0x798] sm:$0xff]
          %v2766 = vld [vmem:[#allocation8 + $0x7a0] sm:$0xff]
          %v2767 = vld [vmem:[#allocation8 + $0x7a8] sm:$0xff]
          %v2768 = vld [vmem:[#allocation8 + $0x7b0] sm:$0xff]
          %v2769 = vld [vmem:[#allocation8 + $0x7b8] sm:$0xff]
          %v2770 = vld [vmem:[#allocation8 + $0x7c0] sm:$0xff]
          %v2771 = vld [vmem:[#allocation8 + $0x7c8] sm:$0xff]
          %v2772 = vld [vmem:[#allocation8 + $0x7d0] sm:$0xff]
          %v2773 = vld [vmem:[#allocation8 + $0x7d8] sm:$0xff]
          %v2774 = vld [vmem:[#allocation8 + $0x7e0] sm:$0xff]
          %v2775 = vld [vmem:[#allocation8 + $0x7e8] sm:$0xff]
          %v2776 = vld [vmem:[#allocation8 + $0x7f0] sm:$0xff]
          %v2777 = vld [vmem:[#allocation8 + $0x7f8] sm:$0xff]
          %v2778 = vld [vmem:[#allocation9] sm:$0xf]
          %v2780 = vlaneseq
          %v2781 = vshrl.u32 %v2780, 7
          %v2782 = vsub.s32 0, %v2781
          %v2783 = vrot.slane %v2778, %v2782
          %v2784 = vlaneseq
          %v2785 = vshrl.u32 %v2784, 7
          %v2786 = vsub.s32 1, %v2785
          %v2787 = vrot.slane %v2778, %v2786
          %v2788 = vlaneseq
          %v2789 = vshrl.u32 %v2788, 7
          %v2790 = vsub.s32 2, %v2789
          %v2791 = vrot.slane %v2778, %v2790
          %v2792 = vlaneseq
          %v2793 = vshrl.u32 %v2792, 7
          %v2794 = vsub.s32 3, %v2793
          %v2795 = vrot.slane %v2778, %v2794
          %v3056 = vunpack.c.l.b16 %v2522
          %v3057 = vunpack.c.h.b16 %v2522
          %v3058 = vunpack.c.l.b16 %v2523
          %v3059 = vunpack.c.h.b16 %v2523
          %v3060 = vunpack.c.l.b16 %v2524
          %v3061 = vunpack.c.h.b16 %v2524
          %v3062 = vunpack.c.l.b16 %v2525
          %v3063 = vunpack.c.h.b16 %v2525
          %v3064 = vunpack.c.l.b16 %v2526
          %v3065 = vunpack.c.h.b16 %v2526
          %v3066 = vunpack.c.l.b16 %v2527
          %v3067 = vunpack.c.h.b16 %v2527
          %v3068 = vunpack.c.l.b16 %v2528
          %v3069 = vunpack.c.h.b16 %v2528
          %v3070 = vunpack.c.l.b16 %v2529
          %v3071 = vunpack.c.h.b16 %v2529
          %v3072 = vunpack.c.l.b16 %v2530
          %v3073 = vunpack.c.h.b16 %v2530
          %v3074 = vunpack.c.l.b16 %v2531
          %v3075 = vunpack.c.h.b16 %v2531
          %v3076 = vunpack.c.l.b16 %v2532
          %v3077 = vunpack.c.h.b16 %v2532
          %v3078 = vunpack.c.l.b16 %v2533
          %v3079 = vunpack.c.h.b16 %v2533
          %v3080 = vunpack.c.l.b16 %v2534
          %v3081 = vunpack.c.h.b16 %v2534
          %v3082 = vunpack.c.l.b16 %v2535
          %v3083 = vunpack.c.h.b16 %v2535
          %v3084 = vunpack.c.l.b16 %v2536
          %v3085 = vunpack.c.h.b16 %v2536
          %v3086 = vunpack.c.l.b16 %v2537
          %v3087 = vunpack.c.h.b16 %v2537
          %v3088 = vunpack.c.l.b16 %v2538
          %v3089 = vunpack.c.h.b16 %v2538
          %v3090 = vunpack.c.l.b16 %v2539
          %v3091 = vunpack.c.h.b16 %v2539
          %v3092 = vunpack.c.l.b16 %v2540
          %v3093 = vunpack.c.h.b16 %v2540
          %v3094 = vunpack.c.l.b16 %v2541
          %v3095 = vunpack.c.h.b16 %v2541
          %v3096 = vunpack.c.l.b16 %v2542
          %v3097 = vunpack.c.h.b16 %v2542
          %v3098 = vunpack.c.l.b16 %v2543
          %v3099 = vunpack.c.h.b16 %v2543
          %v3100 = vunpack.c.l.b16 %v2544
          %v3101 = vunpack.c.h.b16 %v2544
          %v3102 = vunpack.c.l.b16 %v2545
          %v3103 = vunpack.c.h.b16 %v2545
          %v3104 = vunpack.c.l.b16 %v2546
          %v3105 = vunpack.c.h.b16 %v2546
          %v3106 = vunpack.c.l.b16 %v2547
          %v3107 = vunpack.c.h.b16 %v2547
          %v3108 = vunpack.c.l.b16 %v2548
          %v3109 = vunpack.c.h.b16 %v2548
          %v3110 = vunpack.c.l.b16 %v2549
          %v3111 = vunpack.c.h.b16 %v2549
          %v3112 = vunpack.c.l.b16 %v2550
          %v3113 = vunpack.c.h.b16 %v2550
          %v3114 = vunpack.c.l.b16 %v2551
          %v3115 = vunpack.c.h.b16 %v2551
          %v3116 = vunpack.c.l.b16 %v2552
          %v3117 = vunpack.c.h.b16 %v2552
          %v3118 = vunpack.c.l.b16 %v2553
          %v3119 = vunpack.c.h.b16 %v2553
          %v3120 = vunpack.c.l.b16 %v2554
          %v3121 = vunpack.c.h.b16 %v2554
          %v3122 = vunpack.c.l.b16 %v2555
          %v3123 = vunpack.c.h.b16 %v2555
          %v3124 = vunpack.c.l.b16 %v2556
          %v3125 = vunpack.c.h.b16 %v2556
          %v3126 = vunpack.c.l.b16 %v2557
          %v3127 = vunpack.c.h.b16 %v2557
          %v3128 = vunpack.c.l.b16 %v2558
          %v3129 = vunpack.c.h.b16 %v2558
          %v3130 = vunpack.c.l.b16 %v2559
          %v3131 = vunpack.c.h.b16 %v2559
          %v3132 = vunpack.c.l.b16 %v2560
          %v3133 = vunpack.c.h.b16 %v2560
          %v3134 = vunpack.c.l.b16 %v2561
          %v3135 = vunpack.c.h.b16 %v2561
          %v3136 = vunpack.c.l.b16 %v2562
          %v3137 = vunpack.c.h.b16 %v2562
          %v3138 = vunpack.c.l.b16 %v2563
          %v3139 = vunpack.c.h.b16 %v2563
          %v3140 = vunpack.c.l.b16 %v2564
          %v3141 = vunpack.c.h.b16 %v2564
          %v3142 = vunpack.c.l.b16 %v2565
          %v3143 = vunpack.c.h.b16 %v2565
          %v3144 = vunpack.c.l.b16 %v2566
          %v3145 = vunpack.c.h.b16 %v2566
          %v3146 = vunpack.c.l.b16 %v2567
          %v3147 = vunpack.c.h.b16 %v2567
          %v3148 = vunpack.c.l.b16 %v2568
          %v3149 = vunpack.c.h.b16 %v2568
          %v3150 = vunpack.c.l.b16 %v2569
          %v3151 = vunpack.c.h.b16 %v2569
          %v3152 = vunpack.c.l.b16 %v2570
          %v3153 = vunpack.c.h.b16 %v2570
          %v3154 = vunpack.c.l.b16 %v2571
          %v3155 = vunpack.c.h.b16 %v2571
          %v3156 = vunpack.c.l.b16 %v2572
          %v3157 = vunpack.c.h.b16 %v2572
          %v3158 = vunpack.c.l.b16 %v2573
          %v3159 = vunpack.c.h.b16 %v2573
          %v3160 = vunpack.c.l.b16 %v2574
          %v3161 = vunpack.c.h.b16 %v2574
          %v3162 = vunpack.c.l.b16 %v2575
          %v3163 = vunpack.c.h.b16 %v2575
          %v3164 = vunpack.c.l.b16 %v2576
          %v3165 = vunpack.c.h.b16 %v2576
          %v3166 = vunpack.c.l.b16 %v2577
          %v3167 = vunpack.c.h.b16 %v2577
          %v3168 = vunpack.c.l.b16 %v2578
          %v3169 = vunpack.c.h.b16 %v2578
          %v3170 = vunpack.c.l.b16 %v2579
          %v3171 = vunpack.c.h.b16 %v2579
          %v3172 = vunpack.c.l.b16 %v2580
          %v3173 = vunpack.c.h.b16 %v2580
          %v3174 = vunpack.c.l.b16 %v2581
          %v3175 = vunpack.c.h.b16 %v2581
          %v3176 = vunpack.c.l.b16 %v2582
          %v3177 = vunpack.c.h.b16 %v2582
          %v3178 = vunpack.c.l.b16 %v2583
          %v3179 = vunpack.c.h.b16 %v2583
          %v3180 = vunpack.c.l.b16 %v2584
          %v3181 = vunpack.c.h.b16 %v2584
          %v3182 = vunpack.c.l.b16 %v2585
          %v3183 = vunpack.c.h.b16 %v2585
          %v3184 = vunpack.c.l.b16 %v2586
          %v3185 = vunpack.c.h.b16 %v2586
          %v3186 = vunpack.c.l.b16 %v2587
          %v3187 = vunpack.c.h.b16 %v2587
          %v3188 = vunpack.c.l.b16 %v2588
          %v3189 = vunpack.c.h.b16 %v2588
          %v3190 = vunpack.c.l.b16 %v2589
          %v3191 = vunpack.c.h.b16 %v2589
          %v3192 = vunpack.c.l.b16 %v2590
          %v3193 = vunpack.c.h.b16 %v2590
          %v3194 = vunpack.c.l.b16 %v2591
          %v3195 = vunpack.c.h.b16 %v2591
          %v3196 = vunpack.c.l.b16 %v2592
          %v3197 = vunpack.c.h.b16 %v2592
          %v3198 = vunpack.c.l.b16 %v2593
          %v3199 = vunpack.c.h.b16 %v2593
          %v3200 = vunpack.c.l.b16 %v2594
          %v3201 = vunpack.c.h.b16 %v2594
          %v3202 = vunpack.c.l.b16 %v2595
          %v3203 = vunpack.c.h.b16 %v2595
          %v3204 = vunpack.c.l.b16 %v2596
          %v3205 = vunpack.c.h.b16 %v2596
          %v3206 = vunpack.c.l.b16 %v2597
          %v3207 = vunpack.c.h.b16 %v2597
          %v3208 = vunpack.c.l.b16 %v2598
          %v3209 = vunpack.c.h.b16 %v2598
          %v3210 = vunpack.c.l.b16 %v2599
          %v3211 = vunpack.c.h.b16 %v2599
          %v3212 = vunpack.c.l.b16 %v2600
          %v3213 = vunpack.c.h.b16 %v2600
          %v3214 = vunpack.c.l.b16 %v2601
          %v3215 = vunpack.c.h.b16 %v2601
          %v3216 = vunpack.c.l.b16 %v2602
          %v3217 = vunpack.c.h.b16 %v2602
          %v3218 = vunpack.c.l.b16 %v2603
          %v3219 = vunpack.c.h.b16 %v2603
          %v3220 = vunpack.c.l.b16 %v2604
          %v3221 = vunpack.c.h.b16 %v2604
          %v3222 = vunpack.c.l.b16 %v2605
          %v3223 = vunpack.c.h.b16 %v2605
          %v3224 = vunpack.c.l.b16 %v2606
          %v3225 = vunpack.c.h.b16 %v2606
          %v3226 = vunpack.c.l.b16 %v2607
          %v3227 = vunpack.c.h.b16 %v2607
          %v3228 = vunpack.c.l.b16 %v2608
          %v3229 = vunpack.c.h.b16 %v2608
          %v3230 = vunpack.c.l.b16 %v2609
          %v3231 = vunpack.c.h.b16 %v2609
          %v3232 = vunpack.c.l.b16 %v2610
          %v3233 = vunpack.c.h.b16 %v2610
          %v3234 = vunpack.c.l.b16 %v2611
          %v3235 = vunpack.c.h.b16 %v2611
          %v3236 = vunpack.c.l.b16 %v2612
          %v3237 = vunpack.c.h.b16 %v2612
          %v3238 = vunpack.c.l.b16 %v2613
          %v3239 = vunpack.c.h.b16 %v2613
          %v3240 = vunpack.c.l.b16 %v2614
          %v3241 = vunpack.c.h.b16 %v2614
          %v3242 = vunpack.c.l.b16 %v2615
          %v3243 = vunpack.c.h.b16 %v2615
          %v3244 = vunpack.c.l.b16 %v2616
          %v3245 = vunpack.c.h.b16 %v2616
          %v3246 = vunpack.c.l.b16 %v2617
          %v3247 = vunpack.c.h.b16 %v2617
          %v3248 = vunpack.c.l.b16 %v2618
          %v3249 = vunpack.c.h.b16 %v2618
          %v3250 = vunpack.c.l.b16 %v2619
          %v3251 = vunpack.c.h.b16 %v2619
          %v3252 = vunpack.c.l.b16 %v2620
          %v3253 = vunpack.c.h.b16 %v2620
          %v3254 = vunpack.c.l.b16 %v2621
          %v3255 = vunpack.c.h.b16 %v2621
          %v3256 = vunpack.c.l.b16 %v2622
          %v3257 = vunpack.c.h.b16 %v2622
          %v3258 = vunpack.c.l.b16 %v2623
          %v3259 = vunpack.c.h.b16 %v2623
          %v3260 = vunpack.c.l.b16 %v2624
          %v3261 = vunpack.c.h.b16 %v2624
          %v3262 = vunpack.c.l.b16 %v2625
          %v3263 = vunpack.c.h.b16 %v2625
          %v3264 = vunpack.c.l.b16 %v2626
          %v3265 = vunpack.c.h.b16 %v2626
          %v3266 = vunpack.c.l.b16 %v2627
          %v3267 = vunpack.c.h.b16 %v2627
          %v3268 = vunpack.c.l.b16 %v2628
          %v3269 = vunpack.c.h.b16 %v2628
          %v3270 = vunpack.c.l.b16 %v2629
          %v3271 = vunpack.c.h.b16 %v2629
          %v3272 = vunpack.c.l.b16 %v2630
          %v3273 = vunpack.c.h.b16 %v2630
          %v3274 = vunpack.c.l.b16 %v2631
          %v3275 = vunpack.c.h.b16 %v2631
          %v3276 = vunpack.c.l.b16 %v2632
          %v3277 = vunpack.c.h.b16 %v2632
          %v3278 = vunpack.c.l.b16 %v2633
          %v3279 = vunpack.c.h.b16 %v2633
          %v3280 = vunpack.c.l.b16 %v2634
          %v3281 = vunpack.c.h.b16 %v2634
          %v3282 = vunpack.c.l.b16 %v2635
          %v3283 = vunpack.c.h.b16 %v2635
          %v3284 = vunpack.c.l.b16 %v2636
          %v3285 = vunpack.c.h.b16 %v2636
          %v3286 = vunpack.c.l.b16 %v2637
          %v3287 = vunpack.c.h.b16 %v2637
          %v3288 = vunpack.c.l.b16 %v2638
          %v3289 = vunpack.c.h.b16 %v2638
          %v3290 = vunpack.c.l.b16 %v2639
          %v3291 = vunpack.c.h.b16 %v2639
          %v3292 = vunpack.c.l.b16 %v2640
          %v3293 = vunpack.c.h.b16 %v2640
          %v3294 = vunpack.c.l.b16 %v2641
          %v3295 = vunpack.c.h.b16 %v2641
          %v3296 = vunpack.c.l.b16 %v2642
          %v3297 = vunpack.c.h.b16 %v2642
          %v3298 = vunpack.c.l.b16 %v2643
          %v3299 = vunpack.c.h.b16 %v2643
          %v3300 = vunpack.c.l.b16 %v2644
          %v3301 = vunpack.c.h.b16 %v2644
          %v3302 = vunpack.c.l.b16 %v2645
          %v3303 = vunpack.c.h.b16 %v2645
          %v3304 = vunpack.c.l.b16 %v2646
          %v3305 = vunpack.c.h.b16 %v2646
          %v3306 = vunpack.c.l.b16 %v2647
          %v3307 = vunpack.c.h.b16 %v2647
          %v3308 = vunpack.c.l.b16 %v2648
          %v3309 = vunpack.c.h.b16 %v2648
          %v3310 = vunpack.c.l.b16 %v2649
          %v3311 = vunpack.c.h.b16 %v2649
          %v3312 = vunpack.c.l.b16 %v2650
          %v3313 = vunpack.c.h.b16 %v2650
          %v3314 = vunpack.c.l.b16 %v2651
          %v3315 = vunpack.c.h.b16 %v2651
          %v3316 = vunpack.c.l.b16 %v2652
          %v3317 = vunpack.c.h.b16 %v2652
          %v3318 = vunpack.c.l.b16 %v2653
          %v3319 = vunpack.c.h.b16 %v2653
          %v3320 = vunpack.c.l.b16 %v2654
          %v3321 = vunpack.c.h.b16 %v2654
          %v3322 = vunpack.c.l.b16 %v2655
          %v3323 = vunpack.c.h.b16 %v2655
          %v3324 = vunpack.c.l.b16 %v2656
          %v3325 = vunpack.c.h.b16 %v2656
          %v3326 = vunpack.c.l.b16 %v2657
          %v3327 = vunpack.c.h.b16 %v2657
          %v3328 = vunpack.c.l.b16 %v2658
          %v3329 = vunpack.c.h.b16 %v2658
          %v3330 = vunpack.c.l.b16 %v2659
          %v3331 = vunpack.c.h.b16 %v2659
          %v3332 = vunpack.c.l.b16 %v2660
          %v3333 = vunpack.c.h.b16 %v2660
          %v3334 = vunpack.c.l.b16 %v2661
          %v3335 = vunpack.c.h.b16 %v2661
          %v3336 = vunpack.c.l.b16 %v2662
          %v3337 = vunpack.c.h.b16 %v2662
          %v3338 = vunpack.c.l.b16 %v2663
          %v3339 = vunpack.c.h.b16 %v2663
          %v3340 = vunpack.c.l.b16 %v2664
          %v3341 = vunpack.c.h.b16 %v2664
          %v3342 = vunpack.c.l.b16 %v2665
          %v3343 = vunpack.c.h.b16 %v2665
          %v3344 = vunpack.c.l.b16 %v2666
          %v3345 = vunpack.c.h.b16 %v2666
          %v3346 = vunpack.c.l.b16 %v2667
          %v3347 = vunpack.c.h.b16 %v2667
          %v3348 = vunpack.c.l.b16 %v2668
          %v3349 = vunpack.c.h.b16 %v2668
          %v3350 = vunpack.c.l.b16 %v2669
          %v3351 = vunpack.c.h.b16 %v2669
          %v3352 = vunpack.c.l.b16 %v2670
          %v3353 = vunpack.c.h.b16 %v2670
          %v3354 = vunpack.c.l.b16 %v2671
          %v3355 = vunpack.c.h.b16 %v2671
          %v3356 = vunpack.c.l.b16 %v2672
          %v3357 = vunpack.c.h.b16 %v2672
          %v3358 = vunpack.c.l.b16 %v2673
          %v3359 = vunpack.c.h.b16 %v2673
          %v3360 = vunpack.c.l.b16 %v2674
          %v3361 = vunpack.c.h.b16 %v2674
          %v3362 = vunpack.c.l.b16 %v2675
          %v3363 = vunpack.c.h.b16 %v2675
          %v3364 = vunpack.c.l.b16 %v2676
          %v3365 = vunpack.c.h.b16 %v2676
          %v3366 = vunpack.c.l.b16 %v2677
          %v3367 = vunpack.c.h.b16 %v2677
          %v3368 = vunpack.c.l.b16 %v2678
          %v3369 = vunpack.c.h.b16 %v2678
          %v3370 = vunpack.c.l.b16 %v2679
          %v3371 = vunpack.c.h.b16 %v2679
          %v3372 = vunpack.c.l.b16 %v2680
          %v3373 = vunpack.c.h.b16 %v2680
          %v3374 = vunpack.c.l.b16 %v2681
          %v3375 = vunpack.c.h.b16 %v2681
          %v3376 = vunpack.c.l.b16 %v2682
          %v3377 = vunpack.c.h.b16 %v2682
          %v3378 = vunpack.c.l.b16 %v2683
          %v3379 = vunpack.c.h.b16 %v2683
          %v3380 = vunpack.c.l.b16 %v2684
          %v3381 = vunpack.c.h.b16 %v2684
          %v3382 = vunpack.c.l.b16 %v2685
          %v3383 = vunpack.c.h.b16 %v2685
          %v3384 = vunpack.c.l.b16 %v2686
          %v3385 = vunpack.c.h.b16 %v2686
          %v3386 = vunpack.c.l.b16 %v2687
          %v3387 = vunpack.c.h.b16 %v2687
          %v3388 = vunpack.c.l.b16 %v2688
          %v3389 = vunpack.c.h.b16 %v2688
          %v3390 = vunpack.c.l.b16 %v2689
          %v3391 = vunpack.c.h.b16 %v2689
          %v3392 = vunpack.c.l.b16 %v2690
          %v3393 = vunpack.c.h.b16 %v2690
          %v3394 = vunpack.c.l.b16 %v2691
          %v3395 = vunpack.c.h.b16 %v2691
          %v3396 = vunpack.c.l.b16 %v2692
          %v3397 = vunpack.c.h.b16 %v2692
          %v3398 = vunpack.c.l.b16 %v2693
          %v3399 = vunpack.c.h.b16 %v2693
          %v3400 = vunpack.c.l.b16 %v2694
          %v3401 = vunpack.c.h.b16 %v2694
          %v3402 = vunpack.c.l.b16 %v2695
          %v3403 = vunpack.c.h.b16 %v2695
          %v3404 = vunpack.c.l.b16 %v2696
          %v3405 = vunpack.c.h.b16 %v2696
          %v3406 = vunpack.c.l.b16 %v2697
          %v3407 = vunpack.c.h.b16 %v2697
          %v3408 = vunpack.c.l.b16 %v2698
          %v3409 = vunpack.c.h.b16 %v2698
          %v3410 = vunpack.c.l.b16 %v2699
          %v3411 = vunpack.c.h.b16 %v2699
          %v3412 = vunpack.c.l.b16 %v2700
          %v3413 = vunpack.c.h.b16 %v2700
          %v3414 = vunpack.c.l.b16 %v2701
          %v3415 = vunpack.c.h.b16 %v2701
          %v3416 = vunpack.c.l.b16 %v2702
          %v3417 = vunpack.c.h.b16 %v2702
          %v3418 = vunpack.c.l.b16 %v2703
          %v3419 = vunpack.c.h.b16 %v2703
          %v3420 = vunpack.c.l.b16 %v2704
          %v3421 = vunpack.c.h.b16 %v2704
          %v3422 = vunpack.c.l.b16 %v2705
          %v3423 = vunpack.c.h.b16 %v2705
          %v3424 = vunpack.c.l.b16 %v2706
          %v3425 = vunpack.c.h.b16 %v2706
          %v3426 = vunpack.c.l.b16 %v2707
          %v3427 = vunpack.c.h.b16 %v2707
          %v3428 = vunpack.c.l.b16 %v2708
          %v3429 = vunpack.c.h.b16 %v2708
          %v3430 = vunpack.c.l.b16 %v2709
          %v3431 = vunpack.c.h.b16 %v2709
          %v3432 = vunpack.c.l.b16 %v2710
          %v3433 = vunpack.c.h.b16 %v2710
          %v3434 = vunpack.c.l.b16 %v2711
          %v3435 = vunpack.c.h.b16 %v2711
          %v3436 = vunpack.c.l.b16 %v2712
          %v3437 = vunpack.c.h.b16 %v2712
          %v3438 = vunpack.c.l.b16 %v2713
          %v3439 = vunpack.c.h.b16 %v2713
          %v3440 = vunpack.c.l.b16 %v2714
          %v3441 = vunpack.c.h.b16 %v2714
          %v3442 = vunpack.c.l.b16 %v2715
          %v3443 = vunpack.c.h.b16 %v2715
          %v3444 = vunpack.c.l.b16 %v2716
          %v3445 = vunpack.c.h.b16 %v2716
          %v3446 = vunpack.c.l.b16 %v2717
          %v3447 = vunpack.c.h.b16 %v2717
          %v3448 = vunpack.c.l.b16 %v2718
          %v3449 = vunpack.c.h.b16 %v2718
          %v3450 = vunpack.c.l.b16 %v2719
          %v3451 = vunpack.c.h.b16 %v2719
          %v3452 = vunpack.c.l.b16 %v2720
          %v3453 = vunpack.c.h.b16 %v2720
          %v3454 = vunpack.c.l.b16 %v2721
          %v3455 = vunpack.c.h.b16 %v2721
          %v3456 = vunpack.c.l.b16 %v2722
          %v3457 = vunpack.c.h.b16 %v2722
          %v3458 = vunpack.c.l.b16 %v2723
          %v3459 = vunpack.c.h.b16 %v2723
          %v3460 = vunpack.c.l.b16 %v2724
          %v3461 = vunpack.c.h.b16 %v2724
          %v3462 = vunpack.c.l.b16 %v2725
          %v3463 = vunpack.c.h.b16 %v2725
          %v3464 = vunpack.c.l.b16 %v2726
          %v3465 = vunpack.c.h.b16 %v2726
          %v3466 = vunpack.c.l.b16 %v2727
          %v3467 = vunpack.c.h.b16 %v2727
          %v3468 = vunpack.c.l.b16 %v2728
          %v3469 = vunpack.c.h.b16 %v2728
          %v3470 = vunpack.c.l.b16 %v2729
          %v3471 = vunpack.c.h.b16 %v2729
          %v3472 = vunpack.c.l.b16 %v2730
          %v3473 = vunpack.c.h.b16 %v2730
          %v3474 = vunpack.c.l.b16 %v2731
          %v3475 = vunpack.c.h.b16 %v2731
          %v3476 = vunpack.c.l.b16 %v2732
          %v3477 = vunpack.c.h.b16 %v2732
          %v3478 = vunpack.c.l.b16 %v2733
          %v3479 = vunpack.c.h.b16 %v2733
          %v3480 = vunpack.c.l.b16 %v2734
          %v3481 = vunpack.c.h.b16 %v2734
          %v3482 = vunpack.c.l.b16 %v2735
          %v3483 = vunpack.c.h.b16 %v2735
          %v3484 = vunpack.c.l.b16 %v2736
          %v3485 = vunpack.c.h.b16 %v2736
          %v3486 = vunpack.c.l.b16 %v2737
          %v3487 = vunpack.c.h.b16 %v2737
          %v3488 = vunpack.c.l.b16 %v2738
          %v3489 = vunpack.c.h.b16 %v2738
          %v3490 = vunpack.c.l.b16 %v2739
          %v3491 = vunpack.c.h.b16 %v2739
          %v3492 = vunpack.c.l.b16 %v2740
          %v3493 = vunpack.c.h.b16 %v2740
          %v3494 = vunpack.c.l.b16 %v2741
          %v3495 = vunpack.c.h.b16 %v2741
          %v3496 = vunpack.c.l.b16 %v2742
          %v3497 = vunpack.c.h.b16 %v2742
          %v3498 = vunpack.c.l.b16 %v2743
          %v3499 = vunpack.c.h.b16 %v2743
          %v3500 = vunpack.c.l.b16 %v2744
          %v3501 = vunpack.c.h.b16 %v2744
          %v3502 = vunpack.c.l.b16 %v2745
          %v3503 = vunpack.c.h.b16 %v2745
          %v3504 = vunpack.c.l.b16 %v2746
          %v3505 = vunpack.c.h.b16 %v2746
          %v3506 = vunpack.c.l.b16 %v2747
          %v3507 = vunpack.c.h.b16 %v2747
          %v3508 = vunpack.c.l.b16 %v2748
          %v3509 = vunpack.c.h.b16 %v2748
          %v3510 = vunpack.c.l.b16 %v2749
          %v3511 = vunpack.c.h.b16 %v2749
          %v3512 = vunpack.c.l.b16 %v2750
          %v3513 = vunpack.c.h.b16 %v2750
          %v3514 = vunpack.c.l.b16 %v2751
          %v3515 = vunpack.c.h.b16 %v2751
          %v3516 = vunpack.c.l.b16 %v2752
          %v3517 = vunpack.c.h.b16 %v2752
          %v3518 = vunpack.c.l.b16 %v2753
          %v3519 = vunpack.c.h.b16 %v2753
          %v3520 = vunpack.c.l.b16 %v2754
          %v3521 = vunpack.c.h.b16 %v2754
          %v3522 = vunpack.c.l.b16 %v2755
          %v3523 = vunpack.c.h.b16 %v2755
          %v3524 = vunpack.c.l.b16 %v2756
          %v3525 = vunpack.c.h.b16 %v2756
          %v3526 = vunpack.c.l.b16 %v2757
          %v3527 = vunpack.c.h.b16 %v2757
          %v3528 = vunpack.c.l.b16 %v2758
          %v3529 = vunpack.c.h.b16 %v2758
          %v3530 = vunpack.c.l.b16 %v2759
          %v3531 = vunpack.c.h.b16 %v2759
          %v3532 = vunpack.c.l.b16 %v2760
          %v3533 = vunpack.c.h.b16 %v2760
          %v3534 = vunpack.c.l.b16 %v2761
          %v3535 = vunpack.c.h.b16 %v2761
          %v3536 = vunpack.c.l.b16 %v2762
          %v3537 = vunpack.c.h.b16 %v2762
          %v3538 = vunpack.c.l.b16 %v2763
          %v3539 = vunpack.c.h.b16 %v2763
          %v3540 = vunpack.c.l.b16 %v2764
          %v3541 = vunpack.c.h.b16 %v2764
          %v3542 = vunpack.c.l.b16 %v2765
          %v3543 = vunpack.c.h.b16 %v2765
          %v3544 = vunpack.c.l.b16 %v2766
          %v3545 = vunpack.c.h.b16 %v2766
          %v3546 = vunpack.c.l.b16 %v2767
          %v3547 = vunpack.c.h.b16 %v2767
          %v3548 = vunpack.c.l.b16 %v2768
          %v3549 = vunpack.c.h.b16 %v2768
          %v3550 = vunpack.c.l.b16 %v2769
          %v3551 = vunpack.c.h.b16 %v2769
          %v3552 = vunpack.c.l.b16 %v2770
          %v3553 = vunpack.c.h.b16 %v2770
          %v3554 = vunpack.c.l.b16 %v2771
          %v3555 = vunpack.c.h.b16 %v2771
          %v3556 = vunpack.c.l.b16 %v2772
          %v3557 = vunpack.c.h.b16 %v2772
          %v3558 = vunpack.c.l.b16 %v2773
          %v3559 = vunpack.c.h.b16 %v2773
          %v3560 = vunpack.c.l.b16 %v2774
          %v3561 = vunpack.c.h.b16 %v2774
          %v3562 = vunpack.c.l.b16 %v2775
          %v3563 = vunpack.c.h.b16 %v2775
          %v3564 = vunpack.c.l.b16 %v2776
          %v3565 = vunpack.c.h.b16 %v2776
          %v3566 = vunpack.c.l.b16 %v2777
          %v3567 = vunpack.c.h.b16 %v2777
          %v3568 = vpack.c.b16 %v3060, %v3056
          %v3569 = vpack.c.b16 %v3061, %v3057
          %v3570 = vpack.c.b16 %v3062, %v3058
          %v3571 = vpack.c.b16 %v3063, %v3059
          %v3572 = vpack.c.b16 %v3068, %v3064
          %v3573 = vpack.c.b16 %v3069, %v3065
          %v3574 = vpack.c.b16 %v3070, %v3066
          %v3575 = vpack.c.b16 %v3071, %v3067
          %v3576 = vpack.c.b16 %v3076, %v3072
          %v3577 = vpack.c.b16 %v3077, %v3073
          %v3578 = vpack.c.b16 %v3078, %v3074
          %v3579 = vpack.c.b16 %v3079, %v3075
          %v3580 = vpack.c.b16 %v3084, %v3080
          %v3581 = vpack.c.b16 %v3085, %v3081
          %v3582 = vpack.c.b16 %v3086, %v3082
          %v3583 = vpack.c.b16 %v3087, %v3083
          %v3584 = vpack.c.b16 %v3092, %v3088
          %v3585 = vpack.c.b16 %v3093, %v3089
          %v3586 = vpack.c.b16 %v3094, %v3090
          %v3587 = vpack.c.b16 %v3095, %v3091
          %v3588 = vpack.c.b16 %v3100, %v3096
          %v3589 = vpack.c.b16 %v3101, %v3097
          %v3590 = vpack.c.b16 %v3102, %v3098
          %v3591 = vpack.c.b16 %v3103, %v3099
          %v3592 = vpack.c.b16 %v3108, %v3104
          %v3593 = vpack.c.b16 %v3109, %v3105
          %v3594 = vpack.c.b16 %v3110, %v3106
          %v3595 = vpack.c.b16 %v3111, %v3107
          %v3596 = vpack.c.b16 %v3116, %v3112
          %v3597 = vpack.c.b16 %v3117, %v3113
          %v3598 = vpack.c.b16 %v3118, %v3114
          %v3599 = vpack.c.b16 %v3119, %v3115
          %v3600 = vpack.c.b16 %v3124, %v3120
          %v3601 = vpack.c.b16 %v3125, %v3121
          %v3602 = vpack.c.b16 %v3126, %v3122
          %v3603 = vpack.c.b16 %v3127, %v3123
          %v3604 = vpack.c.b16 %v3132, %v3128
          %v3605 = vpack.c.b16 %v3133, %v3129
          %v3606 = vpack.c.b16 %v3134, %v3130
          %v3607 = vpack.c.b16 %v3135, %v3131
          %v3608 = vpack.c.b16 %v3140, %v3136
          %v3609 = vpack.c.b16 %v3141, %v3137
          %v3610 = vpack.c.b16 %v3142, %v3138
          %v3611 = vpack.c.b16 %v3143, %v3139
          %v3612 = vpack.c.b16 %v3148, %v3144
          %v3613 = vpack.c.b16 %v3149, %v3145
          %v3614 = vpack.c.b16 %v3150, %v3146
          %v3615 = vpack.c.b16 %v3151, %v3147
          %v3616 = vpack.c.b16 %v3156, %v3152
          %v3617 = vpack.c.b16 %v3157, %v3153
          %v3618 = vpack.c.b16 %v3158, %v3154
          %v3619 = vpack.c.b16 %v3159, %v3155
          %v3620 = vpack.c.b16 %v3164, %v3160
          %v3621 = vpack.c.b16 %v3165, %v3161
          %v3622 = vpack.c.b16 %v3166, %v3162
          %v3623 = vpack.c.b16 %v3167, %v3163
          %v3624 = vpack.c.b16 %v3172, %v3168
          %v3625 = vpack.c.b16 %v3173, %v3169
          %v3626 = vpack.c.b16 %v3174, %v3170
          %v3627 = vpack.c.b16 %v3175, %v3171
          %v3628 = vpack.c.b16 %v3180, %v3176
          %v3629 = vpack.c.b16 %v3181, %v3177
          %v3630 = vpack.c.b16 %v3182, %v3178
          %v3631 = vpack.c.b16 %v3183, %v3179
          %v3632 = vpack.c.b16 %v3188, %v3184
          %v3633 = vpack.c.b16 %v3189, %v3185
          %v3634 = vpack.c.b16 %v3190, %v3186
          %v3635 = vpack.c.b16 %v3191, %v3187
          %v3636 = vpack.c.b16 %v3196, %v3192
          %v3637 = vpack.c.b16 %v3197, %v3193
          %v3638 = vpack.c.b16 %v3198, %v3194
          %v3639 = vpack.c.b16 %v3199, %v3195
          %v3640 = vpack.c.b16 %v3204, %v3200
          %v3641 = vpack.c.b16 %v3205, %v3201
          %v3642 = vpack.c.b16 %v3206, %v3202
          %v3643 = vpack.c.b16 %v3207, %v3203
          %v3644 = vpack.c.b16 %v3212, %v3208
          %v3645 = vpack.c.b16 %v3213, %v3209
          %v3646 = vpack.c.b16 %v3214, %v3210
          %v3647 = vpack.c.b16 %v3215, %v3211
          %v3648 = vpack.c.b16 %v3220, %v3216
          %v3649 = vpack.c.b16 %v3221, %v3217
          %v3650 = vpack.c.b16 %v3222, %v3218
          %v3651 = vpack.c.b16 %v3223, %v3219
          %v3652 = vpack.c.b16 %v3228, %v3224
          %v3653 = vpack.c.b16 %v3229, %v3225
          %v3654 = vpack.c.b16 %v3230, %v3226
          %v3655 = vpack.c.b16 %v3231, %v3227
          %v3656 = vpack.c.b16 %v3236, %v3232
          %v3657 = vpack.c.b16 %v3237, %v3233
          %v3658 = vpack.c.b16 %v3238, %v3234
          %v3659 = vpack.c.b16 %v3239, %v3235
          %v3660 = vpack.c.b16 %v3244, %v3240
          %v3661 = vpack.c.b16 %v3245, %v3241
          %v3662 = vpack.c.b16 %v3246, %v3242
          %v3663 = vpack.c.b16 %v3247, %v3243
          %v3664 = vpack.c.b16 %v3252, %v3248
          %v3665 = vpack.c.b16 %v3253, %v3249
          %v3666 = vpack.c.b16 %v3254, %v3250
          %v3667 = vpack.c.b16 %v3255, %v3251
          %v3668 = vpack.c.b16 %v3260, %v3256
          %v3669 = vpack.c.b16 %v3261, %v3257
          %v3670 = vpack.c.b16 %v3262, %v3258
          %v3671 = vpack.c.b16 %v3263, %v3259
          %v3672 = vpack.c.b16 %v3268, %v3264
          %v3673 = vpack.c.b16 %v3269, %v3265
          %v3674 = vpack.c.b16 %v3270, %v3266
          %v3675 = vpack.c.b16 %v3271, %v3267
          %v3676 = vpack.c.b16 %v3276, %v3272
          %v3677 = vpack.c.b16 %v3277, %v3273
          %v3678 = vpack.c.b16 %v3278, %v3274
          %v3679 = vpack.c.b16 %v3279, %v3275
          %v3680 = vpack.c.b16 %v3284, %v3280
          %v3681 = vpack.c.b16 %v3285, %v3281
          %v3682 = vpack.c.b16 %v3286, %v3282
          %v3683 = vpack.c.b16 %v3287, %v3283
          %v3684 = vpack.c.b16 %v3292, %v3288
          %v3685 = vpack.c.b16 %v3293, %v3289
          %v3686 = vpack.c.b16 %v3294, %v3290
          %v3687 = vpack.c.b16 %v3295, %v3291
          %v3688 = vpack.c.b16 %v3300, %v3296
          %v3689 = vpack.c.b16 %v3301, %v3297
          %v3690 = vpack.c.b16 %v3302, %v3298
          %v3691 = vpack.c.b16 %v3303, %v3299
          %v3692 = vpack.c.b16 %v3308, %v3304
          %v3693 = vpack.c.b16 %v3309, %v3305
          %v3694 = vpack.c.b16 %v3310, %v3306
          %v3695 = vpack.c.b16 %v3311, %v3307
          %v3696 = vpack.c.b16 %v3316, %v3312
          %v3697 = vpack.c.b16 %v3317, %v3313
          %v3698 = vpack.c.b16 %v3318, %v3314
          %v3699 = vpack.c.b16 %v3319, %v3315
          %v3700 = vpack.c.b16 %v3324, %v3320
          %v3701 = vpack.c.b16 %v3325, %v3321
          %v3702 = vpack.c.b16 %v3326, %v3322
          %v3703 = vpack.c.b16 %v3327, %v3323
          %v3704 = vpack.c.b16 %v3332, %v3328
          %v3705 = vpack.c.b16 %v3333, %v3329
          %v3706 = vpack.c.b16 %v3334, %v3330
          %v3707 = vpack.c.b16 %v3335, %v3331
          %v3708 = vpack.c.b16 %v3340, %v3336
          %v3709 = vpack.c.b16 %v3341, %v3337
          %v3710 = vpack.c.b16 %v3342, %v3338
          %v3711 = vpack.c.b16 %v3343, %v3339
          %v3712 = vpack.c.b16 %v3348, %v3344
          %v3713 = vpack.c.b16 %v3349, %v3345
          %v3714 = vpack.c.b16 %v3350, %v3346
          %v3715 = vpack.c.b16 %v3351, %v3347
          %v3716 = vpack.c.b16 %v3356, %v3352
          %v3717 = vpack.c.b16 %v3357, %v3353
          %v3718 = vpack.c.b16 %v3358, %v3354
          %v3719 = vpack.c.b16 %v3359, %v3355
          %v3720 = vpack.c.b16 %v3364, %v3360
          %v3721 = vpack.c.b16 %v3365, %v3361
          %v3722 = vpack.c.b16 %v3366, %v3362
          %v3723 = vpack.c.b16 %v3367, %v3363
          %v3724 = vpack.c.b16 %v3372, %v3368
          %v3725 = vpack.c.b16 %v3373, %v3369
          %v3726 = vpack.c.b16 %v3374, %v3370
          %v3727 = vpack.c.b16 %v3375, %v3371
          %v3728 = vpack.c.b16 %v3380, %v3376
          %v3729 = vpack.c.b16 %v3381, %v3377
          %v3730 = vpack.c.b16 %v3382, %v3378
          %v3731 = vpack.c.b16 %v3383, %v3379
          %v3732 = vpack.c.b16 %v3388, %v3384
          %v3733 = vpack.c.b16 %v3389, %v3385
          %v3734 = vpack.c.b16 %v3390, %v3386
          %v3735 = vpack.c.b16 %v3391, %v3387
          %v3736 = vpack.c.b16 %v3396, %v3392
          %v3737 = vpack.c.b16 %v3397, %v3393
          %v3738 = vpack.c.b16 %v3398, %v3394
          %v3739 = vpack.c.b16 %v3399, %v3395
          %v3740 = vpack.c.b16 %v3404, %v3400
          %v3741 = vpack.c.b16 %v3405, %v3401
          %v3742 = vpack.c.b16 %v3406, %v3402
          %v3743 = vpack.c.b16 %v3407, %v3403
          %v3744 = vpack.c.b16 %v3412, %v3408
          %v3745 = vpack.c.b16 %v3413, %v3409
          %v3746 = vpack.c.b16 %v3414, %v3410
          %v3747 = vpack.c.b16 %v3415, %v3411
          %v3748 = vpack.c.b16 %v3420, %v3416
          %v3749 = vpack.c.b16 %v3421, %v3417
          %v3750 = vpack.c.b16 %v3422, %v3418
          %v3751 = vpack.c.b16 %v3423, %v3419
          %v3752 = vpack.c.b16 %v3428, %v3424
          %v3753 = vpack.c.b16 %v3429, %v3425
          %v3754 = vpack.c.b16 %v3430, %v3426
          %v3755 = vpack.c.b16 %v3431, %v3427
          %v3756 = vpack.c.b16 %v3436, %v3432
          %v3757 = vpack.c.b16 %v3437, %v3433
          %v3758 = vpack.c.b16 %v3438, %v3434
          %v3759 = vpack.c.b16 %v3439, %v3435
          %v3760 = vpack.c.b16 %v3444, %v3440
          %v3761 = vpack.c.b16 %v3445, %v3441
          %v3762 = vpack.c.b16 %v3446, %v3442
          %v3763 = vpack.c.b16 %v3447, %v3443
          %v3764 = vpack.c.b16 %v3452, %v3448
          %v3765 = vpack.c.b16 %v3453, %v3449
          %v3766 = vpack.c.b16 %v3454, %v3450
          %v3767 = vpack.c.b16 %v3455, %v3451
          %v3768 = vpack.c.b16 %v3460, %v3456
          %v3769 = vpack.c.b16 %v3461, %v3457
          %v3770 = vpack.c.b16 %v3462, %v3458
          %v3771 = vpack.c.b16 %v3463, %v3459
          %v3772 = vpack.c.b16 %v3468, %v3464
          %v3773 = vpack.c.b16 %v3469, %v3465
          %v3774 = vpack.c.b16 %v3470, %v3466
          %v3775 = vpack.c.b16 %v3471, %v3467
          %v3776 = vpack.c.b16 %v3476, %v3472
          %v3777 = vpack.c.b16 %v3477, %v3473
          %v3778 = vpack.c.b16 %v3478, %v3474
          %v3779 = vpack.c.b16 %v3479, %v3475
          %v3780 = vpack.c.b16 %v3484, %v3480
          %v3781 = vpack.c.b16 %v3485, %v3481
          %v3782 = vpack.c.b16 %v3486, %v3482
          %v3783 = vpack.c.b16 %v3487, %v3483
          %v3784 = vpack.c.b16 %v3492, %v3488
          %v3785 = vpack.c.b16 %v3493, %v3489
          %v3786 = vpack.c.b16 %v3494, %v3490
          %v3787 = vpack.c.b16 %v3495, %v3491
          %v3788 = vpack.c.b16 %v3500, %v3496
          %v3789 = vpack.c.b16 %v3501, %v3497
          %v3790 = vpack.c.b16 %v3502, %v3498
          %v3791 = vpack.c.b16 %v3503, %v3499
          %v3792 = vpack.c.b16 %v3508, %v3504
          %v3793 = vpack.c.b16 %v3509, %v3505
          %v3794 = vpack.c.b16 %v3510, %v3506
          %v3795 = vpack.c.b16 %v3511, %v3507
          %v3796 = vpack.c.b16 %v3516, %v3512
          %v3797 = vpack.c.b16 %v3517, %v3513
          %v3798 = vpack.c.b16 %v3518, %v3514
          %v3799 = vpack.c.b16 %v3519, %v3515
          %v3800 = vpack.c.b16 %v3524, %v3520
          %v3801 = vpack.c.b16 %v3525, %v3521
          %v3802 = vpack.c.b16 %v3526, %v3522
          %v3803 = vpack.c.b16 %v3527, %v3523
          %v3804 = vpack.c.b16 %v3532, %v3528
          %v3805 = vpack.c.b16 %v3533, %v3529
          %v3806 = vpack.c.b16 %v3534, %v3530
          %v3807 = vpack.c.b16 %v3535, %v3531
          %v3808 = vpack.c.b16 %v3540, %v3536
          %v3809 = vpack.c.b16 %v3541, %v3537
          %v3810 = vpack.c.b16 %v3542, %v3538
          %v3811 = vpack.c.b16 %v3543, %v3539
          %v3812 = vpack.c.b16 %v3548, %v3544
          %v3813 = vpack.c.b16 %v3549, %v3545
          %v3814 = vpack.c.b16 %v3550, %v3546
          %v3815 = vpack.c.b16 %v3551, %v3547
          %v3816 = vpack.c.b16 %v3556, %v3552
          %v3817 = vpack.c.b16 %v3557, %v3553
          %v3818 = vpack.c.b16 %v3558, %v3554
          %v3819 = vpack.c.b16 %v3559, %v3555
          %v3820 = vpack.c.b16 %v3564, %v3560
          %v3821 = vpack.c.b16 %v3565, %v3561
          %v3822 = vpack.c.b16 %v3566, %v3562
          %v3823 = vpack.c.b16 %v3567, %v3563
          %4080 = vmatprep.subr.bf16.mxu0 %v3569
          %4081 = vmatpush1.bf16.msra.mxu0 %v3568
          %4082 = vmatprep.subr.bf16.mxu0 %v3573
          %4083 = vmatpush1.bf16.msra.mxu0 %v3572
          %4084 = vmatprep.subr.bf16.mxu0 %v3577
          %4085 = vmatpush1.bf16.msra.mxu0 %v3576
          %4086 = vmatprep.subr.bf16.mxu0 %v3581
          %4087 = vmatpush1.bf16.msra.mxu0 %v3580
          %4088 = vmatprep.subr.bf16.mxu0 %v3585
          %4089 = vmatpush1.bf16.msra.mxu0 %v3584
          %4090 = vmatprep.subr.bf16.mxu0 %v3589
          %4091 = vmatpush1.bf16.msra.mxu0 %v3588
          %4092 = vmatprep.subr.bf16.mxu0 %v3593
          %4093 = vmatpush1.bf16.msra.mxu0 %v3592
          %4094 = vmatprep.subr.bf16.mxu0 %v3597
          %4095 = vmatpush1.bf16.msra.mxu0 %v3596
          %4096 = vmatprep.subr.bf16.mxu0 %v3601
          %4097 = vmatpush1.bf16.msra.mxu0 %v3600
          %4098 = vmatprep.subr.bf16.mxu0 %v3605
          %4099 = vmatpush1.bf16.msra.mxu0 %v3604
          %4100 = vmatprep.subr.bf16.mxu0 %v3609
          %4101 = vmatpush1.bf16.msra.mxu0 %v3608
          %4102 = vmatprep.subr.bf16.mxu0 %v3613
          %4103 = vmatpush1.bf16.msra.mxu0 %v3612
          %4104 = vmatprep.subr.bf16.mxu0 %v3617
          %4105 = vmatpush1.bf16.msra.mxu0 %v3616
          %4106 = vmatprep.subr.bf16.mxu0 %v3621
          %4107 = vmatpush1.bf16.msra.mxu0 %v3620
          %4108 = vmatprep.subr.bf16.mxu0 %v3625
          %4109 = vmatpush1.bf16.msra.mxu0 %v3624
          %4110 = vmatprep.subr.bf16.mxu0 %v3629
          %4111 = vmatpush1.bf16.msra.mxu0 %v3628
          %4112 = vmatprep.mubr.bf16.mxu0 %v2515
          %4113 = vmatmul.mubr.bf16.gmra.mrb[0].mxu0 %v2514
          %v4114 = vpop.f32.mrb[0].mxu0
          %v4115 = vadd.f32 %v2783, %v4114
          %v4116 = vpop.f32.mrb[0].mxu0
          %v4117 = vadd.f32 %v2787, %v4116
          %v4118 = vpop.f32.mrb[0].mxu0
          %v4119 = vpop.f32.mrb[0].mxu0
          %4120 = vdwg.mxu0
          %4121 = vmatprep.subr.bf16.mxu0 %v3633
          %4122 = vmatpush1.bf16.msra.mxu0 %v3632
          %4123 = vmatprep.subr.bf16.mxu0 %v3637
          %4124 = vmatpush1.bf16.msra.mxu0 %v3636
          %4125 = vmatprep.subr.bf16.mxu0 %v3641
          %4126 = vmatpush1.bf16.msra.mxu0 %v3640
          %4127 = vmatprep.subr.bf16.mxu0 %v3645
          %4128 = vmatpush1.bf16.msra.mxu0 %v3644
          %4129 = vmatprep.subr.bf16.mxu0 %v3649
          %4130 = vmatpush1.bf16.msra.mxu0 %v3648
          %4131 = vmatprep.subr.bf16.mxu0 %v3653
          %4132 = vmatpush1.bf16.msra.mxu0 %v3652
          %4133 = vmatprep.subr.bf16.mxu0 %v3657
          %4134 = vmatpush1.bf16.msra.mxu0 %v3656
          %4135 = vmatprep.subr.bf16.mxu0 %v3661
          %4136 = vmatpush1.bf16.msra.mxu0 %v3660
          %4137 = vmatprep.subr.bf16.mxu0 %v3665
          %4138 = vmatpush1.bf16.msra.mxu0 %v3664
          %4139 = vmatprep.subr.bf16.mxu0 %v3669
          %4140 = vmatpush1.bf16.msra.mxu0 %v3668
          %4141 = vmatprep.subr.bf16.mxu0 %v3673
          %4142 = vmatpush1.bf16.msra.mxu0 %v3672
          %4143 = vmatprep.subr.bf16.mxu0 %v3677
          %4144 = vmatpush1.bf16.msra.mxu0 %v3676
          %4145 = vmatprep.subr.bf16.mxu0 %v3681
          %4146 = vmatpush1.bf16.msra.mxu0 %v3680
          %4147 = vmatprep.subr.bf16.mxu0 %v3685
          %4148 = vmatpush1.bf16.msra.mxu0 %v3684
          %4149 = vmatprep.subr.bf16.mxu0 %v3689
          %4150 = vmatpush1.bf16.msra.mxu0 %v3688
          %4151 = vmatprep.subr.bf16.mxu0 %v3693
          %4152 = vmatpush1.bf16.msra.mxu0 %v3692
          %4153 = vmatprep.mubr.bf16.mxu0 %v2517
          %4154 = vmatmul.mubr.bf16.gmra.mrb[0].mxu0 %v2516
          %v4155 = vpop.f32.mrb[0].mxu0
          %v4156 = vadd.f32 %v4115, %v4155
          %v4157 = vpop.f32.mrb[0].mxu0
          %v4158 = vadd.f32 %v4117, %v4157
          %v4159 = vpop.f32.mrb[0].mxu0
          %v4160 = vpop.f32.mrb[0].mxu0
          %4161 = vdwg.mxu0
          %4162 = vmatprep.subr.bf16.mxu0 %v3697
          %4163 = vmatpush1.bf16.msra.mxu0 %v3696
          %4164 = vmatprep.subr.bf16.mxu0 %v3701
          %4165 = vmatpush1.bf16.msra.mxu0 %v3700
          %4166 = vmatprep.subr.bf16.mxu0 %v3705
          %4167 = vmatpush1.bf16.msra.mxu0 %v3704
          %4168 = vmatprep.subr.bf16.mxu0 %v3709
          %4169 = vmatpush1.bf16.msra.mxu0 %v3708
          %4170 = vmatprep.subr.bf16.mxu0 %v3713
          %4171 = vmatpush1.bf16.msra.mxu0 %v3712
          %4172 = vmatprep.subr.bf16.mxu0 %v3717
          %4173 = vmatpush1.bf16.msra.mxu0 %v3716
          %4174 = vmatprep.subr.bf16.mxu0 %v3721
          %4175 = vmatpush1.bf16.msra.mxu0 %v3720
          %4176 = vmatprep.subr.bf16.mxu0 %v3725
          %4177 = vmatpush1.bf16.msra.mxu0 %v3724
          %4178 = vmatprep.subr.bf16.mxu0 %v3729
          %4179 = vmatpush1.bf16.msra.mxu0 %v3728
          %4180 = vmatprep.subr.bf16.mxu0 %v3733
          %4181 = vmatpush1.bf16.msra.mxu0 %v3732
          %4182 = vmatprep.subr.bf16.mxu0 %v3737
          %4183 = vmatpush1.bf16.msra.mxu0 %v3736
          %4184 = vmatprep.subr.bf16.mxu0 %v3741
          %4185 = vmatpush1.bf16.msra.mxu0 %v3740
          %4186 = vmatprep.subr.bf16.mxu0 %v3745
          %4187 = vmatpush1.bf16.msra.mxu0 %v3744
          %4188 = vmatprep.subr.bf16.mxu0 %v3749
          %4189 = vmatpush1.bf16.msra.mxu0 %v3748
          %4190 = vmatprep.subr.bf16.mxu0 %v3753
          %4191 = vmatpush1.bf16.msra.mxu0 %v3752
          %4192 = vmatprep.subr.bf16.mxu0 %v3757
          %4193 = vmatpush1.bf16.msra.mxu0 %v3756
          %4194 = vmatprep.mubr.bf16.mxu0 %v2519
          %4195 = vmatmul.mubr.bf16.gmra.mrb[0].mxu0 %v2518
          %v4196 = vpop.f32.mrb[0].mxu0
          %v4197 = vadd.f32 %v4156, %v4196
          %v4198 = vpop.f32.mrb[0].mxu0
          %v4199 = vadd.f32 %v4158, %v4198
          %v4200 = vpop.f32.mrb[0].mxu0
          %v4201 = vpop.f32.mrb[0].mxu0
          %4202 = vdwg.mxu0
          %4203 = vmatprep.subr.bf16.mxu0 %v3761
          %4204 = vmatpush1.bf16.msra.mxu0 %v3760
          %4205 = vmatprep.subr.bf16.mxu0 %v3765
          %4206 = vmatpush1.bf16.msra.mxu0 %v3764
          %4207 = vmatprep.subr.bf16.mxu0 %v3769
          %4208 = vmatpush1.bf16.msra.mxu0 %v3768
          %4209 = vmatprep.subr.bf16.mxu0 %v3773
          %4210 = vmatpush1.bf16.msra.mxu0 %v3772
          %4211 = vmatprep.subr.bf16.mxu0 %v3777
          %4212 = vmatpush1.bf16.msra.mxu0 %v3776
          %4213 = vmatprep.subr.bf16.mxu0 %v3781
          %4214 = vmatpush1.bf16.msra.mxu0 %v3780
          %4215 = vmatprep.subr.bf16.mxu0 %v3785
          %4216 = vmatpush1.bf16.msra.mxu0 %v3784
          %4217 = vmatprep.subr.bf16.mxu0 %v3789
          %4218 = vmatpush1.bf16.msra.mxu0 %v3788
          %4219 = vmatprep.subr.bf16.mxu0 %v3793
          %4220 = vmatpush1.bf16.msra.mxu0 %v3792
          %4221 = vmatprep.subr.bf16.mxu0 %v3797
          %4222 = vmatpush1.bf16.msra.mxu0 %v3796
          %4223 = vmatprep.subr.bf16.mxu0 %v3801
          %4224 = vmatpush1.bf16.msra.mxu0 %v3800
          %4225 = vmatprep.subr.bf16.mxu0 %v3805
          %4226 = vmatpush1.bf16.msra.mxu0 %v3804
          %4227 = vmatprep.subr.bf16.mxu0 %v3809
          %4228 = vmatpush1.bf16.msra.mxu0 %v3808
          %4229 = vmatprep.subr.bf16.mxu0 %v3813
          %4230 = vmatpush1.bf16.msra.mxu0 %v3812
          %4231 = vmatprep.subr.bf16.mxu0 %v3817
          %4232 = vmatpush1.bf16.msra.mxu0 %v3816
          %4233 = vmatprep.subr.bf16.mxu0 %v3821
          %4234 = vmatpush1.bf16.msra.mxu0 %v3820
          %4235 = vmatprep.mubr.bf16.mxu0 %v2521
          %4236 = vmatmul.mubr.bf16.gmra.mrb[0].mxu0 %v2520
          %v4237 = vpop.f32.mrb[0].mxu0
          %v4238 = vadd.f32 %v4197, %v4237
          %v4239 = vpop.f32.mrb[0].mxu0
          %v4240 = vadd.f32 %v4199, %v4239
          %v4241 = vpop.f32.mrb[0].mxu0
          %v4242 = vpop.f32.mrb[0].mxu0
          %4243 = vdwg.mxu0
          %4244 = vmatprep.subr.bf16.mxu0 %v3571
          %4245 = vmatpush1.bf16.msra.mxu0 %v3570
          %4246 = vmatprep.subr.bf16.mxu0 %v3575
          %4247 = vmatpush1.bf16.msra.mxu0 %v3574
          %4248 = vmatprep.subr.bf16.mxu0 %v3579
          %4249 = vmatpush1.bf16.msra.mxu0 %v3578
          %4250 = vmatprep.subr.bf16.mxu0 %v3583
          %4251 = vmatpush1.bf16.msra.mxu0 %v3582
          %4252 = vmatprep.subr.bf16.mxu0 %v3587
          %4253 = vmatpush1.bf16.msra.mxu0 %v3586
          %4254 = vmatprep.subr.bf16.mxu0 %v3591
          %4255 = vmatpush1.bf16.msra.mxu0 %v3590
          %4256 = vmatprep.subr.bf16.mxu0 %v3595
          %4257 = vmatpush1.bf16.msra.mxu0 %v3594
          %4258 = vmatprep.subr.bf16.mxu0 %v3599
          %4259 = vmatpush1.bf16.msra.mxu0 %v3598
          %4260 = vmatprep.subr.bf16.mxu0 %v3603
          %4261 = vmatpush1.bf16.msra.mxu0 %v3602
          %4262 = vmatprep.subr.bf16.mxu0 %v3607
          %4263 = vmatpush1.bf16.msra.mxu0 %v3606
          %4264 = vmatprep.subr.bf16.mxu0 %v3611
          %4265 = vmatpush1.bf16.msra.mxu0 %v3610
          %4266 = vmatprep.subr.bf16.mxu0 %v3615
          %4267 = vmatpush1.bf16.msra.mxu0 %v3614
          %4268 = vmatprep.subr.bf16.mxu0 %v3619
          %4269 = vmatpush1.bf16.msra.mxu0 %v3618
          %4270 = vmatprep.subr.bf16.mxu0 %v3623
          %4271 = vmatpush1.bf16.msra.mxu0 %v3622
          %4272 = vmatprep.subr.bf16.mxu0 %v3627
          %4273 = vmatpush1.bf16.msra.mxu0 %v3626
          %4274 = vmatprep.subr.bf16.mxu0 %v3631
          %4275 = vmatpush1.bf16.msra.mxu0 %v3630
          %4276 = vmatprep.mubr.bf16.mxu0 %v2515
          %4277 = vmatmul.mubr.bf16.gmra.mrb[0].mxu0 %v2514
          %v4278 = vpop.f32.mrb[0].mxu0
          %v4279 = vadd.f32 %v2791, %v4278
          %v4280 = vpop.f32.mrb[0].mxu0
          %v4281 = vadd.f32 %v2795, %v4280
          %v4282 = vpop.f32.mrb[0].mxu0
          %v4283 = vpop.f32.mrb[0].mxu0
          %4284 = vdwg.mxu0
          %4285 = vmatprep.subr.bf16.mxu0 %v3635
          %4286 = vmatpush1.bf16.msra.mxu0 %v3634
          %4287 = vmatprep.subr.bf16.mxu0 %v3639
          %4288 = vmatpush1.bf16.msra.mxu0 %v3638
          %4289 = vmatprep.subr.bf16.mxu0 %v3643
          %4290 = vmatpush1.bf16.msra.mxu0 %v3642
          %4291 = vmatprep.subr.bf16.mxu0 %v3647
          %4292 = vmatpush1.bf16.msra.mxu0 %v3646
          %4293 = vmatprep.subr.bf16.mxu0 %v3651
          %4294 = vmatpush1.bf16.msra.mxu0 %v3650
          %4295 = vmatprep.subr.bf16.mxu0 %v3655
          %4296 = vmatpush1.bf16.msra.mxu0 %v3654
          %4297 = vmatprep.subr.bf16.mxu0 %v3659
          %4298 = vmatpush1.bf16.msra.mxu0 %v3658
          %4299 = vmatprep.subr.bf16.mxu0 %v3663
          %4300 = vmatpush1.bf16.msra.mxu0 %v3662
          %4301 = vmatprep.subr.bf16.mxu0 %v3667
          %4302 = vmatpush1.bf16.msra.mxu0 %v3666
          %4303 = vmatprep.subr.bf16.mxu0 %v3671
          %4304 = vmatpush1.bf16.msra.mxu0 %v3670
          %4305 = vmatprep.subr.bf16.mxu0 %v3675
          %4306 = vmatpush1.bf16.msra.mxu0 %v3674
          %4307 = vmatprep.subr.bf16.mxu0 %v3679
          %4308 = vmatpush1.bf16.msra.mxu0 %v3678
          %4309 = vmatprep.subr.bf16.mxu0 %v3683
          %4310 = vmatpush1.bf16.msra.mxu0 %v3682
          %4311 = vmatprep.subr.bf16.mxu0 %v3687
          %4312 = vmatpush1.bf16.msra.mxu0 %v3686
          %4313 = vmatprep.subr.bf16.mxu0 %v3691
          %4314 = vmatpush1.bf16.msra.mxu0 %v3690
          %4315 = vmatprep.subr.bf16.mxu0 %v3695
          %4316 = vmatpush1.bf16.msra.mxu0 %v3694
          %4317 = vmatprep.mubr.bf16.mxu0 %v2517
          %4318 = vmatmul.mubr.bf16.gmra.mrb[0].mxu0 %v2516
          %v4319 = vpop.f32.mrb[0].mxu0
          %v4320 = vadd.f32 %v4279, %v4319
          %v4321 = vpop.f32.mrb[0].mxu0
          %v4322 = vadd.f32 %v4281, %v4321
          %v4323 = vpop.f32.mrb[0].mxu0
          %v4324 = vpop.f32.mrb[0].mxu0
          %4325 = vdwg.mxu0
          %4326 = vmatprep.subr.bf16.mxu0 %v3699
          %4327 = vmatpush1.bf16.msra.mxu0 %v3698
          %4328 = vmatprep.subr.bf16.mxu0 %v3703
          %4329 = vmatpush1.bf16.msra.mxu0 %v3702
          %4330 = vmatprep.subr.bf16.mxu0 %v3707
          %4331 = vmatpush1.bf16.msra.mxu0 %v3706
          %4332 = vmatprep.subr.bf16.mxu0 %v3711
          %4333 = vmatpush1.bf16.msra.mxu0 %v3710
          %4334 = vmatprep.subr.bf16.mxu0 %v3715
          %4335 = vmatpush1.bf16.msra.mxu0 %v3714
          %4336 = vmatprep.subr.bf16.mxu0 %v3719
          %4337 = vmatpush1.bf16.msra.mxu0 %v3718
          %4338 = vmatprep.subr.bf16.mxu0 %v3723
          %4339 = vmatpush1.bf16.msra.mxu0 %v3722
          %4340 = vmatprep.subr.bf16.mxu0 %v3727
          %4341 = vmatpush1.bf16.msra.mxu0 %v3726
          %4342 = vmatprep.subr.bf16.mxu0 %v3731
          %4343 = vmatpush1.bf16.msra.mxu0 %v3730
          %4344 = vmatprep.subr.bf16.mxu0 %v3735
          %4345 = vmatpush1.bf16.msra.mxu0 %v3734
          %4346 = vmatprep.subr.bf16.mxu0 %v3739
          %4347 = vmatpush1.bf16.msra.mxu0 %v3738
          %4348 = vmatprep.subr.bf16.mxu0 %v3743
          %4349 = vmatpush1.bf16.msra.mxu0 %v3742
          %4350 = vmatprep.subr.bf16.mxu0 %v3747
          %4351 = vmatpush1.bf16.msra.mxu0 %v3746
          %4352 = vmatprep.subr.bf16.mxu0 %v3751
          %4353 = vmatpush1.bf16.msra.mxu0 %v3750
          %4354 = vmatprep.subr.bf16.mxu0 %v3755
          %4355 = vmatpush1.bf16.msra.mxu0 %v3754
          %4356 = vmatprep.subr.bf16.mxu0 %v3759
          %4357 = vmatpush1.bf16.msra.mxu0 %v3758
          %4358 = vmatprep.mubr.bf16.mxu0 %v2519
          %4359 = vmatmul.mubr.bf16.gmra.mrb[0].mxu0 %v2518
          %v4360 = vpop.f32.mrb[0].mxu0
          %v4361 = vadd.f32 %v4320, %v4360
          %v4362 = vpop.f32.mrb[0].mxu0
          %v4363 = vadd.f32 %v4322, %v4362
          %v4364 = vpop.f32.mrb[0].mxu0
          %v4365 = vpop.f32.mrb[0].mxu0
          %4366 = vdwg.mxu0
          %4367 = vmatprep.subr.bf16.mxu0 %v3763
          %4368 = vmatpush1.bf16.msra.mxu0 %v3762
          %4369 = vmatprep.subr.bf16.mxu0 %v3767
          %4370 = vmatpush1.bf16.msra.mxu0 %v3766
          %4371 = vmatprep.subr.bf16.mxu0 %v3771
          %4372 = vmatpush1.bf16.msra.mxu0 %v3770
          %4373 = vmatprep.subr.bf16.mxu0 %v3775
          %4374 = vmatpush1.bf16.msra.mxu0 %v3774
          %4375 = vmatprep.subr.bf16.mxu0 %v3779
          %4376 = vmatpush1.bf16.msra.mxu0 %v3778
          %4377 = vmatprep.subr.bf16.mxu0 %v3783
          %4378 = vmatpush1.bf16.msra.mxu0 %v3782
          %4379 = vmatprep.subr.bf16.mxu0 %v3787
          %4380 = vmatpush1.bf16.msra.mxu0 %v3786
          %4381 = vmatprep.subr.bf16.mxu0 %v3791
          %4382 = vmatpush1.bf16.msra.mxu0 %v3790
          %4383 = vmatprep.subr.bf16.mxu0 %v3795
          %4384 = vmatpush1.bf16.msra.mxu0 %v3794
          %4385 = vmatprep.subr.bf16.mxu0 %v3799
          %4386 = vmatpush1.bf16.msra.mxu0 %v3798
          %4387 = vmatprep.subr.bf16.mxu0 %v3803
          %4388 = vmatpush1.bf16.msra.mxu0 %v3802
          %4389 = vmatprep.subr.bf16.mxu0 %v3807
          %4390 = vmatpush1.bf16.msra.mxu0 %v3806
          %4391 = vmatprep.subr.bf16.mxu0 %v3811
          %4392 = vmatpush1.bf16.msra.mxu0 %v3810
          %4393 = vmatprep.subr.bf16.mxu0 %v3815
          %4394 = vmatpush1.bf16.msra.mxu0 %v3814
          %4395 = vmatprep.subr.bf16.mxu0 %v3819
          %4396 = vmatpush1.bf16.msra.mxu0 %v3818
          %4397 = vmatprep.subr.bf16.mxu0 %v3823
          %4398 = vmatpush1.bf16.msra.mxu0 %v3822
          %4399 = vmatprep.mubr.bf16.mxu0 %v2521
          %4400 = vmatmul.mubr.bf16.gmra.mrb[0].mxu0 %v2520
          %v4401 = vpop.f32.mrb[0].mxu0
          %v4402 = vadd.f32 %v4361, %v4401
          %v4403 = vpop.f32.mrb[0].mxu0
          %v4404 = vadd.f32 %v4363, %v4403
          %v4405 = vpop.f32.mrb[0].mxu0
          %v4406 = vpop.f32.mrb[0].mxu0
          %4407 = vdwg.mxu0
          %v4408 = vmax.f32 %v4238, 0.0
          %v4409 = vmax.f32 %v4240, 0.0
          %v4410 = vmax.f32 %v4402, 0.0
          %v4411 = vmax.f32 %v4404, 0.0
          %v4412 = vpack.c.bf16 %v4408, %v4408
          %v4413 = vpack.c.bf16 %v4409, %v4409
          %v4414 = vpack.c.bf16 %v4410, %v4410
          %v4415 = vpack.c.bf16 %v4411, %v4411
          %v4416 = vld [vmem:[#allocation11] sm:$0xf]
          %v4417 = vld [vmem:[#allocation11 + $0x4] sm:$0xf]
          %v4418 = vld [vmem:[#allocation11 + $0x8] sm:$0xf]
          %v4419 = vld [vmem:[#allocation11 + $0xc] sm:$0xf]
          %v4420 = vld [vmem:[#allocation11 + $0x10] sm:$0xf]
          %v4421 = vld [vmem:[#allocation11 + $0x14] sm:$0xf]
          %v4422 = vld [vmem:[#allocation11 + $0x18] sm:$0xf]
          %v4423 = vld [vmem:[#allocation11 + $0x1c] sm:$0xf]
          %v4424 = vld [vmem:[#allocation11 + $0x20] sm:$0xf]
          %v4425 = vld [vmem:[#allocation11 + $0x24] sm:$0xf]
          %v4426 = vld [vmem:[#allocation11 + $0x28] sm:$0xf]
          %v4427 = vld [vmem:[#allocation11 + $0x2c] sm:$0xf]
          %v4428 = vld [vmem:[#allocation11 + $0x30] sm:$0xf]
          %v4429 = vld [vmem:[#allocation11 + $0x34] sm:$0xf]
          %v4430 = vld [vmem:[#allocation11 + $0x38] sm:$0xf]
          %v4431 = vld [vmem:[#allocation11 + $0x3c] sm:$0xf]
          %v4432 = vld [vmem:[#allocation11 + $0x40] sm:$0xf]
          %v4433 = vld [vmem:[#allocation11 + $0x44] sm:$0xf]
          %v4434 = vld [vmem:[#allocation11 + $0x48] sm:$0xf]
          %v4435 = vld [vmem:[#allocation11 + $0x4c] sm:$0xf]
          %v4436 = vld [vmem:[#allocation11 + $0x50] sm:$0xf]
          %v4437 = vld [vmem:[#allocation11 + $0x54] sm:$0xf]
          %v4438 = vld [vmem:[#allocation11 + $0x58] sm:$0xf]
          %v4439 = vld [vmem:[#allocation11 + $0x5c] sm:$0xf]
          %v4440 = vld [vmem:[#allocation11 + $0x60] sm:$0xf]
          %v4441 = vld [vmem:[#allocation11 + $0x64] sm:$0xf]
          %v4442 = vld [vmem:[#allocation11 + $0x68] sm:$0xf]
          %v4443 = vld [vmem:[#allocation11 + $0x6c] sm:$0xf]
          %v4444 = vld [vmem:[#allocation11 + $0x70] sm:$0xf]
          %v4445 = vld [vmem:[#allocation11 + $0x74] sm:$0xf]
          %v4446 = vld [vmem:[#allocation11 + $0x78] sm:$0xf]
          %v4447 = vld [vmem:[#allocation11 + $0x7c] sm:$0xf]
          %v4448 = vld [vmem:[#allocation11 + $0x80] sm:$0xf]
          %v4449 = vld [vmem:[#allocation11 + $0x84] sm:$0xf]
          %v4450 = vld [vmem:[#allocation11 + $0x88] sm:$0xf]
          %v4451 = vld [vmem:[#allocation11 + $0x8c] sm:$0xf]
          %v4452 = vld [vmem:[#allocation11 + $0x90] sm:$0xf]
          %v4453 = vld [vmem:[#allocation11 + $0x94] sm:$0xf]
          %v4454 = vld [vmem:[#allocation11 + $0x98] sm:$0xf]
          %v4455 = vld [vmem:[#allocation11 + $0x9c] sm:$0xf]
          %v4456 = vld [vmem:[#allocation11 + $0xa0] sm:$0xf]
          %v4457 = vld [vmem:[#allocation11 + $0xa4] sm:$0xf]
          %v4458 = vld [vmem:[#allocation11 + $0xa8] sm:$0xf]
          %v4459 = vld [vmem:[#allocation11 + $0xac] sm:$0xf]
          %v4460 = vld [vmem:[#allocation11 + $0xb0] sm:$0xf]
          %v4461 = vld [vmem:[#allocation11 + $0xb4] sm:$0xf]
          %v4462 = vld [vmem:[#allocation11 + $0xb8] sm:$0xf]
          %v4463 = vld [vmem:[#allocation11 + $0xbc] sm:$0xf]
          %v4464 = vld [vmem:[#allocation11 + $0xc0] sm:$0xf]
          %v4465 = vld [vmem:[#allocation11 + $0xc4] sm:$0xf]
          %v4466 = vld [vmem:[#allocation11 + $0xc8] sm:$0xf]
          %v4467 = vld [vmem:[#allocation11 + $0xcc] sm:$0xf]
          %v4468 = vld [vmem:[#allocation11 + $0xd0] sm:$0xf]
          %v4469 = vld [vmem:[#allocation11 + $0xd4] sm:$0xf]
          %v4470 = vld [vmem:[#allocation11 + $0xd8] sm:$0xf]
          %v4471 = vld [vmem:[#allocation11 + $0xdc] sm:$0xf]
          %v4472 = vld [vmem:[#allocation11 + $0xe0] sm:$0xf]
          %v4473 = vld [vmem:[#allocation11 + $0xe4] sm:$0xf]
          %v4474 = vld [vmem:[#allocation11 + $0xe8] sm:$0xf]
          %v4475 = vld [vmem:[#allocation11 + $0xec] sm:$0xf]
          %v4476 = vld [vmem:[#allocation11 + $0xf0] sm:$0xf]
          %v4477 = vld [vmem:[#allocation11 + $0xf4] sm:$0xf]
          %v4478 = vld [vmem:[#allocation11 + $0xf8] sm:$0xf]
          %v4479 = vld [vmem:[#allocation11 + $0xfc] sm:$0xf]
          %v4480 = vld [vmem:[#allocation12] sm:$0x1]
          %v4482 = vlaneseq
          %v4483 = vshrl.u32 %v4482, 7
          %v4484 = vsub.s32 0, %v4483
          %v4485 = vrot.slane %v4480, %v4484
          %v4551 = vunpack.c.l.b16 %v4416
          %v4552 = vunpack.c.l.b16 %v4417
          %v4553 = vunpack.c.l.b16 %v4418
          %v4554 = vunpack.c.l.b16 %v4419
          %v4555 = vunpack.c.l.b16 %v4420
          %v4556 = vunpack.c.l.b16 %v4421
          %v4557 = vunpack.c.l.b16 %v4422
          %v4558 = vunpack.c.l.b16 %v4423
          %v4559 = vunpack.c.l.b16 %v4424
          %v4560 = vunpack.c.l.b16 %v4425
          %v4561 = vunpack.c.l.b16 %v4426
          %v4562 = vunpack.c.l.b16 %v4427
          %v4563 = vunpack.c.l.b16 %v4428
          %v4564 = vunpack.c.l.b16 %v4429
          %v4565 = vunpack.c.l.b16 %v4430
          %v4566 = vunpack.c.l.b16 %v4431
          %v4567 = vunpack.c.l.b16 %v4432
          %v4568 = vunpack.c.l.b16 %v4433
          %v4569 = vunpack.c.l.b16 %v4434
          %v4570 = vunpack.c.l.b16 %v4435
          %v4571 = vunpack.c.l.b16 %v4436
          %v4572 = vunpack.c.l.b16 %v4437
          %v4573 = vunpack.c.l.b16 %v4438
          %v4574 = vunpack.c.l.b16 %v4439
          %v4575 = vunpack.c.l.b16 %v4440
          %v4576 = vunpack.c.l.b16 %v4441
          %v4577 = vunpack.c.l.b16 %v4442
          %v4578 = vunpack.c.l.b16 %v4443
          %v4579 = vunpack.c.l.b16 %v4444
          %v4580 = vunpack.c.l.b16 %v4445
          %v4581 = vunpack.c.l.b16 %v4446
          %v4582 = vunpack.c.l.b16 %v4447
          %v4583 = vunpack.c.l.b16 %v4448
          %v4584 = vunpack.c.l.b16 %v4449
          %v4585 = vunpack.c.l.b16 %v4450
          %v4586 = vunpack.c.l.b16 %v4451
          %v4587 = vunpack.c.l.b16 %v4452
          %v4588 = vunpack.c.l.b16 %v4453
          %v4589 = vunpack.c.l.b16 %v4454
          %v4590 = vunpack.c.l.b16 %v4455
          %v4591 = vunpack.c.l.b16 %v4456
          %v4592 = vunpack.c.l.b16 %v4457
          %v4593 = vunpack.c.l.b16 %v4458
          %v4594 = vunpack.c.l.b16 %v4459
          %v4595 = vunpack.c.l.b16 %v4460
          %v4596 = vunpack.c.l.b16 %v4461
          %v4597 = vunpack.c.l.b16 %v4462
          %v4598 = vunpack.c.l.b16 %v4463
          %v4599 = vunpack.c.l.b16 %v4464
          %v4600 = vunpack.c.l.b16 %v4465
          %v4601 = vunpack.c.l.b16 %v4466
          %v4602 = vunpack.c.l.b16 %v4467
          %v4603 = vunpack.c.l.b16 %v4468
          %v4604 = vunpack.c.l.b16 %v4469
          %v4605 = vunpack.c.l.b16 %v4470
          %v4606 = vunpack.c.l.b16 %v4471
          %v4607 = vunpack.c.l.b16 %v4472
          %v4608 = vunpack.c.l.b16 %v4473
          %v4609 = vunpack.c.l.b16 %v4474
          %v4610 = vunpack.c.l.b16 %v4475
          %v4611 = vunpack.c.l.b16 %v4476
          %v4612 = vunpack.c.l.b16 %v4477
          %v4613 = vunpack.c.l.b16 %v4478
          %v4614 = vunpack.c.l.b16 %v4479
          %v4615 = vpack.c.b16 %v4552, %v4551
          %v4616 = vpack.c.b16 %v4554, %v4553
          %v4617 = vpack.c.b16 %v4556, %v4555
          %v4618 = vpack.c.b16 %v4558, %v4557
          %v4619 = vpack.c.b16 %v4560, %v4559
          %v4620 = vpack.c.b16 %v4562, %v4561
          %v4621 = vpack.c.b16 %v4564, %v4563
          %v4622 = vpack.c.b16 %v4566, %v4565
          %v4623 = vpack.c.b16 %v4568, %v4567
          %v4624 = vpack.c.b16 %v4570, %v4569
          %v4625 = vpack.c.b16 %v4572, %v4571
          %v4626 = vpack.c.b16 %v4574, %v4573
          %v4627 = vpack.c.b16 %v4576, %v4575
          %v4628 = vpack.c.b16 %v4578, %v4577
          %v4629 = vpack.c.b16 %v4580, %v4579
          %v4630 = vpack.c.b16 %v4582, %v4581
          %v4631 = vpack.c.b16 %v4584, %v4583
          %v4632 = vpack.c.b16 %v4586, %v4585
          %v4633 = vpack.c.b16 %v4588, %v4587
          %v4634 = vpack.c.b16 %v4590, %v4589
          %v4635 = vpack.c.b16 %v4592, %v4591
          %v4636 = vpack.c.b16 %v4594, %v4593
          %v4637 = vpack.c.b16 %v4596, %v4595
          %v4638 = vpack.c.b16 %v4598, %v4597
          %v4639 = vpack.c.b16 %v4600, %v4599
          %v4640 = vpack.c.b16 %v4602, %v4601
          %v4641 = vpack.c.b16 %v4604, %v4603
          %v4642 = vpack.c.b16 %v4606, %v4605
          %v4643 = vpack.c.b16 %v4608, %v4607
          %v4644 = vpack.c.b16 %v4610, %v4609
          %v4645 = vpack.c.b16 %v4612, %v4611
          %v4646 = vpack.c.b16 %v4614, %v4613
          %4679 = vmatprep.subr.bf16.mxu0 0
          %4680 = vmatpush1.bf16.msra.mxu0 %v4615
          %4681 = vmatprep.subr.bf16.mxu0 0
          %4682 = vmatpush1.bf16.msra.mxu0 %v4616
          %4683 = vmatprep.subr.bf16.mxu0 0
          %4684 = vmatpush1.bf16.msra.mxu0 %v4617
          %4685 = vmatprep.subr.bf16.mxu0 0
          %4686 = vmatpush1.bf16.msra.mxu0 %v4618
          %4687 = vmatprep.subr.bf16.mxu0 0
          %4688 = vmatpush1.bf16.msra.mxu0 %v4619
          %4689 = vmatprep.subr.bf16.mxu0 0
          %4690 = vmatpush1.bf16.msra.mxu0 %v4620
          %4691 = vmatprep.subr.bf16.mxu0 0
          %4692 = vmatpush1.bf16.msra.mxu0 %v4621
          %4693 = vmatprep.subr.bf16.mxu0 0
          %4694 = vmatpush1.bf16.msra.mxu0 %v4622
          %4695 = vmatprep.subr.bf16.mxu0 0
          %4696 = vmatpush1.bf16.msra.mxu0 %v4623
          %4697 = vmatprep.subr.bf16.mxu0 0
          %4698 = vmatpush1.bf16.msra.mxu0 %v4624
          %4699 = vmatprep.subr.bf16.mxu0 0
          %4700 = vmatpush1.bf16.msra.mxu0 %v4625
          %4701 = vmatprep.subr.bf16.mxu0 0
          %4702 = vmatpush1.bf16.msra.mxu0 %v4626
          %4703 = vmatprep.subr.bf16.mxu0 0
          %4704 = vmatpush1.bf16.msra.mxu0 %v4627
          %4705 = vmatprep.subr.bf16.mxu0 0
          %4706 = vmatpush1.bf16.msra.mxu0 %v4628
          %4707 = vmatprep.subr.bf16.mxu0 0
          %4708 = vmatpush1.bf16.msra.mxu0 %v4629
          %4709 = vmatprep.subr.bf16.mxu0 0
          %4710 = vmatpush1.bf16.msra.mxu0 %v4630
          %4711 = vmatprep.mubr.bf16.mxu0 %v4413
          %4712 = vmatmul.mubr.bf16.gmra.mrb[0].mxu0 %v4412
          %v4713 = vpop.f32.mrb[0].mxu0
          %v4714 = vadd.f32 %v4485, %v4713
          %v4715 = vpop.f32.mrb[0].mxu0
          %v4716 = vpop.f32.mrb[0].mxu0
          %v4717 = vpop.f32.mrb[0].mxu0
          %4718 = vdwg.mxu0
          %4719 = vmatprep.subr.bf16.mxu0 0
          %4720 = vmatpush1.bf16.msra.mxu0 %v4631
          %4721 = vmatprep.subr.bf16.mxu0 0
          %4722 = vmatpush1.bf16.msra.mxu0 %v4632
          %4723 = vmatprep.subr.bf16.mxu0 0
          %4724 = vmatpush1.bf16.msra.mxu0 %v4633
          %4725 = vmatprep.subr.bf16.mxu0 0
          %4726 = vmatpush1.bf16.msra.mxu0 %v4634
          %4727 = vmatprep.subr.bf16.mxu0 0
          %4728 = vmatpush1.bf16.msra.mxu0 %v4635
          %4729 = vmatprep.subr.bf16.mxu0 0
          %4730 = vmatpush1.bf16.msra.mxu0 %v4636
          %4731 = vmatprep.subr.bf16.mxu0 0
          %4732 = vmatpush1.bf16.msra.mxu0 %v4637
          %4733 = vmatprep.subr.bf16.mxu0 0
          %4734 = vmatpush1.bf16.msra.mxu0 %v4638
          %4735 = vmatprep.subr.bf16.mxu0 0
          %4736 = vmatpush1.bf16.msra.mxu0 %v4639
          %4737 = vmatprep.subr.bf16.mxu0 0
          %4738 = vmatpush1.bf16.msra.mxu0 %v4640
          %4739 = vmatprep.subr.bf16.mxu0 0
          %4740 = vmatpush1.bf16.msra.mxu0 %v4641
          %4741 = vmatprep.subr.bf16.mxu0 0
          %4742 = vmatpush1.bf16.msra.mxu0 %v4642
          %4743 = vmatprep.subr.bf16.mxu0 0
          %4744 = vmatpush1.bf16.msra.mxu0 %v4643
          %4745 = vmatprep.subr.bf16.mxu0 0
          %4746 = vmatpush1.bf16.msra.mxu0 %v4644
          %4747 = vmatprep.subr.bf16.mxu0 0
          %4748 = vmatpush1.bf16.msra.mxu0 %v4645
          %4749 = vmatprep.subr.bf16.mxu0 0
          %4750 = vmatpush1.bf16.msra.mxu0 %v4646
          %4751 = vmatprep.mubr.bf16.mxu0 %v4415
          %4752 = vmatmul.mubr.bf16.gmra.mrb[0].mxu0 %v4414
          %v4753 = vpop.f32.mrb[0].mxu0
          %v4754 = vadd.f32 %v4714, %v4753
          %v4755 = vpop.f32.mrb[0].mxu0
          %v4756 = vpop.f32.mrb[0].mxu0
          %v4757 = vpop.f32.mrb[0].mxu0
          %4758 = vdwg.mxu0
          %v4759 = vmax.f32 %v4754, 0.0
          %v4760 = vpack.c.bf16 %v4759, %v4759
          %v4761 = vld [vmem:[%s7] sm:$0xf]
          %v4762 = vld [vmem:[%s7 + $0x4] sm:$0xf]
          %v4763 = vld [vmem:[%s7 + $0x8] sm:$0xf]
          %v4764 = vld [vmem:[%s7 + $0xc] sm:$0xf]
          %v4765 = vld [vmem:[%s7 + $0x10] sm:$0xf]
          %v4766 = vld [vmem:[%s7 + $0x14] sm:$0xf]
          %v4767 = vld [vmem:[%s7 + $0x18] sm:$0xf]
          %v4768 = vld [vmem:[%s7 + $0x1c] sm:$0xf]
          %v4769 = vld [vmem:[%s7 + $0x20] sm:$0xf]
          %v4770 = vld [vmem:[%s7 + $0x24] sm:$0xf]
          %v4771 = vld [vmem:[%s7 + $0x28] sm:$0xf]
          %v4772 = vld [vmem:[%s7 + $0x2c] sm:$0xf]
          %v4773 = vld [vmem:[%s7 + $0x30] sm:$0xf]
          %v4774 = vld [vmem:[%s7 + $0x34] sm:$0xf]
          %v4775 = vld [vmem:[%s7 + $0x38] sm:$0xf]
          %v4776 = vld [vmem:[%s7 + $0x3c] sm:$0xf]
          %v4777 = vld [vmem:[#allocation14] sm:$0x1]
          %v4779 = vlaneseq
          %v4780 = vshrl.u32 %v4779, 7
          %v4781 = vsub.s32 0, %v4780
          %v4782 = vrot.slane %v4777, %v4781
          %v4800 = vunpack.c.l.b16 %v4761
          %v4801 = vunpack.c.l.b16 %v4762
          %v4802 = vunpack.c.l.b16 %v4763
          %v4803 = vunpack.c.l.b16 %v4764
          %v4804 = vunpack.c.l.b16 %v4765
          %v4805 = vunpack.c.l.b16 %v4766
          %v4806 = vunpack.c.l.b16 %v4767
          %v4807 = vunpack.c.l.b16 %v4768
          %v4808 = vunpack.c.l.b16 %v4769
          %v4809 = vunpack.c.l.b16 %v4770
          %v4810 = vunpack.c.l.b16 %v4771
          %v4811 = vunpack.c.l.b16 %v4772
          %v4812 = vunpack.c.l.b16 %v4773
          %v4813 = vunpack.c.l.b16 %v4774
          %v4814 = vunpack.c.l.b16 %v4775
          %v4815 = vunpack.c.l.b16 %v4776
          %v4816 = vpack.c.b16 %v4801, %v4800
          %v4817 = vpack.c.b16 %v4803, %v4802
          %v4818 = vpack.c.b16 %v4805, %v4804
          %v4819 = vpack.c.b16 %v4807, %v4806
          %v4820 = vpack.c.b16 %v4809, %v4808
          %v4821 = vpack.c.b16 %v4811, %v4810
          %v4822 = vpack.c.b16 %v4813, %v4812
          %v4823 = vpack.c.b16 %v4815, %v4814
          %4832 = vmatprep.subr.bf16.mxu0 0
          %4833 = vmatpush1.bf16.msra.mxu0 %v4816
          %4834 = vmatprep.subr.bf16.mxu0 0
          %4835 = vmatpush1.bf16.msra.mxu0 %v4817
          %4836 = vmatprep.subr.bf16.mxu0 0
          %4837 = vmatpush1.bf16.msra.mxu0 %v4818
          %4838 = vmatprep.subr.bf16.mxu0 0
          %4839 = vmatpush1.bf16.msra.mxu0 %v4819
          %4840 = vmatprep.subr.bf16.mxu0 0
          %4841 = vmatpush1.bf16.msra.mxu0 %v4820
          %4842 = vmatprep.subr.bf16.mxu0 0
          %4843 = vmatpush1.bf16.msra.mxu0 %v4821
          %4844 = vmatprep.subr.bf16.mxu0 0
          %4845 = vmatpush1.bf16.msra.mxu0 %v4822
          %4846 = vmatprep.subr.bf16.mxu0 0
          %4847 = vmatpush1.bf16.msra.mxu0 %v4823
          %4848 = vmatprep.subr.bf16.mxu0 0
          %4849 = vmatpush1.bf16.msra.mxu0 0
          %4850 = vmatprep.subr.bf16.mxu0 0
          %4851 = vmatpush1.bf16.msra.mxu0 0
          %4852 = vmatprep.subr.bf16.mxu0 0
          %4853 = vmatpush1.bf16.msra.mxu0 0
          %4854 = vmatprep.subr.bf16.mxu0 0
          %4855 = vmatpush1.bf16.msra.mxu0 0
          %4856 = vmatprep.subr.bf16.mxu0 0
          %4857 = vmatpush1.bf16.msra.mxu0 0
          %4858 = vmatprep.subr.bf16.mxu0 0
          %4859 = vmatpush1.bf16.msra.mxu0 0
          %4860 = vmatprep.subr.bf16.mxu0 0
          %4861 = vmatpush1.bf16.msra.mxu0 0
          %4862 = vmatprep.subr.bf16.mxu0 0
          %4863 = vmatpush1.bf16.msra.mxu0 0
          %4864 = vmatprep.mubr.bf16.mxu0 0
          %4865 = vmatmul.mubr.bf16.gmra.mrb[0].mxu0 %v4760
          %v4866 = vpop.f32.mrb[0].mxu0
          %v4867 = vadd.f32 %v4782, %v4866
          %v4868 = vpop.f32.mrb[0].mxu0
          %v4869 = vpop.f32.mrb[0].mxu0
          %v4870 = vpop.f32.mrb[0].mxu0
          %4871 = vdwg.mxu0
          %v4872 = vmax.f32 %v4867, 0.0
          %vm4873 = vcmask 74752
          %4874 = vst.msk [vmem:[#allocation15] sm:$0x3] %vm4873, %v4872
        $region92: #{big_linear_forward.1} parent=55 // pred_fallthru
          _
        // Predicated region
        $region93: #{big_linear_forward.1} parent=55 // pred_check
          %p4875 = pneg %p239
        $region94: #{big_linear_forward.1} parent=55 // pred_check_branch
          %4877 = sbr.rel (%p4875) target = $region96
        $region95: #{big_linear_forward.1} parent=55 // pred_region
          %s4879 = ssub.s32 32, 32
          %4880 = vsyncadd [#allocation5], %s4879
          %s4882 = sshll.u32 [#allocation15], 4
          %s4883 = int_to_ptr.vmem [resolvable:$true] %s4882
          %4885 = dma.vmem_to_hbm [thread:$0]  %s4883, 32, %s9, [#allocation5]
        $region96: #{big_linear_forward.1} parent=55 // pred_fallthru
          _
        // Predicated region
        $region97: #{big_linear_forward.1} parent=55 // pred_check
          %p4886 = pneg %p239
        $region98: #{big_linear_forward.1} parent=55 // pred_check_branch
          %4888 = sbr.rel (%p4886) target = $region100
        $region99: #{big_linear_forward.1} parent=55 // pred_region
          %4889 = dma.done [#allocation5], 32
        $region100: #{big_linear_forward.1} parent=55 // pred_fallthru
          _
      $region56: #{big_linear_forward.1} parent=5 // pred_fallthru
        _
      %p4890 = scmp.le.s32.totalorder 2, %s22
      // Predicated region
      $region101: #{big_linear_forward.1} parent=5 // pred_check
        %p4891 = pneg %p4890
      $region102: #{big_linear_forward.1} parent=5 // pred_check_branch
        %4893 = sbr.rel (%p4891) target = $region104
      $region103: #{big_linear_forward.1} parent=5 // pred_region
        %s4894 = ssub.s32 %s22, 2
      $region104: #{big_linear_forward.1} parent=5 // pred_fallthru
        _
    $region6: #{big_linear_forward.1} parent=1 // loop_footer
      %s26 = sadd.s32 1, %s22
    $region7: #{big_linear_forward.1} parent=1 // loop_footer_branch
      %21 = sbr.rel target = $region3
    $region8: #{big_linear_forward.1} parent=1 // loop_exit
      _
    %4895 = vsyncpa [#allocation4], 1
    %s4896 = scalar_lea.sflag [#allocation4], 1
    %4897 = vsyncpa %s4896, 1
    %4898 = vsyncpa [#allocation7], 1
    %4899 = vsyncpa [#allocation10], 1
    %4900 = vsyncpa [#allocation13], 1
    %4901 = vsyncpa [#allocation5], 1
    %s4902 = scalar_lea.sflag [#allocation5], 1
    %4903 = vsyncpa %s4902, 1

</llo_original>
